<compile_context>
chip_gen: v7x
topology: tpu7x:2x2x1
jax: 0.10.0
libtpu: 0.0.40
codegen_flags: <defaults>
</compile_context>

<pallas_src>
import jax
import jax.numpy as jnp
from jax.experimental import pallas as pl
from jax.experimental.pallas import tpu as pltpu


# ----------------------------- Pallas kernels --------------------------------
def _conv_bn_relu_kernel(w_ref, p_ref, scale_ref, shift_ref, o_ref):
    # (OC, K) @ (K, M) on the MXU with f32 accumulation, then per-channel
    # affine (folded conv-bias + BatchNorm eval) + ReLU.  M is lane-dense.
    acc = jnp.dot(w_ref[...], p_ref[...], preferred_element_type=jnp.float32)
    y = jnp.maximum(acc * scale_ref[...] + shift_ref[...], 0.0)
    o_ref[...] = y.astype(o_ref.dtype)


def conv_bn_relu_matmul(w, patches, scale, shift):
    """relu(scale * (w @ patches) + shift): (OC,K)@(K,M) -> (OC,M) bf16."""
    OC, K = w.shape
    K2, M = patches.shape
    assert K == K2
    flops = 2 * OC * K * M
    bytes_accessed = 2 * (w.size + patches.size + OC * M) + 4 * (scale.size + shift.size)
    return pl.pallas_call(
        _conv_bn_relu_kernel,
        out_shape=jax.ShapeDtypeStruct((OC, M), jnp.bfloat16),
        grid=(1,),  # whole problem fits one VMEM block
        in_specs=[
            pl.BlockSpec((OC, K), lambda i: (0, 0)),
            pl.BlockSpec((K, M), lambda i: (0, 0)),
            pl.BlockSpec((OC, 1), lambda i: (0, 0)),
            pl.BlockSpec((OC, 1), lambda i: (0, 0)),
        ],
        out_specs=pl.BlockSpec((OC, M), lambda i: (0, 0)),
        compiler_params=pltpu.CompilerParams(dimension_semantics=("arbitrary",)),
        cost_estimate=pl.CostEstimate(flops=flops, transcendentals=0,
                                      bytes_accessed=bytes_accessed),
    )(w, patches, scale, shift)


def _fc_stack_kernel(x_ref, w1_ref, b1_ref, w2_ref, b2_ref, w3_ref, b3_ref, o_ref):
    # Fused Linear(2048,512)+ReLU -> Linear(512,32)+ReLU -> Linear(32,2).
    # Intermediates live entirely in VMEM/vregs; f32 accumulation + epilogue.
    h = jnp.dot(x_ref[...], w1_ref[...], preferred_element_type=jnp.float32)
    h = jnp.maximum(h + b1_ref[...], 0.0).astype(w2_ref.dtype)
    h = jnp.dot(h, w2_ref[...], preferred_element_type=jnp.float32)
    h = jnp.maximum(h + b2_ref[...], 0.0).astype(w3_ref.dtype)
    h = jnp.dot(h, w3_ref[...], preferred_element_type=jnp.float32)
    o_ref[...] = (h + b3_ref[...]).astype(o_ref.dtype)


def fc_stack(x_flat, w1, b1, w2, b2, w3, b3):
    B, K1 = x_flat.shape
    N1, N2, N3 = w1.shape[1], w2.shape[1], w3.shape[1]
    flops = 2 * B * (K1 * N1 + N1 * N2 + N2 * N3)
    bytes_accessed = (2 * (x_flat.size + w1.size + w2.size + w3.size)
                      + 4 * (b1.size + b2.size + b3.size + B * N3))

    def full(shape):
        return pl.BlockSpec(shape, lambda i: (0, 0))

    return pl.pallas_call(
        _fc_stack_kernel,
        out_shape=jax.ShapeDtypeStruct((B, N3), jnp.float32),
        grid=(1,),
        in_specs=[
            full((B, K1)),
            full((K1, N1)), full((1, N1)),
            full((N1, N2)), full((1, N2)),
            full((N2, N3)), full((1, N3)),
        ],
        out_specs=full((B, N3)),
        compiler_params=pltpu.CompilerParams(dimension_semantics=("arbitrary",)),
        cost_estimate=pl.CostEstimate(flops=flops, transcendentals=0,
                                      bytes_accessed=bytes_accessed),
    )(x_flat, w1, b1, w2, b2, w3, b3)


# ------------------------------ conv glue ------------------------------------
def _im2col_cm(x_cm, kh, kw, stride):
    """x_cm: (C, B, H, W) -> patches (C*kh*kw, B*OH*OW); K order = (c, kh, kw).

    Only strided slices + stack + contiguous reshape: no transposes.
    """
    C, B, H, W = x_cm.shape
    OH = (H - kh) // stride + 1
    OW = (W - kw) // stride + 1
    cols = [x_cm[:, :, i:i + stride * OH:stride, j:j + stride * OW:stride]
            for i in range(kh) for j in range(kw)]           # each (C, B, OH, OW)
    p = jnp.stack(cols, axis=1)                              # (C, kh*kw, B, OH, OW)
    return p.reshape(C * kh * kw, B * OH * OW), OH, OW


def conv_bn_relu(x_cm, layer, kh, kw, stride):
    """Conv2d(stride, no pad) + BatchNorm2d(eval) + ReLU, channel-major layout."""
    w_mat, scale, shift = layer
    B = x_cm.shape[1]
    patches, OH, OW = _im2col_cm(x_cm, kh, kw, stride)
    y = conv_bn_relu_matmul(w_mat, patches, scale, shift)    # (OC, B*OH*OW)
    return y.reshape(w_mat.shape[0], B, OH, OW)


# ---------------------------- parameter init ---------------------------------
def kaiming_uniform_conv(key, shape):
    # nn.init.kaiming_uniform_ defaults: a=0, fan_in, leaky_relu -> gain=sqrt(2)
    fan_in = shape[1] * shape[2] * shape[3]
    bound = (2.0 ** 0.5) * (3.0 / fan_in) ** 0.5
    return jax.random.uniform(key, shape, jnp.float32, -bound, bound)


def xavier_normal_fc(key, shape):
    # nn.init.xavier_normal_: std = gain * sqrt(2 / (fan_in + fan_out)), gain=1
    fan_out, fan_in = shape
    std = (2.0 / (fan_in + fan_out)) ** 0.5
    return std * jax.random.normal(key, shape, jnp.float32)


def _fold_conv_bn(w, b, gamma, beta, mean, var, eps=1e-5):
    """Fold conv bias + BatchNorm(eval) into bf16 matmul weight + f32 scale/shift."""
    oc = w.shape[0]
    inv_std = gamma / jnp.sqrt(var + eps)
    w_mat = w.reshape(oc, -1).astype(jnp.bfloat16)           # (OC, C*KH*KW), native order
    scale = inv_std.reshape(oc, 1).astype(jnp.float32)
    shift = ((b - mean) * inv_std + beta).reshape(oc, 1).astype(jnp.float32)
    return (w_mat, scale, shift)


def init_params(key, sequente_n):
    ks = jax.random.split(key, 6)

    def bn_stats(c):  # fresh BatchNorm2d (eval): gamma=1, beta=0, mean=0, var=1
        return (jnp.ones((c,), jnp.float32), jnp.zeros((c,), jnp.float32),
                jnp.zeros((c,), jnp.float32), jnp.ones((c,), jnp.float32))

    conv1 = _fold_conv_bn(kaiming_uniform_conv(ks[0], (32, sequente_n, 8, 8)),
                          jnp.zeros((32,), jnp.float32), *bn_stats(32))
    conv2 = _fold_conv_bn(kaiming_uniform_conv(ks[1], (64, 32, 4, 4)),
                          jnp.zeros((64,), jnp.float32), *bn_stats(64))
    conv3 = _fold_conv_bn(kaiming_uniform_conv(ks[2], (128, 64, 3, 3)),
                          jnp.zeros((128,), jnp.float32), *bn_stats(128))

    def fc(k, out_n, in_n):  # pre-transpose to (in, out), pre-cast to bf16
        w = xavier_normal_fc(k, (out_n, in_n))               # torch stores (out, in)
        return w.T.astype(jnp.bfloat16), jnp.zeros((1, out_n), jnp.float32)

    fc1_w, fc1_b = fc(ks[3], 512, 2048)
    fc2_w, fc2_b = fc(ks[4], 32, 512)
    fc3_w, fc3_b = fc(ks[5], 2, 32)

    return dict(conv1=conv1, conv2=conv2, conv3=conv3,
                fc1_w=fc1_w, fc1_b=fc1_b, fc2_w=fc2_w, fc2_b=fc2_b,
                fc3_w=fc3_w, fc3_b=fc3_b)


# ------------------------------- forward -------------------------------------
def nn_forward(x, p):
    # x: NCHW (B, C, H, W) float32, matching PyTorch.  One tiny transpose+cast
    # to channel-major bf16 up front; no further layout transposes until the
    # 8 KiB flatten before the fused FC stack.
    B = x.shape[0]
    x_cm = jnp.transpose(x, (1, 0, 2, 3)).astype(jnp.bfloat16)   # (C, B, H, W)
    x_cm = conv_bn_relu(x_cm, p["conv1"], 8, 8, 4)               # (32,  B, 20, 20)
    x_cm = conv_bn_relu(x_cm, p["conv2"], 4, 4, 2)               # (64,  B, 9, 9)
    x_cm = conv_bn_relu(x_cm, p["conv3"], 3, 3, 2)               # (128, B, 4, 4)
    # torch.flatten(x, 1) on NCHW == per-sample (c, h, w) order.
    x_flat = jnp.transpose(x_cm.reshape(128, B, 16), (1, 0, 2)).reshape(B, 2048)
    return fc_stack(x_flat, p["fc1_w"], p["fc1_b"], p["fc2_w"], p["fc2_b"],
                    p["fc3_w"], p["fc3_b"])                      # (B, 2) f32


if __name__ == "__main__":
    key = jax.random.PRNGKey(0)
    k_x, k_p = jax.random.split(key)

    batch, sequente_n, H, W = 2, 4, 84, 84  # 84x84 is implied by Linear(2048, ...)
    x = jax.random.normal(k_x, (batch, sequente_n, H, W), jnp.float32)
    params = init_params(k_p, sequente_n)

    fwd = jax.jit(nn_forward)
    out = jax.block_until_ready(fwd(x, params))

    assert out.shape == (batch, 2), out.shape
    assert bool(jnp.all(jnp.isfinite(out)))
    print("KERNEL_OK")
</pallas_src>

<mosaic_0001>
module attributes {stable_mosaic.version = 11 : i64} {
  func.func @_conv_bn_relu_kernel(%arg0: i32, %arg1: memref<32x256xbf16, #tpu.memory_space<vmem>>, %arg2: memref<256x800xbf16, #tpu.memory_space<vmem>>, %arg3: memref<32x1xf32, #tpu.memory_space<vmem>>, %arg4: memref<32x1xf32, #tpu.memory_space<vmem>>, %arg5: memref<32x800xbf16, #tpu.memory_space<vmem>>) attributes {dimension_semantics = [#tpu.dimension_semantics<arbitrary>], iteration_bounds = array<i64: 1>, scalar_prefetch = 0 : i64, scratch_operands = 0 : i64, tpu.core_type = #tpu.core_type<tc>, window_params = [{pipeline_mode = #tpu.pipeline_mode<synchronous>, transform_indices = @transform_0, window_bounds = array<i64: 32, 256>}, {pipeline_mode = #tpu.pipeline_mode<synchronous>, transform_indices = @transform_1, window_bounds = array<i64: 256, 800>}, {pipeline_mode = #tpu.pipeline_mode<synchronous>, transform_indices = @transform_2, window_bounds = array<i64: 32, 1>}, {pipeline_mode = #tpu.pipeline_mode<synchronous>, transform_indices = @transform_3, window_bounds = array<i64: 32, 1>}, {pipeline_mode = #tpu.pipeline_mode<synchronous>, transform_indices = @transform_4, window_bounds = array<i64: 32, 800>}]} {
    %c0 = arith.constant 0 : index
    %c0_0 = arith.constant 0 : index
    %0 = vector.load %arg1[%c0, %c0_0] : memref<32x256xbf16, #tpu.memory_space<vmem>>, vector<32x256xbf16>
    %c0_1 = arith.constant 0 : index
    %c0_2 = arith.constant 0 : index
    %1 = vector.load %arg2[%c0_1, %c0_2] : memref<256x800xbf16, #tpu.memory_space<vmem>>, vector<256x800xbf16>
    %cst = arith.constant dense<0.000000e+00> : vector<32x800xf32>
    %2 = tpu.matmul %0, %1, %cst {dimension_numbers = #tpu.dot_dimension_numbers<[1], [0], [0], [1], [0, 0, 1, 1], [], []>} : vector<32x256xbf16>, vector<256x800xbf16>, vector<32x800xf32> -> vector<32x800xf32>
    %c0_3 = arith.constant 0 : index
    %c0_4 = arith.constant 0 : index
    %3 = vector.load %arg3[%c0_3, %c0_4] : memref<32x1xf32, #tpu.memory_space<vmem>>, vector<32x1xf32>
    %4 = vector.broadcast %3 : vector<32x1xf32> to vector<32x800xf32>
    %5 = arith.mulf %2, %4 : vector<32x800xf32>
    %c0_5 = arith.constant 0 : index
    %c0_6 = arith.constant 0 : index
    %6 = vector.load %arg4[%c0_5, %c0_6] : memref<32x1xf32, #tpu.memory_space<vmem>>, vector<32x1xf32>
    %7 = vector.broadcast %6 : vector<32x1xf32> to vector<32x800xf32>
    %8 = arith.addf %5, %7 : vector<32x800xf32>
    %cst_7 = arith.constant 0.000000e+00 : f32
    %9 = vector.broadcast %cst_7 : f32 to vector<32x800xf32>
    %10 = arith.maximumf %8, %9 : vector<32x800xf32>
    %11 = arith.truncf %10 : vector<32x800xf32> to vector<32x800xbf16>
    %c0_8 = arith.constant 0 : index
    %c0_9 = arith.constant 0 : index
    %12 = vector.load %arg5[%c0_8, %c0_9] : memref<32x800xbf16, #tpu.memory_space<vmem>>, vector<32x800xbf16>
    tpu.vector_store %arg5[%c0_8, %c0_9], %11 {strides = array<i32>} : memref<32x800xbf16, #tpu.memory_space<vmem>>, vector<32x800xbf16>,
    return
  }
  func.func @transform_0(%arg0: i32) -> (i32, i32) {
    %c0_i32 = arith.constant 0 : i32
    %c0_i32_0 = arith.constant 0 : i32
    %c0_i32_1 = arith.constant 0 : i32
    return %c0_i32, %c0_i32_0 : i32, i32
  }
  func.func @transform_1(%arg0: i32) -> (i32, i32) {
    %c0_i32 = arith.constant 0 : i32
    %c0_i32_0 = arith.constant 0 : i32
    %c0_i32_1 = arith.constant 0 : i32
    return %c0_i32, %c0_i32_0 : i32, i32
  }
  func.func @transform_2(%arg0: i32) -> (i32, i32) {
    %c0_i32 = arith.constant 0 : i32
    %c0_i32_0 = arith.constant 0 : i32
    %c0_i32_1 = arith.constant 0 : i32
    return %c0_i32, %c0_i32_0 : i32, i32
  }
  func.func @transform_3(%arg0: i32) -> (i32, i32) {
    %c0_i32 = arith.constant 0 : i32
    %c0_i32_0 = arith.constant 0 : i32
    %c0_i32_1 = arith.constant 0 : i32
    return %c0_i32, %c0_i32_0 : i32, i32
  }
  func.func @transform_4(%arg0: i32) -> (i32, i32) {
    %c0_i32 = arith.constant 0 : i32
    %c0_i32_0 = arith.constant 0 : i32
    %c0_i32_1 = arith.constant 0 : i32
    return %c0_i32, %c0_i32_0 : i32, i32
  }
}

module attributes {stable_mosaic.version = 11 : i64} {
  func.func @_conv_bn_relu_kernel(%arg0: i32, %arg1: memref<64x512xbf16, #tpu.memory_space<vmem>>, %arg2: memref<512x162xbf16, #tpu.memory_space<vmem>>, %arg3: memref<64x1xf32, #tpu.memory_space<vmem>>, %arg4: memref<64x1xf32, #tpu.memory_space<vmem>>, %arg5: memref<64x162xbf16, #tpu.memory_space<vmem>>) attributes {dimension_semantics = [#tpu.dimension_semantics<arbitrary>], iteration_bounds = array<i64: 1>, scalar_prefetch = 0 : i64, scratch_operands = 0 : i64, tpu.core_type = #tpu.core_type<tc>, window_params = [{pipeline_mode = #tpu.pipeline_mode<synchronous>, transform_indices = @transform_0, window_bounds = array<i64: 64, 512>}, {pipeline_mode = #tpu.pipeline_mode<synchronous>, transform_indices = @transform_1, window_bounds = array<i64: 512, 162>}, {pipeline_mode = #tpu.pipeline_mode<synchronous>, transform_indices = @transform_2, window_bounds = array<i64: 64, 1>}, {pipeline_mode = #tpu.pipeline_mode<synchronous>, transform_indices = @transform_3, window_bounds = array<i64: 64, 1>}, {pipeline_mode = #tpu.pipeline_mode<synchronous>, transform_indices = @transform_4, window_bounds = array<i64: 64, 162>}]} {
    %c0 = arith.constant 0 : index
    %c0_0 = arith.constant 0 : index
    %0 = vector.load %arg1[%c0, %c0_0] : memref<64x512xbf16, #tpu.memory_space<vmem>>, vector<64x512xbf16>
    %c0_1 = arith.constant 0 : index
    %c0_2 = arith.constant 0 : index
    %1 = vector.load %arg2[%c0_1, %c0_2] : memref<512x162xbf16, #tpu.memory_space<vmem>>, vector<512x162xbf16>
    %cst = arith.constant dense<0.000000e+00> : vector<64x162xf32>
    %2 = tpu.matmul %0, %1, %cst {dimension_numbers = #tpu.dot_dimension_numbers<[1], [0], [0], [1], [0, 0, 1, 1], [], []>} : vector<64x512xbf16>, vector<512x162xbf16>, vector<64x162xf32> -> vector<64x162xf32>
    %c0_3 = arith.constant 0 : index
    %c0_4 = arith.constant 0 : index
    %3 = vector.load %arg3[%c0_3, %c0_4] : memref<64x1xf32, #tpu.memory_space<vmem>>, vector<64x1xf32>
    %4 = vector.broadcast %3 : vector<64x1xf32> to vector<64x162xf32>
    %5 = arith.mulf %2, %4 : vector<64x162xf32>
    %c0_5 = arith.constant 0 : index
    %c0_6 = arith.constant 0 : index
    %6 = vector.load %arg4[%c0_5, %c0_6] : memref<64x1xf32, #tpu.memory_space<vmem>>, vector<64x1xf32>
    %7 = vector.broadcast %6 : vector<64x1xf32> to vector<64x162xf32>
    %8 = arith.addf %5, %7 : vector<64x162xf32>
    %cst_7 = arith.constant 0.000000e+00 : f32
    %9 = vector.broadcast %cst_7 : f32 to vector<64x162xf32>
    %10 = arith.maximumf %8, %9 : vector<64x162xf32>
    %11 = arith.truncf %10 : vector<64x162xf32> to vector<64x162xbf16>
    %c0_8 = arith.constant 0 : index
    %c0_9 = arith.constant 0 : index
    %12 = vector.load %arg5[%c0_8, %c0_9] : memref<64x162xbf16, #tpu.memory_space<vmem>>, vector<64x162xbf16>
    tpu.vector_store %arg5[%c0_8, %c0_9], %11 {strides = array<i32>} : memref<64x162xbf16, #tpu.memory_space<vmem>>, vector<64x162xbf16>,
    return
  }
  func.func @transform_0(%arg0: i32) -> (i32, i32) {
    %c0_i32 = arith.constant 0 : i32
    %c0_i32_0 = arith.constant 0 : i32
    %c0_i32_1 = arith.constant 0 : i32
    return %c0_i32, %c0_i32_0 : i32, i32
  }
  func.func @transform_1(%arg0: i32) -> (i32, i32) {
    %c0_i32 = arith.constant 0 : i32
    %c0_i32_0 = arith.constant 0 : i32
    %c0_i32_1 = arith.constant 0 : i32
    return %c0_i32, %c0_i32_0 : i32, i32
  }
  func.func @transform_2(%arg0: i32) -> (i32, i32) {
    %c0_i32 = arith.constant 0 : i32
    %c0_i32_0 = arith.constant 0 : i32
    %c0_i32_1 = arith.constant 0 : i32
    return %c0_i32, %c0_i32_0 : i32, i32
  }
  func.func @transform_3(%arg0: i32) -> (i32, i32) {
    %c0_i32 = arith.constant 0 : i32
    %c0_i32_0 = arith.constant 0 : i32
    %c0_i32_1 = arith.constant 0 : i32
    return %c0_i32, %c0_i32_0 : i32, i32
  }
  func.func @transform_4(%arg0: i32) -> (i32, i32) {
    %c0_i32 = arith.constant 0 : i32
    %c0_i32_0 = arith.constant 0 : i32
    %c0_i32_1 = arith.constant 0 : i32
    return %c0_i32, %c0_i32_0 : i32, i32
  }
}

module attributes {stable_mosaic.version = 11 : i64} {
  func.func @_conv_bn_relu_kernel(%arg0: i32, %arg1: memref<128x576xbf16, #tpu.memory_space<vmem>>, %arg2: memref<576x32xbf16, #tpu.memory_space<vmem>>, %arg3: memref<128x1xf32, #tpu.memory_space<vmem>>, %arg4: memref<128x1xf32, #tpu.memory_space<vmem>>, %arg5: memref<128x32xbf16, #tpu.memory_space<vmem>>) attributes {dimension_semantics = [#tpu.dimension_semantics<arbitrary>], iteration_bounds = array<i64: 1>, scalar_prefetch = 0 : i64, scratch_operands = 0 : i64, tpu.core_type = #tpu.core_type<tc>, window_params = [{pipeline_mode = #tpu.pipeline_mode<synchronous>, transform_indices = @transform_0, window_bounds = array<i64: 128, 576>}, {pipeline_mode = #tpu.pipeline_mode<synchronous>, transform_indices = @transform_1, window_bounds = array<i64: 576, 32>}, {pipeline_mode = #tpu.pipeline_mode<synchronous>, transform_indices = @transform_2, window_bounds = array<i64: 128, 1>}, {pipeline_mode = #tpu.pipeline_mode<synchronous>, transform_indices = @transform_3, window_bounds = array<i64: 128, 1>}, {pipeline_mode = #tpu.pipeline_mode<synchronous>, transform_indices = @transform_4, window_bounds = array<i64: 128, 32>}]} {
    %c0 = arith.constant 0 : index
    %c0_0 = arith.constant 0 : index
    %0 = vector.load %arg1[%c0, %c0_0] : memref<128x576xbf16, #tpu.memory_space<vmem>>, vector<128x576xbf16>
    %c0_1 = arith.constant 0 : index
    %c0_2 = arith.constant 0 : index
    %1 = vector.load %arg2[%c0_1, %c0_2] : memref<576x32xbf16, #tpu.memory_space<vmem>>, vector<576x32xbf16>
    %cst = arith.constant dense<0.000000e+00> : vector<128x32xf32>
    %2 = tpu.matmul %0, %1, %cst {dimension_numbers = #tpu.dot_dimension_numbers<[1], [0], [0], [1], [0, 0, 1, 1], [], []>} : vector<128x576xbf16>, vector<576x32xbf16>, vector<128x32xf32> -> vector<128x32xf32>
    %c0_3 = arith.constant 0 : index
    %c0_4 = arith.constant 0 : index
    %3 = vector.load %arg3[%c0_3, %c0_4] : memref<128x1xf32, #tpu.memory_space<vmem>>, vector<128x1xf32>
    %4 = vector.broadcast %3 : vector<128x1xf32> to vector<128x32xf32>
    %5 = arith.mulf %2, %4 : vector<128x32xf32>
    %c0_5 = arith.constant 0 : index
    %c0_6 = arith.constant 0 : index
    %6 = vector.load %arg4[%c0_5, %c0_6] : memref<128x1xf32, #tpu.memory_space<vmem>>, vector<128x1xf32>
    %7 = vector.broadcast %6 : vector<128x1xf32> to vector<128x32xf32>
    %8 = arith.addf %5, %7 : vector<128x32xf32>
    %cst_7 = arith.constant 0.000000e+00 : f32
    %9 = vector.broadcast %cst_7 : f32 to vector<128x32xf32>
    %10 = arith.maximumf %8, %9 : vector<128x32xf32>
    %11 = arith.truncf %10 : vector<128x32xf32> to vector<128x32xbf16>
    %c0_8 = arith.constant 0 : index
    %c0_9 = arith.constant 0 : index
    %12 = vector.load %arg5[%c0_8, %c0_9] : memref<128x32xbf16, #tpu.memory_space<vmem>>, vector<128x32xbf16>
    tpu.vector_store %arg5[%c0_8, %c0_9], %11 {strides = array<i32>} : memref<128x32xbf16, #tpu.memory_space<vmem>>, vector<128x32xbf16>,
    return
  }
  func.func @transform_0(%arg0: i32) -> (i32, i32) {
    %c0_i32 = arith.constant 0 : i32
    %c0_i32_0 = arith.constant 0 : i32
    %c0_i32_1 = arith.constant 0 : i32
    return %c0_i32, %c0_i32_0 : i32, i32
  }
  func.func @transform_1(%arg0: i32) -> (i32, i32) {
    %c0_i32 = arith.constant 0 : i32
    %c0_i32_0 = arith.constant 0 : i32
    %c0_i32_1 = arith.constant 0 : i32
    return %c0_i32, %c0_i32_0 : i32, i32
  }
  func.func @transform_2(%arg0: i32) -> (i32, i32) {
    %c0_i32 = arith.constant 0 : i32
    %c0_i32_0 = arith.constant 0 : i32
    %c0_i32_1 = arith.constant 0 : i32
    return %c0_i32, %c0_i32_0 : i32, i32
  }
  func.func @transform_3(%arg0: i32) -> (i32, i32) {
    %c0_i32 = arith.constant 0 : i32
    %c0_i32_0 = arith.constant 0 : i32
    %c0_i32_1 = arith.constant 0 : i32
    return %c0_i32, %c0_i32_0 : i32, i32
  }
  func.func @transform_4(%arg0: i32) -> (i32, i32) {
    %c0_i32 = arith.constant 0 : i32
    %c0_i32_0 = arith.constant 0 : i32
    %c0_i32_1 = arith.constant 0 : i32
    return %c0_i32, %c0_i32_0 : i32, i32
  }
}

module attributes {stable_mosaic.version = 11 : i64} {
  func.func @_fc_stack_kernel(%arg0: i32, %arg1: memref<2x2048xbf16, #tpu.memory_space<vmem>>, %arg2: memref<2048x512xbf16, #tpu.memory_space<vmem>>, %arg3: memref<1x512xf32, #tpu.memory_space<vmem>>, %arg4: memref<512x32xbf16, #tpu.memory_space<vmem>>, %arg5: memref<1x32xf32, #tpu.memory_space<vmem>>, %arg6: memref<32x2xbf16, #tpu.memory_space<vmem>>, %arg7: memref<1x2xf32, #tpu.memory_space<vmem>>, %arg8: memref<2x2xf32, #tpu.memory_space<vmem>>) attributes {dimension_semantics = [#tpu.dimension_semantics<arbitrary>], iteration_bounds = array<i64: 1>, scalar_prefetch = 0 : i64, scratch_operands = 0 : i64, tpu.core_type = #tpu.core_type<tc>, window_params = [{pipeline_mode = #tpu.pipeline_mode<synchronous>, transform_indices = @transform_0, window_bounds = array<i64: 2, 2048>}, {pipeline_mode = #tpu.pipeline_mode<synchronous>, transform_indices = @transform_1, window_bounds = array<i64: 2048, 512>}, {pipeline_mode = #tpu.pipeline_mode<synchronous>, transform_indices = @transform_2, window_bounds = array<i64: 1, 512>}, {pipeline_mode = #tpu.pipeline_mode<synchronous>, transform_indices = @transform_3, window_bounds = array<i64: 512, 32>}, {pipeline_mode = #tpu.pipeline_mode<synchronous>, transform_indices = @transform_4, window_bounds = array<i64: 1, 32>}, {pipeline_mode = #tpu.pipeline_mode<synchronous>, transform_indices = @transform_5, window_bounds = array<i64: 32, 2>}, {pipeline_mode = #tpu.pipeline_mode<synchronous>, transform_indices = @transform_6, window_bounds = array<i64: 1, 2>}, {pipeline_mode = #tpu.pipeline_mode<synchronous>, transform_indices = @transform_7, window_bounds = array<i64: 2, 2>}]} {
    %c0 = arith.constant 0 : index
    %c0_0 = arith.constant 0 : index
    %0 = vector.load %arg1[%c0, %c0_0] : memref<2x2048xbf16, #tpu.memory_space<vmem>>, vector<2x2048xbf16>
    %c0_1 = arith.constant 0 : index
    %c0_2 = arith.constant 0 : index
    %1 = vector.load %arg2[%c0_1, %c0_2] : memref<2048x512xbf16, #tpu.memory_space<vmem>>, vector<2048x512xbf16>
    %cst = arith.constant dense<0.000000e+00> : vector<2x512xf32>
    %2 = tpu.matmul %0, %1, %cst {dimension_numbers = #tpu.dot_dimension_numbers<[1], [0], [0], [1], [0, 0, 1, 1], [], []>} : vector<2x2048xbf16>, vector<2048x512xbf16>, vector<2x512xf32> -> vector<2x512xf32>
    %c0_3 = arith.constant 0 : index
    %c0_4 = arith.constant 0 : index
    %3 = vector.load %arg3[%c0_3, %c0_4] : memref<1x512xf32, #tpu.memory_space<vmem>>, vector<1x512xf32>
    %4 = vector.broadcast %3 : vector<1x512xf32> to vector<2x512xf32>
    %5 = arith.addf %2, %4 : vector<2x512xf32>
    %cst_5 = arith.constant 0.000000e+00 : f32
    %6 = vector.broadcast %cst_5 : f32 to vector<2x512xf32>
    %7 = arith.maximumf %5, %6 : vector<2x512xf32>
    %8 = arith.truncf %7 : vector<2x512xf32> to vector<2x512xbf16>
    %c0_6 = arith.constant 0 : index
    %c0_7 = arith.constant 0 : index
    %9 = vector.load %arg4[%c0_6, %c0_7] : memref<512x32xbf16, #tpu.memory_space<vmem>>, vector<512x32xbf16>
    %cst_8 = arith.constant dense<0.000000e+00> : vector<2x32xf32>
    %10 = tpu.matmul %8, %9, %cst_8 {dimension_numbers = #tpu.dot_dimension_numbers<[1], [0], [0], [1], [0, 0, 1, 1], [], []>} : vector<2x512xbf16>, vector<512x32xbf16>, vector<2x32xf32> -> vector<2x32xf32>
    %c0_9 = arith.constant 0 : index
    %c0_10 = arith.constant 0 : index
    %11 = vector.load %arg5[%c0_9, %c0_10] : memref<1x32xf32, #tpu.memory_space<vmem>>, vector<1x32xf32>
    %12 = vector.broadcast %11 : vector<1x32xf32> to vector<2x32xf32>
    %13 = arith.addf %10, %12 : vector<2x32xf32>
    %cst_11 = arith.constant 0.000000e+00 : f32
    %14 = vector.broadcast %cst_11 : f32 to vector<2x32xf32>
    %15 = arith.maximumf %13, %14 : vector<2x32xf32>
    %16 = arith.truncf %15 : vector<2x32xf32> to vector<2x32xbf16>
    %c0_12 = arith.constant 0 : index
    %c0_13 = arith.constant 0 : index
    %17 = vector.load %arg6[%c0_12, %c0_13] : memref<32x2xbf16, #tpu.memory_space<vmem>>, vector<32x2xbf16>
    %cst_14 = arith.constant dense<0.000000e+00> : vector<2x2xf32>
    %18 = tpu.matmul %16, %17, %cst_14 {dimension_numbers = #tpu.dot_dimension_numbers<[1], [0], [0], [1], [0, 0, 1, 1], [], []>} : vector<2x32xbf16>, vector<32x2xbf16>, vector<2x2xf32> -> vector<2x2xf32>
    %c0_15 = arith.constant 0 : index
    %c0_16 = arith.constant 0 : index
    %19 = vector.load %arg7[%c0_15, %c0_16] : memref<1x2xf32, #tpu.memory_space<vmem>>, vector<1x2xf32>
    %20 = vector.broadcast %19 : vector<1x2xf32> to vector<2x2xf32>
    %21 = arith.addf %18, %20 : vector<2x2xf32>
    %c0_17 = arith.constant 0 : index
    %c0_18 = arith.constant 0 : index
    %22 = vector.load %arg8[%c0_17, %c0_18] : memref<2x2xf32, #tpu.memory_space<vmem>>, vector<2x2xf32>
    tpu.vector_store %arg8[%c0_17, %c0_18], %21 {strides = array<i32>} : memref<2x2xf32, #tpu.memory_space<vmem>>, vector<2x2xf32>,
    return
  }
  func.func @transform_0(%arg0: i32) -> (i32, i32) {
    %c0_i32 = arith.constant 0 : i32
    %c0_i32_0 = arith.constant 0 : i32
    %c0_i32_1 = arith.constant 0 : i32
    return %c0_i32, %c0_i32_0 : i32, i32
  }
  func.func @transform_1(%arg0: i32) -> (i32, i32) {
    %c0_i32 = arith.constant 0 : i32
    %c0_i32_0 = arith.constant 0 : i32
    %c0_i32_1 = arith.constant 0 : i32
    return %c0_i32, %c0_i32_0 : i32, i32
  }
  func.func @transform_2(%arg0: i32) -> (i32, i32) {
    %c0_i32 = arith.constant 0 : i32
    %c0_i32_0 = arith.constant 0 : i32
    %c0_i32_1 = arith.constant 0 : i32
    return %c0_i32, %c0_i32_0 : i32, i32
  }
  func.func @transform_3(%arg0: i32) -> (i32, i32) {
    %c0_i32 = arith.constant 0 : i32
    %c0_i32_0 = arith.constant 0 : i32
    %c0_i32_1 = arith.constant 0 : i32
    return %c0_i32, %c0_i32_0 : i32, i32
  }
  func.func @transform_4(%arg0: i32) -> (i32, i32) {
    %c0_i32 = arith.constant 0 : i32
    %c0_i32_0 = arith.constant 0 : i32
    %c0_i32_1 = arith.constant 0 : i32
    return %c0_i32, %c0_i32_0 : i32, i32
  }
  func.func @transform_5(%arg0: i32) -> (i32, i32) {
    %c0_i32 = arith.constant 0 : i32
    %c0_i32_0 = arith.constant 0 : i32
    %c0_i32_1 = arith.constant 0 : i32
    return %c0_i32, %c0_i32_0 : i32, i32
  }
  func.func @transform_6(%arg0: i32) -> (i32, i32) {
    %c0_i32 = arith.constant 0 : i32
    %c0_i32_0 = arith.constant 0 : i32
    %c0_i32_1 = arith.constant 0 : i32
    return %c0_i32, %c0_i32_0 : i32, i32
  }
  func.func @transform_7(%arg0: i32) -> (i32, i32) {
    %c0_i32 = arith.constant 0 : i32
    %c0_i32_0 = arith.constant 0 : i32
    %c0_i32_1 = arith.constant 0 : i32
    return %c0_i32, %c0_i32_0 : i32, i32
  }
}

</mosaic_0001>

<llo_original>
// kernel: nn_forward.4
$region0: #{nn_forward.4}
  #allocation0 [shape = 'u32[]', space=smem, size = 0x4, offset = 0x4, fixed_abs, tag = 'smem constant byte address 0x4 - core index']
  #allocation1 [shape = 'u32[144,128]{1,0:T(1,128)}', space=vmem, size = 0x12000, scoped, tag = 'internal scratch']
  %s0 = inlined_call_operand.vmem [shape: bf16[32,256], index: 0, kind: input, shape index: {}]
  %s1 = inlined_call_operand.vmem [shape: bf16[256,800], index: 1, kind: input, shape index: {}]
  %s2 = inlined_call_operand.vmem [shape: f32[32,1], index: 2, kind: input, shape index: {}]
  %s3 = inlined_call_operand.vmem [shape: f32[32,1], index: 3, kind: input, shape index: {}]
  %s4 = inlined_call_operand.vmem [shape: bf16[32,800], index: 4, kind: output, shape index: {}]
  %s5 = sld [smem:[#allocation0]]
  $region26: #{nn_forward.4} parent=0
    _
  %s7 = ssub.s32 1, %s5
  %s8 = scalar_select 0, %s7, %s5
  // Predicated region
  $region2: #{nn_forward.4} parent=0 // pred_check
    _
  $region3: #{nn_forward.4} parent=0 // pred_check_branch
    %10 = sbr.rel (0) target = $region5
  $region4: #{nn_forward.4} parent=0 // pred_region
    _
  $region5: #{nn_forward.4} parent=0 // pred_fallthru
    _
  // Predicated region
  $region6: #{nn_forward.4} parent=0 // pred_check
    _
  $region7: #{nn_forward.4} parent=0 // pred_check_branch
    %12 = sbr.rel (0) target = $region9
  $region8: #{nn_forward.4} parent=0 // pred_region
    _
  $region9: #{nn_forward.4} parent=0 // pred_fallthru
    _
  // Predicated region
  $region10: #{nn_forward.4} parent=0 // pred_check
    _
  $region11: #{nn_forward.4} parent=0 // pred_check_branch
    %14 = sbr.rel (0) target = $region13
  $region12: #{nn_forward.4} parent=0 // pred_region
    _
  $region13: #{nn_forward.4} parent=0 // pred_fallthru
    _
  // Predicated region
  $region14: #{nn_forward.4} parent=0 // pred_check
    _
  $region15: #{nn_forward.4} parent=0 // pred_check_branch
    %16 = sbr.rel (0) target = $region17
  $region16: #{nn_forward.4} parent=0 // pred_region
    _
  $region17: #{nn_forward.4} parent=0 // pred_fallthru
    _
  %v18 = vld [vmem:[%s0] sm:$0xff]
  %v19 = vld [vmem:[%s0 + $0x8] sm:$0xff]
  %v20 = vld [vmem:[%s0 + $0x10] sm:$0xff]
  %v21 = vld [vmem:[%s0 + $0x18] sm:$0xff]
  %v22 = vld [vmem:[%s1] sm:$0xff]
  %v23 = vld [vmem:[%s1 + $0x8] sm:$0xff]
  %v24 = vld [vmem:[%s1 + $0x10] sm:$0xff]
  %v25 = vld [vmem:[%s1 + $0x18] sm:$0xf]
  %v26 = vld [vmem:[%s1 + $0x1c] sm:$0xff]
  %v27 = vld [vmem:[%s1 + $0x24] sm:$0xff]
  %v28 = vld [vmem:[%s1 + $0x2c] sm:$0xff]
  %v29 = vld [vmem:[%s1 + $0x34] sm:$0xf]
  %v30 = vld [vmem:[%s1 + $0x38] sm:$0xff]
  %v31 = vld [vmem:[%s1 + $0x40] sm:$0xff]
  %v32 = vld [vmem:[%s1 + $0x48] sm:$0xff]
  %v33 = vld [vmem:[%s1 + $0x50] sm:$0xf]
  %v34 = vld [vmem:[%s1 + $0x54] sm:$0xff]
  %v35 = vld [vmem:[%s1 + $0x5c] sm:$0xff]
  %v36 = vld [vmem:[%s1 + $0x64] sm:$0xff]
  %v37 = vld [vmem:[%s1 + $0x6c] sm:$0xf]
  %v38 = vld [vmem:[%s1 + $0x70] sm:$0xff]
  %v39 = vld [vmem:[%s1 + $0x78] sm:$0xff]
  %v40 = vld [vmem:[%s1 + $0x80] sm:$0xff]
  %v41 = vld [vmem:[%s1 + $0x88] sm:$0xf]
  %v42 = vld [vmem:[%s1 + $0x8c] sm:$0xff]
  %v43 = vld [vmem:[%s1 + $0x94] sm:$0xff]
  %v44 = vld [vmem:[%s1 + $0x9c] sm:$0xff]
  %v45 = vld [vmem:[%s1 + $0xa4] sm:$0xf]
  %v46 = vld [vmem:[%s1 + $0xa8] sm:$0xff]
  %v47 = vld [vmem:[%s1 + $0xb0] sm:$0xff]
  %v48 = vld [vmem:[%s1 + $0xb8] sm:$0xff]
  %v49 = vld [vmem:[%s1 + $0xc0] sm:$0xf]
  %v50 = vld [vmem:[%s1 + $0xc4] sm:$0xff]
  %v51 = vld [vmem:[%s1 + $0xcc] sm:$0xff]
  %v52 = vld [vmem:[%s1 + $0xd4] sm:$0xff]
  %v53 = vld [vmem:[%s1 + $0xdc] sm:$0xf]
  %v54 = vld [vmem:[%s1 + $0xe0] sm:$0xff]
  %v55 = vld [vmem:[%s1 + $0xe8] sm:$0xff]
  %v56 = vld [vmem:[%s1 + $0xf0] sm:$0xff]
  %v57 = vld [vmem:[%s1 + $0xf8] sm:$0xf]
  %v58 = vld [vmem:[%s1 + $0xfc] sm:$0xff]
  %v59 = vld [vmem:[%s1 + $0x104] sm:$0xff]
  %v60 = vld [vmem:[%s1 + $0x10c] sm:$0xff]
  %v61 = vld [vmem:[%s1 + $0x114] sm:$0xf]
  %v62 = vld [vmem:[%s1 + $0x118] sm:$0xff]
  %v63 = vld [vmem:[%s1 + $0x120] sm:$0xff]
  %v64 = vld [vmem:[%s1 + $0x128] sm:$0xff]
  %v65 = vld [vmem:[%s1 + $0x130] sm:$0xf]
  %v66 = vld [vmem:[%s1 + $0x134] sm:$0xff]
  %v67 = vld [vmem:[%s1 + $0x13c] sm:$0xff]
  %v68 = vld [vmem:[%s1 + $0x144] sm:$0xff]
  %v69 = vld [vmem:[%s1 + $0x14c] sm:$0xf]
  %v70 = vld [vmem:[%s1 + $0x150] sm:$0xff]
  %v71 = vld [vmem:[%s1 + $0x158] sm:$0xff]
  %v72 = vld [vmem:[%s1 + $0x160] sm:$0xff]
  %v73 = vld [vmem:[%s1 + $0x168] sm:$0xf]
  %v74 = vld [vmem:[%s1 + $0x16c] sm:$0xff]
  %v75 = vld [vmem:[%s1 + $0x174] sm:$0xff]
  %v76 = vld [vmem:[%s1 + $0x17c] sm:$0xff]
  %v77 = vld [vmem:[%s1 + $0x184] sm:$0xf]
  %v78 = vld [vmem:[%s1 + $0x188] sm:$0xff]
  %v79 = vld [vmem:[%s1 + $0x190] sm:$0xff]
  %v80 = vld [vmem:[%s1 + $0x198] sm:$0xff]
  %v81 = vld [vmem:[%s1 + $0x1a0] sm:$0xf]
  %v82 = vld [vmem:[%s1 + $0x1a4] sm:$0xff]
  %v83 = vld [vmem:[%s1 + $0x1ac] sm:$0xff]
  %v84 = vld [vmem:[%s1 + $0x1b4] sm:$0xff]
  %v85 = vld [vmem:[%s1 + $0x1bc] sm:$0xf]
  %v86 = vld [vmem:[%s1 + $0x1c0] sm:$0xff]
  %v87 = vld [vmem:[%s1 + $0x1c8] sm:$0xff]
  %v88 = vld [vmem:[%s1 + $0x1d0] sm:$0xff]
  %v89 = vld [vmem:[%s1 + $0x1d8] sm:$0xf]
  %v90 = vld [vmem:[%s1 + $0x1dc] sm:$0xff]
  %v91 = vld [vmem:[%s1 + $0x1e4] sm:$0xff]
  %v92 = vld [vmem:[%s1 + $0x1ec] sm:$0xff]
  %v93 = vld [vmem:[%s1 + $0x1f4] sm:$0xf]
  %v94 = vld [vmem:[%s1 + $0x1f8] sm:$0xff]
  %v95 = vld [vmem:[%s1 + $0x200] sm:$0xff]
  %v96 = vld [vmem:[%s1 + $0x208] sm:$0xff]
  %v97 = vld [vmem:[%s1 + $0x210] sm:$0xf]
  %v98 = vld [vmem:[%s1 + $0x214] sm:$0xff]
  %v99 = vld [vmem:[%s1 + $0x21c] sm:$0xff]
  %v100 = vld [vmem:[%s1 + $0x224] sm:$0xff]
  %v101 = vld [vmem:[%s1 + $0x22c] sm:$0xf]
  %v102 = vld [vmem:[%s1 + $0x230] sm:$0xff]
  %v103 = vld [vmem:[%s1 + $0x238] sm:$0xff]
  %v104 = vld [vmem:[%s1 + $0x240] sm:$0xff]
  %v105 = vld [vmem:[%s1 + $0x248] sm:$0xf]
  %v106 = vld [vmem:[%s1 + $0x24c] sm:$0xff]
  %v107 = vld [vmem:[%s1 + $0x254] sm:$0xff]
  %v108 = vld [vmem:[%s1 + $0x25c] sm:$0xff]
  %v109 = vld [vmem:[%s1 + $0x264] sm:$0xf]
  %v110 = vld [vmem:[%s1 + $0x268] sm:$0xff]
  %v111 = vld [vmem:[%s1 + $0x270] sm:$0xff]
  %v112 = vld [vmem:[%s1 + $0x278] sm:$0xff]
  %v113 = vld [vmem:[%s1 + $0x280] sm:$0xf]
  %v114 = vld [vmem:[%s1 + $0x284] sm:$0xff]
  %v115 = vld [vmem:[%s1 + $0x28c] sm:$0xff]
  %v116 = vld [vmem:[%s1 + $0x294] sm:$0xff]
  %v117 = vld [vmem:[%s1 + $0x29c] sm:$0xf]
  %v118 = vld [vmem:[%s1 + $0x2a0] sm:$0xff]
  %v119 = vld [vmem:[%s1 + $0x2a8] sm:$0xff]
  %v120 = vld [vmem:[%s1 + $0x2b0] sm:$0xff]
  %v121 = vld [vmem:[%s1 + $0x2b8] sm:$0xf]
  %v122 = vld [vmem:[%s1 + $0x2bc] sm:$0xff]
  %v123 = vld [vmem:[%s1 + $0x2c4] sm:$0xff]
  %v124 = vld [vmem:[%s1 + $0x2cc] sm:$0xff]
  %v125 = vld [vmem:[%s1 + $0x2d4] sm:$0xf]
  %v126 = vld [vmem:[%s1 + $0x2d8] sm:$0xff]
  %v127 = vld [vmem:[%s1 + $0x2e0] sm:$0xff]
  %v128 = vld [vmem:[%s1 + $0x2e8] sm:$0xff]
  %v129 = vld [vmem:[%s1 + $0x2f0] sm:$0xf]
  %v130 = vld [vmem:[%s1 + $0x2f4] sm:$0xff]
  %v131 = vld [vmem:[%s1 + $0x2fc] sm:$0xff]
  %v132 = vld [vmem:[%s1 + $0x304] sm:$0xff]
  %v133 = vld [vmem:[%s1 + $0x30c] sm:$0xf]
  %v134 = vld [vmem:[%s1 + $0x310] sm:$0xff]
  %v135 = vld [vmem:[%s1 + $0x318] sm:$0xff]
  %v136 = vld [vmem:[%s1 + $0x320] sm:$0xff]
  %v137 = vld [vmem:[%s1 + $0x328] sm:$0xf]
  %v138 = vld [vmem:[%s1 + $0x32c] sm:$0xff]
  %v139 = vld [vmem:[%s1 + $0x334] sm:$0xff]
  %v140 = vld [vmem:[%s1 + $0x33c] sm:$0xff]
  %v141 = vld [vmem:[%s1 + $0x344] sm:$0xf]
  %v142 = vld [vmem:[%s1 + $0x348] sm:$0xff]
  %v143 = vld [vmem:[%s1 + $0x350] sm:$0xff]
  %v144 = vld [vmem:[%s1 + $0x358] sm:$0xff]
  %v145 = vld [vmem:[%s1 + $0x360] sm:$0xf]
  %v146 = vld [vmem:[%s1 + $0x364] sm:$0xff]
  %v147 = vld [vmem:[%s1 + $0x36c] sm:$0xff]
  %v148 = vld [vmem:[%s1 + $0x374] sm:$0xff]
  %v149 = vld [vmem:[%s1 + $0x37c] sm:$0xf]
  %v154 = vunpack.c.l.b16 %v18
  %v155 = vunpack.c.h.b16 %v18
  %v156 = vunpack.c.l.b16 %v19
  %v157 = vunpack.c.h.b16 %v19
  %v158 = vunpack.c.l.b16 %v20
  %v159 = vunpack.c.h.b16 %v20
  %v160 = vunpack.c.l.b16 %v21
  %v161 = vunpack.c.h.b16 %v21
  %v162 = vpack.c.b16 %v156, %v154
  %v163 = vpack.c.b16 %v157, %v155
  %v164 = vpack.c.b16 %v160, %v158
  %v165 = vpack.c.b16 %v161, %v159
  %v298 = vunpack.c.l.b16 %v22
  %v299 = vunpack.c.h.b16 %v22
  %v300 = vunpack.c.l.b16 %v23
  %v301 = vunpack.c.h.b16 %v23
  %v302 = vunpack.c.l.b16 %v24
  %v303 = vunpack.c.h.b16 %v24
  %v304 = vunpack.c.l.b16 %v25
  %v305 = vunpack.c.l.b16 %v26
  %v306 = vunpack.c.h.b16 %v26
  %v307 = vunpack.c.l.b16 %v27
  %v308 = vunpack.c.h.b16 %v27
  %v309 = vunpack.c.l.b16 %v28
  %v310 = vunpack.c.h.b16 %v28
  %v311 = vunpack.c.l.b16 %v29
  %v312 = vunpack.c.l.b16 %v30
  %v313 = vunpack.c.h.b16 %v30
  %v314 = vunpack.c.l.b16 %v31
  %v315 = vunpack.c.h.b16 %v31
  %v316 = vunpack.c.l.b16 %v32
  %v317 = vunpack.c.h.b16 %v32
  %v318 = vunpack.c.l.b16 %v33
  %v319 = vunpack.c.l.b16 %v34
  %v320 = vunpack.c.h.b16 %v34
  %v321 = vunpack.c.l.b16 %v35
  %v322 = vunpack.c.h.b16 %v35
  %v323 = vunpack.c.l.b16 %v36
  %v324 = vunpack.c.h.b16 %v36
  %v325 = vunpack.c.l.b16 %v37
  %v326 = vunpack.c.l.b16 %v38
  %v327 = vunpack.c.h.b16 %v38
  %v328 = vunpack.c.l.b16 %v39
  %v329 = vunpack.c.h.b16 %v39
  %v330 = vunpack.c.l.b16 %v40
  %v331 = vunpack.c.h.b16 %v40
  %v332 = vunpack.c.l.b16 %v41
  %v333 = vunpack.c.l.b16 %v42
  %v334 = vunpack.c.h.b16 %v42
  %v335 = vunpack.c.l.b16 %v43
  %v336 = vunpack.c.h.b16 %v43
  %v337 = vunpack.c.l.b16 %v44
  %v338 = vunpack.c.h.b16 %v44
  %v339 = vunpack.c.l.b16 %v45
  %v340 = vunpack.c.l.b16 %v46
  %v341 = vunpack.c.h.b16 %v46
  %v342 = vunpack.c.l.b16 %v47
  %v343 = vunpack.c.h.b16 %v47
  %v344 = vunpack.c.l.b16 %v48
  %v345 = vunpack.c.h.b16 %v48
  %v346 = vunpack.c.l.b16 %v49
  %v347 = vunpack.c.l.b16 %v50
  %v348 = vunpack.c.h.b16 %v50
  %v349 = vunpack.c.l.b16 %v51
  %v350 = vunpack.c.h.b16 %v51
  %v351 = vunpack.c.l.b16 %v52
  %v352 = vunpack.c.h.b16 %v52
  %v353 = vunpack.c.l.b16 %v53
  %v354 = vunpack.c.l.b16 %v54
  %v355 = vunpack.c.h.b16 %v54
  %v356 = vunpack.c.l.b16 %v55
  %v357 = vunpack.c.h.b16 %v55
  %v358 = vunpack.c.l.b16 %v56
  %v359 = vunpack.c.h.b16 %v56
  %v360 = vunpack.c.l.b16 %v57
  %v361 = vunpack.c.l.b16 %v58
  %v362 = vunpack.c.h.b16 %v58
  %v363 = vunpack.c.l.b16 %v59
  %v364 = vunpack.c.h.b16 %v59
  %v365 = vunpack.c.l.b16 %v60
  %v366 = vunpack.c.h.b16 %v60
  %v367 = vunpack.c.l.b16 %v61
  %v368 = vunpack.c.l.b16 %v62
  %v369 = vunpack.c.h.b16 %v62
  %v370 = vunpack.c.l.b16 %v63
  %v371 = vunpack.c.h.b16 %v63
  %v372 = vunpack.c.l.b16 %v64
  %v373 = vunpack.c.h.b16 %v64
  %v374 = vunpack.c.l.b16 %v65
  %v375 = vunpack.c.l.b16 %v66
  %v376 = vunpack.c.h.b16 %v66
  %v377 = vunpack.c.l.b16 %v67
  %v378 = vunpack.c.h.b16 %v67
  %v379 = vunpack.c.l.b16 %v68
  %v380 = vunpack.c.h.b16 %v68
  %v381 = vunpack.c.l.b16 %v69
  %v382 = vunpack.c.l.b16 %v70
  %v383 = vunpack.c.h.b16 %v70
  %v384 = vunpack.c.l.b16 %v71
  %v385 = vunpack.c.h.b16 %v71
  %v386 = vunpack.c.l.b16 %v72
  %v387 = vunpack.c.h.b16 %v72
  %v388 = vunpack.c.l.b16 %v73
  %v389 = vunpack.c.l.b16 %v74
  %v390 = vunpack.c.h.b16 %v74
  %v391 = vunpack.c.l.b16 %v75
  %v392 = vunpack.c.h.b16 %v75
  %v393 = vunpack.c.l.b16 %v76
  %v394 = vunpack.c.h.b16 %v76
  %v395 = vunpack.c.l.b16 %v77
  %v396 = vunpack.c.l.b16 %v78
  %v397 = vunpack.c.h.b16 %v78
  %v398 = vunpack.c.l.b16 %v79
  %v399 = vunpack.c.h.b16 %v79
  %v400 = vunpack.c.l.b16 %v80
  %v401 = vunpack.c.h.b16 %v80
  %v402 = vunpack.c.l.b16 %v81
  %v403 = vunpack.c.l.b16 %v82
  %v404 = vunpack.c.h.b16 %v82
  %v405 = vunpack.c.l.b16 %v83
  %v406 = vunpack.c.h.b16 %v83
  %v407 = vunpack.c.l.b16 %v84
  %v408 = vunpack.c.h.b16 %v84
  %v409 = vunpack.c.l.b16 %v85
  %v410 = vunpack.c.l.b16 %v86
  %v411 = vunpack.c.h.b16 %v86
  %v412 = vunpack.c.l.b16 %v87
  %v413 = vunpack.c.h.b16 %v87
  %v414 = vunpack.c.l.b16 %v88
  %v415 = vunpack.c.h.b16 %v88
  %v416 = vunpack.c.l.b16 %v89
  %v417 = vunpack.c.l.b16 %v90
  %v418 = vunpack.c.h.b16 %v90
  %v419 = vunpack.c.l.b16 %v91
  %v420 = vunpack.c.h.b16 %v91
  %v421 = vunpack.c.l.b16 %v92
  %v422 = vunpack.c.h.b16 %v92
  %v423 = vunpack.c.l.b16 %v93
  %v424 = vunpack.c.l.b16 %v94
  %v425 = vunpack.c.h.b16 %v94
  %v426 = vunpack.c.l.b16 %v95
  %v427 = vunpack.c.h.b16 %v95
  %v428 = vunpack.c.l.b16 %v96
  %v429 = vunpack.c.h.b16 %v96
  %v430 = vunpack.c.l.b16 %v97
  %v431 = vunpack.c.l.b16 %v98
  %v432 = vunpack.c.h.b16 %v98
  %v433 = vunpack.c.l.b16 %v99
  %v434 = vunpack.c.h.b16 %v99
  %v435 = vunpack.c.l.b16 %v100
  %v436 = vunpack.c.h.b16 %v100
  %v437 = vunpack.c.l.b16 %v101
  %v438 = vunpack.c.l.b16 %v102
  %v439 = vunpack.c.h.b16 %v102
  %v440 = vunpack.c.l.b16 %v103
  %v441 = vunpack.c.h.b16 %v103
  %v442 = vunpack.c.l.b16 %v104
  %v443 = vunpack.c.h.b16 %v104
  %v444 = vunpack.c.l.b16 %v105
  %v445 = vunpack.c.l.b16 %v106
  %v446 = vunpack.c.h.b16 %v106
  %v447 = vunpack.c.l.b16 %v107
  %v448 = vunpack.c.h.b16 %v107
  %v449 = vunpack.c.l.b16 %v108
  %v450 = vunpack.c.h.b16 %v108
  %v451 = vunpack.c.l.b16 %v109
  %v452 = vunpack.c.l.b16 %v110
  %v453 = vunpack.c.h.b16 %v110
  %v454 = vunpack.c.l.b16 %v111
  %v455 = vunpack.c.h.b16 %v111
  %v456 = vunpack.c.l.b16 %v112
  %v457 = vunpack.c.h.b16 %v112
  %v458 = vunpack.c.l.b16 %v113
  %v459 = vunpack.c.l.b16 %v114
  %v460 = vunpack.c.h.b16 %v114
  %v461 = vunpack.c.l.b16 %v115
  %v462 = vunpack.c.h.b16 %v115
  %v463 = vunpack.c.l.b16 %v116
  %v464 = vunpack.c.h.b16 %v116
  %v465 = vunpack.c.l.b16 %v117
  %v466 = vunpack.c.l.b16 %v118
  %v467 = vunpack.c.h.b16 %v118
  %v468 = vunpack.c.l.b16 %v119
  %v469 = vunpack.c.h.b16 %v119
  %v470 = vunpack.c.l.b16 %v120
  %v471 = vunpack.c.h.b16 %v120
  %v472 = vunpack.c.l.b16 %v121
  %v473 = vunpack.c.l.b16 %v122
  %v474 = vunpack.c.h.b16 %v122
  %v475 = vunpack.c.l.b16 %v123
  %v476 = vunpack.c.h.b16 %v123
  %v477 = vunpack.c.l.b16 %v124
  %v478 = vunpack.c.h.b16 %v124
  %v479 = vunpack.c.l.b16 %v125
  %v480 = vunpack.c.l.b16 %v126
  %v481 = vunpack.c.h.b16 %v126
  %v482 = vunpack.c.l.b16 %v127
  %v483 = vunpack.c.h.b16 %v127
  %v484 = vunpack.c.l.b16 %v128
  %v485 = vunpack.c.h.b16 %v128
  %v486 = vunpack.c.l.b16 %v129
  %v487 = vunpack.c.l.b16 %v130
  %v488 = vunpack.c.h.b16 %v130
  %v489 = vunpack.c.l.b16 %v131
  %v490 = vunpack.c.h.b16 %v131
  %v491 = vunpack.c.l.b16 %v132
  %v492 = vunpack.c.h.b16 %v132
  %v493 = vunpack.c.l.b16 %v133
  %v494 = vunpack.c.l.b16 %v134
  %v495 = vunpack.c.h.b16 %v134
  %v496 = vunpack.c.l.b16 %v135
  %v497 = vunpack.c.h.b16 %v135
  %v498 = vunpack.c.l.b16 %v136
  %v499 = vunpack.c.h.b16 %v136
  %v500 = vunpack.c.l.b16 %v137
  %v501 = vunpack.c.l.b16 %v138
  %v502 = vunpack.c.h.b16 %v138
  %v503 = vunpack.c.l.b16 %v139
  %v504 = vunpack.c.h.b16 %v139
  %v505 = vunpack.c.l.b16 %v140
  %v506 = vunpack.c.h.b16 %v140
  %v507 = vunpack.c.l.b16 %v141
  %v508 = vunpack.c.l.b16 %v142
  %v509 = vunpack.c.h.b16 %v142
  %v510 = vunpack.c.l.b16 %v143
  %v511 = vunpack.c.h.b16 %v143
  %v512 = vunpack.c.l.b16 %v144
  %v513 = vunpack.c.h.b16 %v144
  %v514 = vunpack.c.l.b16 %v145
  %v515 = vunpack.c.l.b16 %v146
  %v516 = vunpack.c.h.b16 %v146
  %v517 = vunpack.c.l.b16 %v147
  %v518 = vunpack.c.h.b16 %v147
  %v519 = vunpack.c.l.b16 %v148
  %v520 = vunpack.c.h.b16 %v148
  %v521 = vunpack.c.l.b16 %v149
  %v522 = vpack.c.b16 %v305, %v298
  %v523 = vpack.c.b16 %v306, %v299
  %v524 = vpack.c.b16 %v307, %v300
  %v525 = vpack.c.b16 %v308, %v301
  %v526 = vpack.c.b16 %v309, %v302
  %v527 = vpack.c.b16 %v310, %v303
  %v528 = vpack.c.b16 %v311, %v304
  %v529 = vpack.c.b16 %v319, %v312
  %v530 = vpack.c.b16 %v320, %v313
  %v531 = vpack.c.b16 %v321, %v314
  %v532 = vpack.c.b16 %v322, %v315
  %v533 = vpack.c.b16 %v323, %v316
  %v534 = vpack.c.b16 %v324, %v317
  %v535 = vpack.c.b16 %v325, %v318
  %v536 = vpack.c.b16 %v333, %v326
  %v537 = vpack.c.b16 %v334, %v327
  %v538 = vpack.c.b16 %v335, %v328
  %v539 = vpack.c.b16 %v336, %v329
  %v540 = vpack.c.b16 %v337, %v330
  %v541 = vpack.c.b16 %v338, %v331
  %v542 = vpack.c.b16 %v339, %v332
  %v543 = vpack.c.b16 %v347, %v340
  %v544 = vpack.c.b16 %v348, %v341
  %v545 = vpack.c.b16 %v349, %v342
  %v546 = vpack.c.b16 %v350, %v343
  %v547 = vpack.c.b16 %v351, %v344
  %v548 = vpack.c.b16 %v352, %v345
  %v549 = vpack.c.b16 %v353, %v346
  %v550 = vpack.c.b16 %v361, %v354
  %v551 = vpack.c.b16 %v362, %v355
  %v552 = vpack.c.b16 %v363, %v356
  %v553 = vpack.c.b16 %v364, %v357
  %v554 = vpack.c.b16 %v365, %v358
  %v555 = vpack.c.b16 %v366, %v359
  %v556 = vpack.c.b16 %v367, %v360
  %v557 = vpack.c.b16 %v375, %v368
  %v558 = vpack.c.b16 %v376, %v369
  %v559 = vpack.c.b16 %v377, %v370
  %v560 = vpack.c.b16 %v378, %v371
  %v561 = vpack.c.b16 %v379, %v372
  %v562 = vpack.c.b16 %v380, %v373
  %v563 = vpack.c.b16 %v381, %v374
  %v564 = vpack.c.b16 %v389, %v382
  %v565 = vpack.c.b16 %v390, %v383
  %v566 = vpack.c.b16 %v391, %v384
  %v567 = vpack.c.b16 %v392, %v385
  %v568 = vpack.c.b16 %v393, %v386
  %v569 = vpack.c.b16 %v394, %v387
  %v570 = vpack.c.b16 %v395, %v388
  %v571 = vpack.c.b16 %v403, %v396
  %v572 = vpack.c.b16 %v404, %v397
  %v573 = vpack.c.b16 %v405, %v398
  %v574 = vpack.c.b16 %v406, %v399
  %v575 = vpack.c.b16 %v407, %v400
  %v576 = vpack.c.b16 %v408, %v401
  %v577 = vpack.c.b16 %v409, %v402
  %v578 = vpack.c.b16 %v417, %v410
  %v579 = vpack.c.b16 %v418, %v411
  %v580 = vpack.c.b16 %v419, %v412
  %v581 = vpack.c.b16 %v420, %v413
  %v582 = vpack.c.b16 %v421, %v414
  %v583 = vpack.c.b16 %v422, %v415
  %v584 = vpack.c.b16 %v423, %v416
  %v585 = vpack.c.b16 %v431, %v424
  %v586 = vpack.c.b16 %v432, %v425
  %v587 = vpack.c.b16 %v433, %v426
  %v588 = vpack.c.b16 %v434, %v427
  %v589 = vpack.c.b16 %v435, %v428
  %v590 = vpack.c.b16 %v436, %v429
  %v591 = vpack.c.b16 %v437, %v430
  %v592 = vpack.c.b16 %v445, %v438
  %v593 = vpack.c.b16 %v446, %v439
  %v594 = vpack.c.b16 %v447, %v440
  %v595 = vpack.c.b16 %v448, %v441
  %v596 = vpack.c.b16 %v449, %v442
  %v597 = vpack.c.b16 %v450, %v443
  %v598 = vpack.c.b16 %v451, %v444
  %v599 = vpack.c.b16 %v459, %v452
  %v600 = vpack.c.b16 %v460, %v453
  %v601 = vpack.c.b16 %v461, %v454
  %v602 = vpack.c.b16 %v462, %v455
  %v603 = vpack.c.b16 %v463, %v456
  %v604 = vpack.c.b16 %v464, %v457
  %v605 = vpack.c.b16 %v465, %v458
  %v606 = vpack.c.b16 %v473, %v466
  %v607 = vpack.c.b16 %v474, %v467
  %v608 = vpack.c.b16 %v475, %v468
  %v609 = vpack.c.b16 %v476, %v469
  %v610 = vpack.c.b16 %v477, %v470
  %v611 = vpack.c.b16 %v478, %v471
  %v612 = vpack.c.b16 %v479, %v472
  %v613 = vpack.c.b16 %v487, %v480
  %v614 = vpack.c.b16 %v488, %v481
  %v615 = vpack.c.b16 %v489, %v482
  %v616 = vpack.c.b16 %v490, %v483
  %v617 = vpack.c.b16 %v491, %v484
  %v618 = vpack.c.b16 %v492, %v485
  %v619 = vpack.c.b16 %v493, %v486
  %v620 = vpack.c.b16 %v501, %v494
  %v621 = vpack.c.b16 %v502, %v495
  %v622 = vpack.c.b16 %v503, %v496
  %v623 = vpack.c.b16 %v504, %v497
  %v624 = vpack.c.b16 %v505, %v498
  %v625 = vpack.c.b16 %v506, %v499
  %v626 = vpack.c.b16 %v507, %v500
  %v627 = vpack.c.b16 %v515, %v508
  %v628 = vpack.c.b16 %v516, %v509
  %v629 = vpack.c.b16 %v517, %v510
  %v630 = vpack.c.b16 %v518, %v511
  %v631 = vpack.c.b16 %v519, %v512
  %v632 = vpack.c.b16 %v520, %v513
  %v633 = vpack.c.b16 %v521, %v514
  %746 = vmatprep.subr.bf16.mxu0 %v523
  %747 = vmatpush1.bf16.msra.mxu0 %v522
  %748 = vmatprep.subr.bf16.mxu0 %v530
  %749 = vmatpush1.bf16.msra.mxu0 %v529
  %750 = vmatprep.subr.bf16.mxu0 %v537
  %751 = vmatpush1.bf16.msra.mxu0 %v536
  %752 = vmatprep.subr.bf16.mxu0 %v544
  %753 = vmatpush1.bf16.msra.mxu0 %v543
  %754 = vmatprep.subr.bf16.mxu0 %v551
  %755 = vmatpush1.bf16.msra.mxu0 %v550
  %756 = vmatprep.subr.bf16.mxu0 %v558
  %757 = vmatpush1.bf16.msra.mxu0 %v557
  %758 = vmatprep.subr.bf16.mxu0 %v565
  %759 = vmatpush1.bf16.msra.mxu0 %v564
  %760 = vmatprep.subr.bf16.mxu0 %v572
  %761 = vmatpush1.bf16.msra.mxu0 %v571
  %762 = vmatprep.subr.bf16.mxu0 %v579
  %763 = vmatpush1.bf16.msra.mxu0 %v578
  %764 = vmatprep.subr.bf16.mxu0 %v586
  %765 = vmatpush1.bf16.msra.mxu0 %v585
  %766 = vmatprep.subr.bf16.mxu0 %v593
  %767 = vmatpush1.bf16.msra.mxu0 %v592
  %768 = vmatprep.subr.bf16.mxu0 %v600
  %769 = vmatpush1.bf16.msra.mxu0 %v599
  %770 = vmatprep.subr.bf16.mxu0 %v607
  %771 = vmatpush1.bf16.msra.mxu0 %v606
  %772 = vmatprep.subr.bf16.mxu0 %v614
  %773 = vmatpush1.bf16.msra.mxu0 %v613
  %774 = vmatprep.subr.bf16.mxu0 %v621
  %775 = vmatpush1.bf16.msra.mxu0 %v620
  %776 = vmatprep.subr.bf16.mxu0 %v628
  %777 = vmatpush1.bf16.msra.mxu0 %v627
  %778 = vmatprep.mubr.bf16.mxu0 %v163
  %779 = vmatmul.mubr.bf16.gmra.mrb[0].mxu0 %v162
  %v780 = vpop.f32.mrb[0].mxu0
  %v781 = vadd.f32 0.0, %v780
  %v782 = vpop.f32.mrb[0].mxu0
  %v783 = vadd.f32 0.0, %v782
  %v784 = vpop.f32.mrb[0].mxu0
  %v785 = vadd.f32 0.0, %v784
  %v786 = vpop.f32.mrb[0].mxu0
  %v787 = vadd.f32 0.0, %v786
  %788 = vmatprep.mubr.bf16.mxu0 %v165
  %789 = vmatmul.mubr.bf16.gmra.mrb[0].mxu0 %v164
  %v790 = vpop.f32.mrb[0].mxu0
  %v791 = vadd.f32 0.0, %v790
  %v792 = vpop.f32.mrb[0].mxu0
  %v793 = vadd.f32 0.0, %v792
  %v794 = vpop.f32.mrb[0].mxu0
  %v795 = vadd.f32 0.0, %v794
  %v796 = vpop.f32.mrb[0].mxu0
  %v797 = vadd.f32 0.0, %v796
  %798 = vdwg.mxu0
  %799 = vmatprep.subr.bf16.mxu0 %v525
  %800 = vmatpush1.bf16.msra.mxu0 %v524
  %801 = vmatprep.subr.bf16.mxu0 %v532
  %802 = vmatpush1.bf16.msra.mxu0 %v531
  %803 = vmatprep.subr.bf16.mxu0 %v539
  %804 = vmatpush1.bf16.msra.mxu0 %v538
  %805 = vmatprep.subr.bf16.mxu0 %v546
  %806 = vmatpush1.bf16.msra.mxu0 %v545
  %807 = vmatprep.subr.bf16.mxu0 %v553
  %808 = vmatpush1.bf16.msra.mxu0 %v552
  %809 = vmatprep.subr.bf16.mxu0 %v560
  %810 = vmatpush1.bf16.msra.mxu0 %v559
  %811 = vmatprep.subr.bf16.mxu0 %v567
  %812 = vmatpush1.bf16.msra.mxu0 %v566
  %813 = vmatprep.subr.bf16.mxu0 %v574
  %814 = vmatpush1.bf16.msra.mxu0 %v573
  %815 = vmatprep.subr.bf16.mxu0 %v581
  %816 = vmatpush1.bf16.msra.mxu0 %v580
  %817 = vmatprep.subr.bf16.mxu0 %v588
  %818 = vmatpush1.bf16.msra.mxu0 %v587
  %819 = vmatprep.subr.bf16.mxu0 %v595
  %820 = vmatpush1.bf16.msra.mxu0 %v594
  %821 = vmatprep.subr.bf16.mxu0 %v602
  %822 = vmatpush1.bf16.msra.mxu0 %v601
  %823 = vmatprep.subr.bf16.mxu0 %v609
  %824 = vmatpush1.bf16.msra.mxu0 %v608
  %825 = vmatprep.subr.bf16.mxu0 %v616
  %826 = vmatpush1.bf16.msra.mxu0 %v615
  %827 = vmatprep.subr.bf16.mxu0 %v623
  %828 = vmatpush1.bf16.msra.mxu0 %v622
  %829 = vmatprep.subr.bf16.mxu0 %v630
  %830 = vmatpush1.bf16.msra.mxu0 %v629
  %831 = vmatprep.mubr.bf16.mxu0 %v163
  %832 = vmatmul.mubr.bf16.gmra.mrb[0].mxu0 %v162
  %v833 = vpop.f32.mrb[0].mxu0
  %v834 = vadd.f32 0.0, %v833
  %v835 = vpop.f32.mrb[0].mxu0
  %v836 = vadd.f32 0.0, %v835
  %v837 = vpop.f32.mrb[0].mxu0
  %v838 = vadd.f32 0.0, %v837
  %v839 = vpop.f32.mrb[0].mxu0
  %v840 = vadd.f32 0.0, %v839
  %841 = vmatprep.mubr.bf16.mxu0 %v165
  %842 = vmatmul.mubr.bf16.gmra.mrb[0].mxu0 %v164
  %v843 = vpop.f32.mrb[0].mxu0
  %v844 = vadd.f32 0.0, %v843
  %v845 = vpop.f32.mrb[0].mxu0
  %v846 = vadd.f32 0.0, %v845
  %v847 = vpop.f32.mrb[0].mxu0
  %v848 = vadd.f32 0.0, %v847
  %v849 = vpop.f32.mrb[0].mxu0
  %v850 = vadd.f32 0.0, %v849
  %851 = vdwg.mxu0
  %852 = vmatprep.subr.bf16.mxu0 %v527
  %853 = vmatpush1.bf16.msra.mxu0 %v526
  %854 = vmatprep.subr.bf16.mxu0 %v534
  %855 = vmatpush1.bf16.msra.mxu0 %v533
  %856 = vmatprep.subr.bf16.mxu0 %v541
  %857 = vmatpush1.bf16.msra.mxu0 %v540
  %858 = vmatprep.subr.bf16.mxu0 %v548
  %859 = vmatpush1.bf16.msra.mxu0 %v547
  %860 = vmatprep.subr.bf16.mxu0 %v555
  %861 = vmatpush1.bf16.msra.mxu0 %v554
  %862 = vmatprep.subr.bf16.mxu0 %v562
  %863 = vmatpush1.bf16.msra.mxu0 %v561
  %864 = vmatprep.subr.bf16.mxu0 %v569
  %865 = vmatpush1.bf16.msra.mxu0 %v568
  %866 = vmatprep.subr.bf16.mxu0 %v576
  %867 = vmatpush1.bf16.msra.mxu0 %v575
  %868 = vmatprep.subr.bf16.mxu0 %v583
  %869 = vmatpush1.bf16.msra.mxu0 %v582
  %870 = vmatprep.subr.bf16.mxu0 %v590
  %871 = vmatpush1.bf16.msra.mxu0 %v589
  %872 = vmatprep.subr.bf16.mxu0 %v597
  %873 = vmatpush1.bf16.msra.mxu0 %v596
  %874 = vmatprep.subr.bf16.mxu0 %v604
  %875 = vmatpush1.bf16.msra.mxu0 %v603
  %876 = vmatprep.subr.bf16.mxu0 %v611
  %877 = vmatpush1.bf16.msra.mxu0 %v610
  %878 = vmatprep.subr.bf16.mxu0 %v618
  %879 = vmatpush1.bf16.msra.mxu0 %v617
  %880 = vmatprep.subr.bf16.mxu0 %v625
  %881 = vmatpush1.bf16.msra.mxu0 %v624
  %882 = vmatprep.subr.bf16.mxu0 %v632
  %883 = vmatpush1.bf16.msra.mxu0 %v631
  %884 = vmatprep.mubr.bf16.mxu0 %v163
  %885 = vmatmul.mubr.bf16.gmra.mrb[0].mxu0 %v162
  %v886 = vpop.f32.mrb[0].mxu0
  %v887 = vadd.f32 0.0, %v886
  %v888 = vpop.f32.mrb[0].mxu0
  %v889 = vadd.f32 0.0, %v888
  %v890 = vpop.f32.mrb[0].mxu0
  %v891 = vadd.f32 0.0, %v890
  %v892 = vpop.f32.mrb[0].mxu0
  %v893 = vadd.f32 0.0, %v892
  %894 = vmatprep.mubr.bf16.mxu0 %v165
  %895 = vmatmul.mubr.bf16.gmra.mrb[0].mxu0 %v164
  %v896 = vpop.f32.mrb[0].mxu0
  %v897 = vadd.f32 0.0, %v896
  %v898 = vpop.f32.mrb[0].mxu0
  %v899 = vadd.f32 0.0, %v898
  %v900 = vpop.f32.mrb[0].mxu0
  %v901 = vadd.f32 0.0, %v900
  %v902 = vpop.f32.mrb[0].mxu0
  %v903 = vadd.f32 0.0, %v902
  %904 = vdwg.mxu0
  %905 = vmatprep.subr.bf16.mxu0 0
  %906 = vmatpush1.bf16.msra.mxu0 %v528
  %907 = vmatprep.subr.bf16.mxu0 0
  %908 = vmatpush1.bf16.msra.mxu0 %v535
  %909 = vmatprep.subr.bf16.mxu0 0
  %910 = vmatpush1.bf16.msra.mxu0 %v542
  %911 = vmatprep.subr.bf16.mxu0 0
  %912 = vmatpush1.bf16.msra.mxu0 %v549
  %913 = vmatprep.subr.bf16.mxu0 0
  %914 = vmatpush1.bf16.msra.mxu0 %v556
  %915 = vmatprep.subr.bf16.mxu0 0
  %916 = vmatpush1.bf16.msra.mxu0 %v563
  %917 = vmatprep.subr.bf16.mxu0 0
  %918 = vmatpush1.bf16.msra.mxu0 %v570
  %919 = vmatprep.subr.bf16.mxu0 0
  %920 = vmatpush1.bf16.msra.mxu0 %v577
  %921 = vmatprep.subr.bf16.mxu0 0
  %922 = vmatpush1.bf16.msra.mxu0 %v584
  %923 = vmatprep.subr.bf16.mxu0 0
  %924 = vmatpush1.bf16.msra.mxu0 %v591
  %925 = vmatprep.subr.bf16.mxu0 0
  %926 = vmatpush1.bf16.msra.mxu0 %v598
  %927 = vmatprep.subr.bf16.mxu0 0
  %928 = vmatpush1.bf16.msra.mxu0 %v605
  %929 = vmatprep.subr.bf16.mxu0 0
  %930 = vmatpush1.bf16.msra.mxu0 %v612
  %931 = vmatprep.subr.bf16.mxu0 0
  %932 = vmatpush1.bf16.msra.mxu0 %v619
  %933 = vmatprep.subr.bf16.mxu0 0
  %934 = vmatpush1.bf16.msra.mxu0 %v626
  %935 = vmatprep.subr.bf16.mxu0 0
  %936 = vmatpush1.bf16.msra.mxu0 %v633
  %937 = vmatprep.mubr.bf16.mxu0 %v163
  %938 = vmatmul.mubr.bf16.gmra.mrb[0].mxu0 %v162
  %v939 = vpop.f32.mrb[0].mxu0
  %v940 = vadd.f32 0.0, %v939
  %v941 = vpop.f32.mrb[0].mxu0
  %v942 = vpop.f32.mrb[0].mxu0
  %v943 = vadd.f32 0.0, %v942
  %v944 = vpop.f32.mrb[0].mxu0
  %945 = vmatprep.mubr.bf16.mxu0 %v165
  %946 = vmatmul.mubr.bf16.gmra.mrb[0].mxu0 %v164
  %v947 = vpop.f32.mrb[0].mxu0
  %v948 = vadd.f32 0.0, %v947
  %v949 = vpop.f32.mrb[0].mxu0
  %v950 = vpop.f32.mrb[0].mxu0
  %v951 = vadd.f32 0.0, %v950
  %v952 = vpop.f32.mrb[0].mxu0
  %953 = vdwg.mxu0
  %v954 = vld [vmem:[%s2] sm:$0xff]
  %v955 = vld [vmem:[%s2 + $0x8] sm:$0xff]
  %v956 = vld [vmem:[%s2 + $0x10] sm:$0xff]
  %v957 = vld [vmem:[%s2 + $0x18] sm:$0xff]
  %959 = vset.pattern.permute.xlu0 0
  %960 = vperm.xlu0 %959, %v954
  %v961 = vpop.permute.xlu0 %960
  %964 = vset.pattern.permute.xlu0 0
  %965 = vperm.xlu0 %964, %v955
  %v966 = vpop.permute.xlu0 %965
  %969 = vset.pattern.permute.xlu0 0
  %970 = vperm.xlu0 %969, %v956
  %v971 = vpop.permute.xlu0 %970
  %974 = vset.pattern.permute.xlu0 0
  %975 = vperm.xlu0 %974, %v957
  %v976 = vpop.permute.xlu0 %975
  %v978 = vmul.f32 %v781, %v961
  %v979 = vmul.f32 %v783, %v961
  %v980 = vmul.f32 %v834, %v961
  %v981 = vmul.f32 %v836, %v961
  %v982 = vmul.f32 %v887, %v961
  %v983 = vmul.f32 %v889, %v961
  %v984 = vmul.f32 %v940, %v961
  %v985 = vmul.f32 %v785, %v966
  %v986 = vmul.f32 %v787, %v966
  %v987 = vmul.f32 %v838, %v966
  %v988 = vmul.f32 %v840, %v966
  %v989 = vmul.f32 %v891, %v966
  %v990 = vmul.f32 %v893, %v966
  %v991 = vmul.f32 %v943, %v966
  %v992 = vmul.f32 %v791, %v971
  %v993 = vmul.f32 %v793, %v971
  %v994 = vmul.f32 %v844, %v971
  %v995 = vmul.f32 %v846, %v971
  %v996 = vmul.f32 %v897, %v971
  %v997 = vmul.f32 %v899, %v971
  %v998 = vmul.f32 %v948, %v971
  %v999 = vmul.f32 %v795, %v976
  %v1000 = vmul.f32 %v797, %v976
  %v1001 = vmul.f32 %v848, %v976
  %v1002 = vmul.f32 %v850, %v976
  %v1003 = vmul.f32 %v901, %v976
  %v1004 = vmul.f32 %v903, %v976
  %v1005 = vmul.f32 %v951, %v976
  %v1006 = vld [vmem:[%s3] sm:$0xff]
  %v1007 = vld [vmem:[%s3 + $0x8] sm:$0xff]
  %v1008 = vld [vmem:[%s3 + $0x10] sm:$0xff]
  %v1009 = vld [vmem:[%s3 + $0x18] sm:$0xff]
  %1011 = vset.pattern.permute.xlu0 0
  %1012 = vperm.xlu0 %1011, %v1006
  %v1013 = vpop.permute.xlu0 %1012
  %1016 = vset.pattern.permute.xlu0 0
  %1017 = vperm.xlu0 %1016, %v1007
  %v1018 = vpop.permute.xlu0 %1017
  %1021 = vset.pattern.permute.xlu0 0
  %1022 = vperm.xlu0 %1021, %v1008
  %v1023 = vpop.permute.xlu0 %1022
  %1026 = vset.pattern.permute.xlu0 0
  %1027 = vperm.xlu0 %1026, %v1009
  %v1028 = vpop.permute.xlu0 %1027
  %v1030 = vadd.f32 %v978, %v1013
  %v1031 = vadd.f32 %v979, %v1013
  %v1032 = vadd.f32 %v980, %v1013
  %v1033 = vadd.f32 %v981, %v1013
  %v1034 = vadd.f32 %v982, %v1013
  %v1035 = vadd.f32 %v983, %v1013
  %v1036 = vadd.f32 %v984, %v1013
  %v1037 = vadd.f32 %v985, %v1018
  %v1038 = vadd.f32 %v986, %v1018
  %v1039 = vadd.f32 %v987, %v1018
  %v1040 = vadd.f32 %v988, %v1018
  %v1041 = vadd.f32 %v989, %v1018
  %v1042 = vadd.f32 %v990, %v1018
  %v1043 = vadd.f32 %v991, %v1018
  %v1044 = vadd.f32 %v992, %v1023
  %v1045 = vadd.f32 %v993, %v1023
  %v1046 = vadd.f32 %v994, %v1023
  %v1047 = vadd.f32 %v995, %v1023
  %v1048 = vadd.f32 %v996, %v1023
  %v1049 = vadd.f32 %v997, %v1023
  %v1050 = vadd.f32 %v998, %v1023
  %v1051 = vadd.f32 %v999, %v1028
  %v1052 = vadd.f32 %v1000, %v1028
  %v1053 = vadd.f32 %v1001, %v1028
  %v1054 = vadd.f32 %v1002, %v1028
  %v1055 = vadd.f32 %v1003, %v1028
  %v1056 = vadd.f32 %v1004, %v1028
  %v1057 = vadd.f32 %v1005, %v1028
  %v1058 = vmax.f32 %v1030, 0.0
  %v1059 = vmax.f32 %v1031, 0.0
  %v1060 = vmax.f32 %v1032, 0.0
  %v1061 = vmax.f32 %v1033, 0.0
  %v1062 = vmax.f32 %v1034, 0.0
  %v1063 = vmax.f32 %v1035, 0.0
  %v1064 = vmax.f32 %v1036, 0.0
  %v1065 = vmax.f32 %v1037, 0.0
  %v1066 = vmax.f32 %v1038, 0.0
  %v1067 = vmax.f32 %v1039, 0.0
  %v1068 = vmax.f32 %v1040, 0.0
  %v1069 = vmax.f32 %v1041, 0.0
  %v1070 = vmax.f32 %v1042, 0.0
  %v1071 = vmax.f32 %v1043, 0.0
  %v1072 = vmax.f32 %v1044, 0.0
  %v1073 = vmax.f32 %v1045, 0.0
  %v1074 = vmax.f32 %v1046, 0.0
  %v1075 = vmax.f32 %v1047, 0.0
  %v1076 = vmax.f32 %v1048, 0.0
  %v1077 = vmax.f32 %v1049, 0.0
  %v1078 = vmax.f32 %v1050, 0.0
  %v1079 = vmax.f32 %v1051, 0.0
  %v1080 = vmax.f32 %v1052, 0.0
  %v1081 = vmax.f32 %v1053, 0.0
  %v1082 = vmax.f32 %v1054, 0.0
  %v1083 = vmax.f32 %v1055, 0.0
  %v1084 = vmax.f32 %v1056, 0.0
  %v1085 = vmax.f32 %v1057, 0.0
  %v1086 = vpack.c.bf16 %v1065, %v1058
  %v1087 = vpack.c.bf16 %v1066, %v1059
  %v1088 = vpack.c.bf16 %v1067, %v1060
  %v1089 = vpack.c.bf16 %v1068, %v1061
  %v1090 = vpack.c.bf16 %v1069, %v1062
  %v1091 = vpack.c.bf16 %v1070, %v1063
  %v1092 = vpack.c.bf16 %v1071, %v1064
  %v1093 = vpack.c.bf16 %v1079, %v1072
  %v1094 = vpack.c.bf16 %v1080, %v1073
  %v1095 = vpack.c.bf16 %v1081, %v1074
  %v1096 = vpack.c.bf16 %v1082, %v1075
  %v1097 = vpack.c.bf16 %v1083, %v1076
  %v1098 = vpack.c.bf16 %v1084, %v1077
  %v1099 = vpack.c.bf16 %v1085, %v1078
  %v1114 = vunpack.c.l.b16 %v1086
  %v1115 = vunpack.c.l.b16 %v1087
  %v1116 = vunpack.c.l.b16 %v1088
  %v1117 = vunpack.c.l.b16 %v1089
  %v1118 = vunpack.c.l.b16 %v1090
  %v1119 = vunpack.c.l.b16 %v1091
  %v1120 = vunpack.c.l.b16 %v1092
  %v1121 = vunpack.c.h.b16 %v1086
  %v1122 = vunpack.c.h.b16 %v1087
  %v1123 = vunpack.c.h.b16 %v1088
  %v1124 = vunpack.c.h.b16 %v1089
  %v1125 = vunpack.c.h.b16 %v1090
  %v1126 = vunpack.c.h.b16 %v1091
  %v1127 = vunpack.c.h.b16 %v1092
  %v1128 = vunpack.c.l.b16 %v1093
  %v1129 = vunpack.c.l.b16 %v1094
  %v1130 = vunpack.c.l.b16 %v1095
  %v1131 = vunpack.c.l.b16 %v1096
  %v1132 = vunpack.c.l.b16 %v1097
  %v1133 = vunpack.c.l.b16 %v1098
  %v1134 = vunpack.c.l.b16 %v1099
  %v1135 = vunpack.c.h.b16 %v1093
  %v1136 = vunpack.c.h.b16 %v1094
  %v1137 = vunpack.c.h.b16 %v1095
  %v1138 = vunpack.c.h.b16 %v1096
  %v1139 = vunpack.c.h.b16 %v1097
  %v1140 = vunpack.c.h.b16 %v1098
  %v1141 = vunpack.c.h.b16 %v1099
  %v1142 = vpack.c.b16 %v1115, %v1114
  %v1143 = vpack.c.b16 %v1117, %v1116
  %v1144 = vpack.c.b16 %v1119, %v1118
  %v1145 = vpack.c.b16 %v1120, %v1120
  %v1146 = vpack.c.b16 %v1122, %v1121
  %v1147 = vpack.c.b16 %v1124, %v1123
  %v1148 = vpack.c.b16 %v1126, %v1125
  %v1149 = vpack.c.b16 %v1127, %v1127
  %v1150 = vpack.c.b16 %v1129, %v1128
  %v1151 = vpack.c.b16 %v1131, %v1130
  %v1152 = vpack.c.b16 %v1133, %v1132
  %v1153 = vpack.c.b16 %v1134, %v1134
  %v1154 = vpack.c.b16 %v1136, %v1135
  %v1155 = vpack.c.b16 %v1138, %v1137
  %v1156 = vpack.c.b16 %v1140, %v1139
  %v1157 = vpack.c.b16 %v1141, %v1141
  %1174 = vst [vmem:[%s4] sm:$0xff] %v1142
  %1175 = vst [vmem:[%s4 + $0x8] sm:$0xff] %v1143
  %1176 = vst [vmem:[%s4 + $0x10] sm:$0xff] %v1144
  %vm1177 = vcmask 257024
  %1178 = vst.msk [vmem:[%s4 + $0x18] sm:$0xf] %vm1177, %v1145
  %1179 = vst [vmem:[%s4 + $0x1c] sm:$0xff] %v1146
  %1180 = vst [vmem:[%s4 + $0x24] sm:$0xff] %v1147
  %1181 = vst [vmem:[%s4 + $0x2c] sm:$0xff] %v1148
  %1182 = vst.msk [vmem:[%s4 + $0x34] sm:$0xf] %vm1177, %v1149
  %1183 = vst [vmem:[%s4 + $0x38] sm:$0xff] %v1150
  %1184 = vst [vmem:[%s4 + $0x40] sm:$0xff] %v1151
  %1185 = vst [vmem:[%s4 + $0x48] sm:$0xff] %v1152
  %1186 = vst.msk [vmem:[%s4 + $0x50] sm:$0xf] %vm1177, %v1153
  %1187 = vst [vmem:[%s4 + $0x54] sm:$0xff] %v1154
  %1188 = vst [vmem:[%s4 + $0x5c] sm:$0xff] %v1155
  %1189 = vst [vmem:[%s4 + $0x64] sm:$0xff] %v1156
  %1190 = vst.msk [vmem:[%s4 + $0x6c] sm:$0xf] %vm1177, %v1157
  // Predicated region
  $region18: #{nn_forward.4} parent=0 // pred_check
    _
  $region19: #{nn_forward.4} parent=0 // pred_check_branch
    %1192 = sbr.rel (0) target = $region21
  $region20: #{nn_forward.4} parent=0 // pred_region
    _
  $region21: #{nn_forward.4} parent=0 // pred_fallthru
    _
  // Predicated region
  $region22: #{nn_forward.4} parent=0 // pred_check
    _
  $region23: #{nn_forward.4} parent=0 // pred_check_branch
    %1194 = sbr.rel (0) target = $region25
  $region24: #{nn_forward.4} parent=0 // pred_region
    _
  $region25: #{nn_forward.4} parent=0 // pred_fallthru
    _

// kernel: nn_forward.5
$region0: #{nn_forward.5}
  #allocation0 [shape = 'u32[]', space=smem, size = 0x4, offset = 0x4, fixed_abs, tag = 'smem constant byte address 0x4 - core index']
  #allocation1 [shape = 'u32[144,128]{1,0:T(1,128)}', space=vmem, size = 0x12000, scoped, tag = 'internal scratch']
  %s0 = inlined_call_operand.vmem [shape: bf16[64,512], index: 0, kind: input, shape index: {}]
  %s1 = inlined_call_operand.vmem [shape: bf16[512,162], index: 1, kind: input, shape index: {}]
  %s2 = inlined_call_operand.vmem [shape: f32[64,1], index: 2, kind: input, shape index: {}]
  %s3 = inlined_call_operand.vmem [shape: f32[64,1], index: 3, kind: input, shape index: {}]
  %s4 = inlined_call_operand.vmem [shape: bf16[64,162], index: 4, kind: output, shape index: {}]
  %s5 = sld [smem:[#allocation0]]
  $region26: #{nn_forward.5} parent=0
    _
  %s7 = ssub.s32 1, %s5
  %s8 = scalar_select 0, %s7, %s5
  // Predicated region
  $region2: #{nn_forward.5} parent=0 // pred_check
    _
  $region3: #{nn_forward.5} parent=0 // pred_check_branch
    %10 = sbr.rel (0) target = $region5
  $region4: #{nn_forward.5} parent=0 // pred_region
    _
  $region5: #{nn_forward.5} parent=0 // pred_fallthru
    _
  // Predicated region
  $region6: #{nn_forward.5} parent=0 // pred_check
    _
  $region7: #{nn_forward.5} parent=0 // pred_check_branch
    %12 = sbr.rel (0) target = $region9
  $region8: #{nn_forward.5} parent=0 // pred_region
    _
  $region9: #{nn_forward.5} parent=0 // pred_fallthru
    _
  // Predicated region
  $region10: #{nn_forward.5} parent=0 // pred_check
    _
  $region11: #{nn_forward.5} parent=0 // pred_check_branch
    %14 = sbr.rel (0) target = $region13
  $region12: #{nn_forward.5} parent=0 // pred_region
    _
  $region13: #{nn_forward.5} parent=0 // pred_fallthru
    _
  // Predicated region
  $region14: #{nn_forward.5} parent=0 // pred_check
    _
  $region15: #{nn_forward.5} parent=0 // pred_check_branch
    %16 = sbr.rel (0) target = $region17
  $region16: #{nn_forward.5} parent=0 // pred_region
    _
  $region17: #{nn_forward.5} parent=0 // pred_fallthru
    _
  %v17 = vld [vmem:[%s0] sm:$0xff]
  %v18 = vld [vmem:[%s0 + $0x8] sm:$0xff]
  %v19 = vld [vmem:[%s0 + $0x10] sm:$0xff]
  %v20 = vld [vmem:[%s0 + $0x18] sm:$0xff]
  %v21 = vld [vmem:[%s0 + $0x20] sm:$0xff]
  %v22 = vld [vmem:[%s0 + $0x28] sm:$0xff]
  %v23 = vld [vmem:[%s0 + $0x30] sm:$0xff]
  %v24 = vld [vmem:[%s0 + $0x38] sm:$0xff]
  %v25 = vld [vmem:[%s0 + $0x40] sm:$0xff]
  %v26 = vld [vmem:[%s0 + $0x48] sm:$0xff]
  %v27 = vld [vmem:[%s0 + $0x50] sm:$0xff]
  %v28 = vld [vmem:[%s0 + $0x58] sm:$0xff]
  %v29 = vld [vmem:[%s0 + $0x60] sm:$0xff]
  %v30 = vld [vmem:[%s0 + $0x68] sm:$0xff]
  %v31 = vld [vmem:[%s0 + $0x70] sm:$0xff]
  %v32 = vld [vmem:[%s0 + $0x78] sm:$0xff]
  %v33 = vld [vmem:[%s1] sm:$0xff]
  %v34 = vld [vmem:[%s1 + $0x8] sm:$0xff]
  %v35 = vld [vmem:[%s1 + $0x10] sm:$0xff]
  %v36 = vld [vmem:[%s1 + $0x18] sm:$0xff]
  %v37 = vld [vmem:[%s1 + $0x20] sm:$0xff]
  %v38 = vld [vmem:[%s1 + $0x28] sm:$0xff]
  %v39 = vld [vmem:[%s1 + $0x30] sm:$0xff]
  %v40 = vld [vmem:[%s1 + $0x38] sm:$0xff]
  %v41 = vld [vmem:[%s1 + $0x40] sm:$0xff]
  %v42 = vld [vmem:[%s1 + $0x48] sm:$0xff]
  %v43 = vld [vmem:[%s1 + $0x50] sm:$0xff]
  %v44 = vld [vmem:[%s1 + $0x58] sm:$0xff]
  %v45 = vld [vmem:[%s1 + $0x60] sm:$0xff]
  %v46 = vld [vmem:[%s1 + $0x68] sm:$0xff]
  %v47 = vld [vmem:[%s1 + $0x70] sm:$0xff]
  %v48 = vld [vmem:[%s1 + $0x78] sm:$0xff]
  %v49 = vld [vmem:[%s1 + $0x80] sm:$0xff]
  %v50 = vld [vmem:[%s1 + $0x88] sm:$0xff]
  %v51 = vld [vmem:[%s1 + $0x90] sm:$0xff]
  %v52 = vld [vmem:[%s1 + $0x98] sm:$0xff]
  %v53 = vld [vmem:[%s1 + $0xa0] sm:$0xff]
  %v54 = vld [vmem:[%s1 + $0xa8] sm:$0xff]
  %v55 = vld [vmem:[%s1 + $0xb0] sm:$0xff]
  %v56 = vld [vmem:[%s1 + $0xb8] sm:$0xff]
  %v57 = vld [vmem:[%s1 + $0xc0] sm:$0xff]
  %v58 = vld [vmem:[%s1 + $0xc8] sm:$0xff]
  %v59 = vld [vmem:[%s1 + $0xd0] sm:$0xff]
  %v60 = vld [vmem:[%s1 + $0xd8] sm:$0xff]
  %v61 = vld [vmem:[%s1 + $0xe0] sm:$0xff]
  %v62 = vld [vmem:[%s1 + $0xe8] sm:$0xff]
  %v63 = vld [vmem:[%s1 + $0xf0] sm:$0xff]
  %v64 = vld [vmem:[%s1 + $0xf8] sm:$0xff]
  %v65 = vld [vmem:[%s1 + $0x100] sm:$0xff]
  %v66 = vld [vmem:[%s1 + $0x108] sm:$0xff]
  %v67 = vld [vmem:[%s1 + $0x110] sm:$0xff]
  %v68 = vld [vmem:[%s1 + $0x118] sm:$0xff]
  %v69 = vld [vmem:[%s1 + $0x120] sm:$0xff]
  %v70 = vld [vmem:[%s1 + $0x128] sm:$0xff]
  %v71 = vld [vmem:[%s1 + $0x130] sm:$0xff]
  %v72 = vld [vmem:[%s1 + $0x138] sm:$0xff]
  %v73 = vld [vmem:[%s1 + $0x140] sm:$0xff]
  %v74 = vld [vmem:[%s1 + $0x148] sm:$0xff]
  %v75 = vld [vmem:[%s1 + $0x150] sm:$0xff]
  %v76 = vld [vmem:[%s1 + $0x158] sm:$0xff]
  %v77 = vld [vmem:[%s1 + $0x160] sm:$0xff]
  %v78 = vld [vmem:[%s1 + $0x168] sm:$0xff]
  %v79 = vld [vmem:[%s1 + $0x170] sm:$0xff]
  %v80 = vld [vmem:[%s1 + $0x178] sm:$0xff]
  %v81 = vld [vmem:[%s1 + $0x180] sm:$0xff]
  %v82 = vld [vmem:[%s1 + $0x188] sm:$0xff]
  %v83 = vld [vmem:[%s1 + $0x190] sm:$0xff]
  %v84 = vld [vmem:[%s1 + $0x198] sm:$0xff]
  %v85 = vld [vmem:[%s1 + $0x1a0] sm:$0xff]
  %v86 = vld [vmem:[%s1 + $0x1a8] sm:$0xff]
  %v87 = vld [vmem:[%s1 + $0x1b0] sm:$0xff]
  %v88 = vld [vmem:[%s1 + $0x1b8] sm:$0xff]
  %v89 = vld [vmem:[%s1 + $0x1c0] sm:$0xff]
  %v90 = vld [vmem:[%s1 + $0x1c8] sm:$0xff]
  %v91 = vld [vmem:[%s1 + $0x1d0] sm:$0xff]
  %v92 = vld [vmem:[%s1 + $0x1d8] sm:$0xff]
  %v93 = vld [vmem:[%s1 + $0x1e0] sm:$0xff]
  %v94 = vld [vmem:[%s1 + $0x1e8] sm:$0xff]
  %v95 = vld [vmem:[%s1 + $0x1f0] sm:$0xff]
  %v96 = vld [vmem:[%s1 + $0x1f8] sm:$0xff]
  %v113 = vunpack.c.l.b16 %v17
  %v114 = vunpack.c.h.b16 %v17
  %v115 = vunpack.c.l.b16 %v18
  %v116 = vunpack.c.h.b16 %v18
  %v117 = vunpack.c.l.b16 %v19
  %v118 = vunpack.c.h.b16 %v19
  %v119 = vunpack.c.l.b16 %v20
  %v120 = vunpack.c.h.b16 %v20
  %v121 = vunpack.c.l.b16 %v21
  %v122 = vunpack.c.h.b16 %v21
  %v123 = vunpack.c.l.b16 %v22
  %v124 = vunpack.c.h.b16 %v22
  %v125 = vunpack.c.l.b16 %v23
  %v126 = vunpack.c.h.b16 %v23
  %v127 = vunpack.c.l.b16 %v24
  %v128 = vunpack.c.h.b16 %v24
  %v129 = vunpack.c.l.b16 %v25
  %v130 = vunpack.c.h.b16 %v25
  %v131 = vunpack.c.l.b16 %v26
  %v132 = vunpack.c.h.b16 %v26
  %v133 = vunpack.c.l.b16 %v27
  %v134 = vunpack.c.h.b16 %v27
  %v135 = vunpack.c.l.b16 %v28
  %v136 = vunpack.c.h.b16 %v28
  %v137 = vunpack.c.l.b16 %v29
  %v138 = vunpack.c.h.b16 %v29
  %v139 = vunpack.c.l.b16 %v30
  %v140 = vunpack.c.h.b16 %v30
  %v141 = vunpack.c.l.b16 %v31
  %v142 = vunpack.c.h.b16 %v31
  %v143 = vunpack.c.l.b16 %v32
  %v144 = vunpack.c.h.b16 %v32
  %v145 = vpack.c.b16 %v117, %v113
  %v146 = vpack.c.b16 %v118, %v114
  %v147 = vpack.c.b16 %v119, %v115
  %v148 = vpack.c.b16 %v120, %v116
  %v149 = vpack.c.b16 %v125, %v121
  %v150 = vpack.c.b16 %v126, %v122
  %v151 = vpack.c.b16 %v127, %v123
  %v152 = vpack.c.b16 %v128, %v124
  %v153 = vpack.c.b16 %v133, %v129
  %v154 = vpack.c.b16 %v134, %v130
  %v155 = vpack.c.b16 %v135, %v131
  %v156 = vpack.c.b16 %v136, %v132
  %v157 = vpack.c.b16 %v141, %v137
  %v158 = vpack.c.b16 %v142, %v138
  %v159 = vpack.c.b16 %v143, %v139
  %v160 = vpack.c.b16 %v144, %v140
  %v241 = vunpack.c.l.b16 %v33
  %v242 = vunpack.c.h.b16 %v33
  %v243 = vunpack.c.l.b16 %v34
  %v244 = vunpack.c.h.b16 %v34
  %v245 = vunpack.c.l.b16 %v35
  %v246 = vunpack.c.h.b16 %v35
  %v247 = vunpack.c.l.b16 %v36
  %v248 = vunpack.c.h.b16 %v36
  %v249 = vunpack.c.l.b16 %v37
  %v250 = vunpack.c.h.b16 %v37
  %v251 = vunpack.c.l.b16 %v38
  %v252 = vunpack.c.h.b16 %v38
  %v253 = vunpack.c.l.b16 %v39
  %v254 = vunpack.c.h.b16 %v39
  %v255 = vunpack.c.l.b16 %v40
  %v256 = vunpack.c.h.b16 %v40
  %v257 = vunpack.c.l.b16 %v41
  %v258 = vunpack.c.h.b16 %v41
  %v259 = vunpack.c.l.b16 %v42
  %v260 = vunpack.c.h.b16 %v42
  %v261 = vunpack.c.l.b16 %v43
  %v262 = vunpack.c.h.b16 %v43
  %v263 = vunpack.c.l.b16 %v44
  %v264 = vunpack.c.h.b16 %v44
  %v265 = vunpack.c.l.b16 %v45
  %v266 = vunpack.c.h.b16 %v45
  %v267 = vunpack.c.l.b16 %v46
  %v268 = vunpack.c.h.b16 %v46
  %v269 = vunpack.c.l.b16 %v47
  %v270 = vunpack.c.h.b16 %v47
  %v271 = vunpack.c.l.b16 %v48
  %v272 = vunpack.c.h.b16 %v48
  %v273 = vunpack.c.l.b16 %v49
  %v274 = vunpack.c.h.b16 %v49
  %v275 = vunpack.c.l.b16 %v50
  %v276 = vunpack.c.h.b16 %v50
  %v277 = vunpack.c.l.b16 %v51
  %v278 = vunpack.c.h.b16 %v51
  %v279 = vunpack.c.l.b16 %v52
  %v280 = vunpack.c.h.b16 %v52
  %v281 = vunpack.c.l.b16 %v53
  %v282 = vunpack.c.h.b16 %v53
  %v283 = vunpack.c.l.b16 %v54
  %v284 = vunpack.c.h.b16 %v54
  %v285 = vunpack.c.l.b16 %v55
  %v286 = vunpack.c.h.b16 %v55
  %v287 = vunpack.c.l.b16 %v56
  %v288 = vunpack.c.h.b16 %v56
  %v289 = vunpack.c.l.b16 %v57
  %v290 = vunpack.c.h.b16 %v57
  %v291 = vunpack.c.l.b16 %v58
  %v292 = vunpack.c.h.b16 %v58
  %v293 = vunpack.c.l.b16 %v59
  %v294 = vunpack.c.h.b16 %v59
  %v295 = vunpack.c.l.b16 %v60
  %v296 = vunpack.c.h.b16 %v60
  %v297 = vunpack.c.l.b16 %v61
  %v298 = vunpack.c.h.b16 %v61
  %v299 = vunpack.c.l.b16 %v62
  %v300 = vunpack.c.h.b16 %v62
  %v301 = vunpack.c.l.b16 %v63
  %v302 = vunpack.c.h.b16 %v63
  %v303 = vunpack.c.l.b16 %v64
  %v304 = vunpack.c.h.b16 %v64
  %v305 = vunpack.c.l.b16 %v65
  %v306 = vunpack.c.h.b16 %v65
  %v307 = vunpack.c.l.b16 %v66
  %v308 = vunpack.c.h.b16 %v66
  %v309 = vunpack.c.l.b16 %v67
  %v310 = vunpack.c.h.b16 %v67
  %v311 = vunpack.c.l.b16 %v68
  %v312 = vunpack.c.h.b16 %v68
  %v313 = vunpack.c.l.b16 %v69
  %v314 = vunpack.c.h.b16 %v69
  %v315 = vunpack.c.l.b16 %v70
  %v316 = vunpack.c.h.b16 %v70
  %v317 = vunpack.c.l.b16 %v71
  %v318 = vunpack.c.h.b16 %v71
  %v319 = vunpack.c.l.b16 %v72
  %v320 = vunpack.c.h.b16 %v72
  %v321 = vunpack.c.l.b16 %v73
  %v322 = vunpack.c.h.b16 %v73
  %v323 = vunpack.c.l.b16 %v74
  %v324 = vunpack.c.h.b16 %v74
  %v325 = vunpack.c.l.b16 %v75
  %v326 = vunpack.c.h.b16 %v75
  %v327 = vunpack.c.l.b16 %v76
  %v328 = vunpack.c.h.b16 %v76
  %v329 = vunpack.c.l.b16 %v77
  %v330 = vunpack.c.h.b16 %v77
  %v331 = vunpack.c.l.b16 %v78
  %v332 = vunpack.c.h.b16 %v78
  %v333 = vunpack.c.l.b16 %v79
  %v334 = vunpack.c.h.b16 %v79
  %v335 = vunpack.c.l.b16 %v80
  %v336 = vunpack.c.h.b16 %v80
  %v337 = vunpack.c.l.b16 %v81
  %v338 = vunpack.c.h.b16 %v81
  %v339 = vunpack.c.l.b16 %v82
  %v340 = vunpack.c.h.b16 %v82
  %v341 = vunpack.c.l.b16 %v83
  %v342 = vunpack.c.h.b16 %v83
  %v343 = vunpack.c.l.b16 %v84
  %v344 = vunpack.c.h.b16 %v84
  %v345 = vunpack.c.l.b16 %v85
  %v346 = vunpack.c.h.b16 %v85
  %v347 = vunpack.c.l.b16 %v86
  %v348 = vunpack.c.h.b16 %v86
  %v349 = vunpack.c.l.b16 %v87
  %v350 = vunpack.c.h.b16 %v87
  %v351 = vunpack.c.l.b16 %v88
  %v352 = vunpack.c.h.b16 %v88
  %v353 = vunpack.c.l.b16 %v89
  %v354 = vunpack.c.h.b16 %v89
  %v355 = vunpack.c.l.b16 %v90
  %v356 = vunpack.c.h.b16 %v90
  %v357 = vunpack.c.l.b16 %v91
  %v358 = vunpack.c.h.b16 %v91
  %v359 = vunpack.c.l.b16 %v92
  %v360 = vunpack.c.h.b16 %v92
  %v361 = vunpack.c.l.b16 %v93
  %v362 = vunpack.c.h.b16 %v93
  %v363 = vunpack.c.l.b16 %v94
  %v364 = vunpack.c.h.b16 %v94
  %v365 = vunpack.c.l.b16 %v95
  %v366 = vunpack.c.h.b16 %v95
  %v367 = vunpack.c.l.b16 %v96
  %v368 = vunpack.c.h.b16 %v96
  %v369 = vpack.c.b16 %v243, %v241
  %v370 = vpack.c.b16 %v244, %v242
  %v371 = vpack.c.b16 %v247, %v245
  %v372 = vpack.c.b16 %v248, %v246
  %v373 = vpack.c.b16 %v251, %v249
  %v374 = vpack.c.b16 %v252, %v250
  %v375 = vpack.c.b16 %v255, %v253
  %v376 = vpack.c.b16 %v256, %v254
  %v377 = vpack.c.b16 %v259, %v257
  %v378 = vpack.c.b16 %v260, %v258
  %v379 = vpack.c.b16 %v263, %v261
  %v380 = vpack.c.b16 %v264, %v262
  %v381 = vpack.c.b16 %v267, %v265
  %v382 = vpack.c.b16 %v268, %v266
  %v383 = vpack.c.b16 %v271, %v269
  %v384 = vpack.c.b16 %v272, %v270
  %v385 = vpack.c.b16 %v275, %v273
  %v386 = vpack.c.b16 %v276, %v274
  %v387 = vpack.c.b16 %v279, %v277
  %v388 = vpack.c.b16 %v280, %v278
  %v389 = vpack.c.b16 %v283, %v281
  %v390 = vpack.c.b16 %v284, %v282
  %v391 = vpack.c.b16 %v287, %v285
  %v392 = vpack.c.b16 %v288, %v286
  %v393 = vpack.c.b16 %v291, %v289
  %v394 = vpack.c.b16 %v292, %v290
  %v395 = vpack.c.b16 %v295, %v293
  %v396 = vpack.c.b16 %v296, %v294
  %v397 = vpack.c.b16 %v299, %v297
  %v398 = vpack.c.b16 %v300, %v298
  %v399 = vpack.c.b16 %v303, %v301
  %v400 = vpack.c.b16 %v304, %v302
  %v401 = vpack.c.b16 %v307, %v305
  %v402 = vpack.c.b16 %v308, %v306
  %v403 = vpack.c.b16 %v311, %v309
  %v404 = vpack.c.b16 %v312, %v310
  %v405 = vpack.c.b16 %v315, %v313
  %v406 = vpack.c.b16 %v316, %v314
  %v407 = vpack.c.b16 %v319, %v317
  %v408 = vpack.c.b16 %v320, %v318
  %v409 = vpack.c.b16 %v323, %v321
  %v410 = vpack.c.b16 %v324, %v322
  %v411 = vpack.c.b16 %v327, %v325
  %v412 = vpack.c.b16 %v328, %v326
  %v413 = vpack.c.b16 %v331, %v329
  %v414 = vpack.c.b16 %v332, %v330
  %v415 = vpack.c.b16 %v335, %v333
  %v416 = vpack.c.b16 %v336, %v334
  %v417 = vpack.c.b16 %v339, %v337
  %v418 = vpack.c.b16 %v340, %v338
  %v419 = vpack.c.b16 %v343, %v341
  %v420 = vpack.c.b16 %v344, %v342
  %v421 = vpack.c.b16 %v347, %v345
  %v422 = vpack.c.b16 %v348, %v346
  %v423 = vpack.c.b16 %v351, %v349
  %v424 = vpack.c.b16 %v352, %v350
  %v425 = vpack.c.b16 %v355, %v353
  %v426 = vpack.c.b16 %v356, %v354
  %v427 = vpack.c.b16 %v359, %v357
  %v428 = vpack.c.b16 %v360, %v358
  %v429 = vpack.c.b16 %v363, %v361
  %v430 = vpack.c.b16 %v364, %v362
  %v431 = vpack.c.b16 %v367, %v365
  %v432 = vpack.c.b16 %v368, %v366
  %497 = vmatprep.subr.bf16.mxu0 %v370
  %498 = vmatpush1.bf16.msra.mxu0 %v369
  %499 = vmatprep.subr.bf16.mxu0 %v372
  %500 = vmatpush1.bf16.msra.mxu0 %v371
  %501 = vmatprep.subr.bf16.mxu0 %v374
  %502 = vmatpush1.bf16.msra.mxu0 %v373
  %503 = vmatprep.subr.bf16.mxu0 %v376
  %504 = vmatpush1.bf16.msra.mxu0 %v375
  %505 = vmatprep.subr.bf16.mxu0 %v378
  %506 = vmatpush1.bf16.msra.mxu0 %v377
  %507 = vmatprep.subr.bf16.mxu0 %v380
  %508 = vmatpush1.bf16.msra.mxu0 %v379
  %509 = vmatprep.subr.bf16.mxu0 %v382
  %510 = vmatpush1.bf16.msra.mxu0 %v381
  %511 = vmatprep.subr.bf16.mxu0 %v384
  %512 = vmatpush1.bf16.msra.mxu0 %v383
  %513 = vmatprep.subr.bf16.mxu0 %v386
  %514 = vmatpush1.bf16.msra.mxu0 %v385
  %515 = vmatprep.subr.bf16.mxu0 %v388
  %516 = vmatpush1.bf16.msra.mxu0 %v387
  %517 = vmatprep.subr.bf16.mxu0 %v390
  %518 = vmatpush1.bf16.msra.mxu0 %v389
  %519 = vmatprep.subr.bf16.mxu0 %v392
  %520 = vmatpush1.bf16.msra.mxu0 %v391
  %521 = vmatprep.subr.bf16.mxu0 %v394
  %522 = vmatpush1.bf16.msra.mxu0 %v393
  %523 = vmatprep.subr.bf16.mxu0 %v396
  %524 = vmatpush1.bf16.msra.mxu0 %v395
  %525 = vmatprep.subr.bf16.mxu0 %v398
  %526 = vmatpush1.bf16.msra.mxu0 %v397
  %527 = vmatprep.subr.bf16.mxu0 %v400
  %528 = vmatpush1.bf16.msra.mxu0 %v399
  %529 = vmatprep.mubr.bf16.mxu0 %v146
  %530 = vmatmul.mubr.bf16.gmra.mrb[0].mxu0 %v145
  %v531 = vpop.f32.mrb[0].mxu0
  %v532 = vadd.f32 0.0, %v531
  %v533 = vpop.f32.mrb[0].mxu0
  %v534 = vadd.f32 0.0, %v533
  %v535 = vpop.f32.mrb[0].mxu0
  %v536 = vadd.f32 0.0, %v535
  %v537 = vpop.f32.mrb[0].mxu0
  %v538 = vadd.f32 0.0, %v537
  %539 = vmatprep.mubr.bf16.mxu0 %v150
  %540 = vmatmul.mubr.bf16.gmra.mrb[0].mxu0 %v149
  %v541 = vpop.f32.mrb[0].mxu0
  %v542 = vadd.f32 0.0, %v541
  %v543 = vpop.f32.mrb[0].mxu0
  %v544 = vadd.f32 0.0, %v543
  %v545 = vpop.f32.mrb[0].mxu0
  %v546 = vadd.f32 0.0, %v545
  %v547 = vpop.f32.mrb[0].mxu0
  %v548 = vadd.f32 0.0, %v547
  %549 = vmatprep.mubr.bf16.mxu0 %v154
  %550 = vmatmul.mubr.bf16.gmra.mrb[0].mxu0 %v153
  %v551 = vpop.f32.mrb[0].mxu0
  %v552 = vadd.f32 0.0, %v551
  %v553 = vpop.f32.mrb[0].mxu0
  %v554 = vadd.f32 0.0, %v553
  %v555 = vpop.f32.mrb[0].mxu0
  %v556 = vadd.f32 0.0, %v555
  %v557 = vpop.f32.mrb[0].mxu0
  %v558 = vadd.f32 0.0, %v557
  %559 = vmatprep.mubr.bf16.mxu0 %v158
  %560 = vmatmul.mubr.bf16.gmra.mrb[0].mxu0 %v157
  %v561 = vpop.f32.mrb[0].mxu0
  %v562 = vadd.f32 0.0, %v561
  %v563 = vpop.f32.mrb[0].mxu0
  %v564 = vadd.f32 0.0, %v563
  %v565 = vpop.f32.mrb[0].mxu0
  %v566 = vadd.f32 0.0, %v565
  %v567 = vpop.f32.mrb[0].mxu0
  %v568 = vadd.f32 0.0, %v567
  %569 = vdwg.mxu0
  %570 = vmatprep.subr.bf16.mxu0 %v402
  %571 = vmatpush1.bf16.msra.mxu0 %v401
  %572 = vmatprep.subr.bf16.mxu0 %v404
  %573 = vmatpush1.bf16.msra.mxu0 %v403
  %574 = vmatprep.subr.bf16.mxu0 %v406
  %575 = vmatpush1.bf16.msra.mxu0 %v405
  %576 = vmatprep.subr.bf16.mxu0 %v408
  %577 = vmatpush1.bf16.msra.mxu0 %v407
  %578 = vmatprep.subr.bf16.mxu0 %v410
  %579 = vmatpush1.bf16.msra.mxu0 %v409
  %580 = vmatprep.subr.bf16.mxu0 %v412
  %581 = vmatpush1.bf16.msra.mxu0 %v411
  %582 = vmatprep.subr.bf16.mxu0 %v414
  %583 = vmatpush1.bf16.msra.mxu0 %v413
  %584 = vmatprep.subr.bf16.mxu0 %v416
  %585 = vmatpush1.bf16.msra.mxu0 %v415
  %586 = vmatprep.subr.bf16.mxu0 %v418
  %587 = vmatpush1.bf16.msra.mxu0 %v417
  %588 = vmatprep.subr.bf16.mxu0 %v420
  %589 = vmatpush1.bf16.msra.mxu0 %v419
  %590 = vmatprep.subr.bf16.mxu0 %v422
  %591 = vmatpush1.bf16.msra.mxu0 %v421
  %592 = vmatprep.subr.bf16.mxu0 %v424
  %593 = vmatpush1.bf16.msra.mxu0 %v423
  %594 = vmatprep.subr.bf16.mxu0 %v426
  %595 = vmatpush1.bf16.msra.mxu0 %v425
  %596 = vmatprep.subr.bf16.mxu0 %v428
  %597 = vmatpush1.bf16.msra.mxu0 %v427
  %598 = vmatprep.subr.bf16.mxu0 %v430
  %599 = vmatpush1.bf16.msra.mxu0 %v429
  %600 = vmatprep.subr.bf16.mxu0 %v432
  %601 = vmatpush1.bf16.msra.mxu0 %v431
  %602 = vmatprep.mubr.bf16.mxu0 %v148
  %603 = vmatmul.mubr.bf16.gmra.mrb[0].mxu0 %v147
  %v604 = vpop.f32.mrb[0].mxu0
  %v605 = vadd.f32 %v532, %v604
  %v606 = vpop.f32.mrb[0].mxu0
  %v607 = vadd.f32 %v534, %v606
  %v608 = vpop.f32.mrb[0].mxu0
  %v609 = vadd.f32 %v536, %v608
  %v610 = vpop.f32.mrb[0].mxu0
  %v611 = vadd.f32 %v538, %v610
  %612 = vmatprep.mubr.bf16.mxu0 %v152
  %613 = vmatmul.mubr.bf16.gmra.mrb[0].mxu0 %v151
  %v614 = vpop.f32.mrb[0].mxu0
  %v615 = vadd.f32 %v542, %v614
  %v616 = vpop.f32.mrb[0].mxu0
  %v617 = vadd.f32 %v544, %v616
  %v618 = vpop.f32.mrb[0].mxu0
  %v619 = vadd.f32 %v546, %v618
  %v620 = vpop.f32.mrb[0].mxu0
  %v621 = vadd.f32 %v548, %v620
  %622 = vmatprep.mubr.bf16.mxu0 %v156
  %623 = vmatmul.mubr.bf16.gmra.mrb[0].mxu0 %v155
  %v624 = vpop.f32.mrb[0].mxu0
  %v625 = vadd.f32 %v552, %v624
  %v626 = vpop.f32.mrb[0].mxu0
  %v627 = vadd.f32 %v554, %v626
  %v628 = vpop.f32.mrb[0].mxu0
  %v629 = vadd.f32 %v556, %v628
  %v630 = vpop.f32.mrb[0].mxu0
  %v631 = vadd.f32 %v558, %v630
  %632 = vmatprep.mubr.bf16.mxu0 %v160
  %633 = vmatmul.mubr.bf16.gmra.mrb[0].mxu0 %v159
  %v634 = vpop.f32.mrb[0].mxu0
  %v635 = vadd.f32 %v562, %v634
  %v636 = vpop.f32.mrb[0].mxu0
  %v637 = vadd.f32 %v564, %v636
  %v638 = vpop.f32.mrb[0].mxu0
  %v639 = vadd.f32 %v566, %v638
  %v640 = vpop.f32.mrb[0].mxu0
  %v641 = vadd.f32 %v568, %v640
  %642 = vdwg.mxu0
  %v643 = vld [vmem:[%s2] sm:$0xff]
  %v644 = vld [vmem:[%s2 + $0x8] sm:$0xff]
  %v645 = vld [vmem:[%s2 + $0x10] sm:$0xff]
  %v646 = vld [vmem:[%s2 + $0x18] sm:$0xff]
  %v647 = vld [vmem:[%s2 + $0x20] sm:$0xff]
  %v648 = vld [vmem:[%s2 + $0x28] sm:$0xff]
  %v649 = vld [vmem:[%s2 + $0x30] sm:$0xff]
  %v650 = vld [vmem:[%s2 + $0x38] sm:$0xff]
  %652 = vset.pattern.permute.xlu0 0
  %653 = vperm.xlu0 %652, %v643
  %v654 = vpop.permute.xlu0 %653
  %657 = vset.pattern.permute.xlu0 0
  %658 = vperm.xlu0 %657, %v644
  %v659 = vpop.permute.xlu0 %658
  %662 = vset.pattern.permute.xlu0 0
  %663 = vperm.xlu0 %662, %v645
  %v664 = vpop.permute.xlu0 %663
  %667 = vset.pattern.permute.xlu0 0
  %668 = vperm.xlu0 %667, %v646
  %v669 = vpop.permute.xlu0 %668
  %672 = vset.pattern.permute.xlu0 0
  %673 = vperm.xlu0 %672, %v647
  %v674 = vpop.permute.xlu0 %673
  %677 = vset.pattern.permute.xlu0 0
  %678 = vperm.xlu0 %677, %v648
  %v679 = vpop.permute.xlu0 %678
  %682 = vset.pattern.permute.xlu0 0
  %683 = vperm.xlu0 %682, %v649
  %v684 = vpop.permute.xlu0 %683
  %687 = vset.pattern.permute.xlu0 0
  %688 = vperm.xlu0 %687, %v650
  %v689 = vpop.permute.xlu0 %688
  %v691 = vmul.f32 %v605, %v654
  %v692 = vmul.f32 %v607, %v654
  %v693 = vmul.f32 %v609, %v659
  %v694 = vmul.f32 %v611, %v659
  %v695 = vmul.f32 %v615, %v664
  %v696 = vmul.f32 %v617, %v664
  %v697 = vmul.f32 %v619, %v669
  %v698 = vmul.f32 %v621, %v669
  %v699 = vmul.f32 %v625, %v674
  %v700 = vmul.f32 %v627, %v674
  %v701 = vmul.f32 %v629, %v679
  %v702 = vmul.f32 %v631, %v679
  %v703 = vmul.f32 %v635, %v684
  %v704 = vmul.f32 %v637, %v684
  %v705 = vmul.f32 %v639, %v689
  %v706 = vmul.f32 %v641, %v689
  %v707 = vld [vmem:[%s3] sm:$0xff]
  %v708 = vld [vmem:[%s3 + $0x8] sm:$0xff]
  %v709 = vld [vmem:[%s3 + $0x10] sm:$0xff]
  %v710 = vld [vmem:[%s3 + $0x18] sm:$0xff]
  %v711 = vld [vmem:[%s3 + $0x20] sm:$0xff]
  %v712 = vld [vmem:[%s3 + $0x28] sm:$0xff]
  %v713 = vld [vmem:[%s3 + $0x30] sm:$0xff]
  %v714 = vld [vmem:[%s3 + $0x38] sm:$0xff]
  %716 = vset.pattern.permute.xlu0 0
  %717 = vperm.xlu0 %716, %v707
  %v718 = vpop.permute.xlu0 %717
  %721 = vset.pattern.permute.xlu0 0
  %722 = vperm.xlu0 %721, %v708
  %v723 = vpop.permute.xlu0 %722
  %726 = vset.pattern.permute.xlu0 0
  %727 = vperm.xlu0 %726, %v709
  %v728 = vpop.permute.xlu0 %727
  %731 = vset.pattern.permute.xlu0 0
  %732 = vperm.xlu0 %731, %v710
  %v733 = vpop.permute.xlu0 %732
  %736 = vset.pattern.permute.xlu0 0
  %737 = vperm.xlu0 %736, %v711
  %v738 = vpop.permute.xlu0 %737
  %741 = vset.pattern.permute.xlu0 0
  %742 = vperm.xlu0 %741, %v712
  %v743 = vpop.permute.xlu0 %742
  %746 = vset.pattern.permute.xlu0 0
  %747 = vperm.xlu0 %746, %v713
  %v748 = vpop.permute.xlu0 %747
  %751 = vset.pattern.permute.xlu0 0
  %752 = vperm.xlu0 %751, %v714
  %v753 = vpop.permute.xlu0 %752
  %v755 = vadd.f32 %v691, %v718
  %v756 = vadd.f32 %v692, %v718
  %v757 = vadd.f32 %v693, %v723
  %v758 = vadd.f32 %v694, %v723
  %v759 = vadd.f32 %v695, %v728
  %v760 = vadd.f32 %v696, %v728
  %v761 = vadd.f32 %v697, %v733
  %v762 = vadd.f32 %v698, %v733
  %v763 = vadd.f32 %v699, %v738
  %v764 = vadd.f32 %v700, %v738
  %v765 = vadd.f32 %v701, %v743
  %v766 = vadd.f32 %v702, %v743
  %v767 = vadd.f32 %v703, %v748
  %v768 = vadd.f32 %v704, %v748
  %v769 = vadd.f32 %v705, %v753
  %v770 = vadd.f32 %v706, %v753
  %v771 = vmax.f32 %v755, 0.0
  %v772 = vmax.f32 %v756, 0.0
  %v773 = vmax.f32 %v757, 0.0
  %v774 = vmax.f32 %v758, 0.0
  %v775 = vmax.f32 %v759, 0.0
  %v776 = vmax.f32 %v760, 0.0
  %v777 = vmax.f32 %v761, 0.0
  %v778 = vmax.f32 %v762, 0.0
  %v779 = vmax.f32 %v763, 0.0
  %v780 = vmax.f32 %v764, 0.0
  %v781 = vmax.f32 %v765, 0.0
  %v782 = vmax.f32 %v766, 0.0
  %v783 = vmax.f32 %v767, 0.0
  %v784 = vmax.f32 %v768, 0.0
  %v785 = vmax.f32 %v769, 0.0
  %v786 = vmax.f32 %v770, 0.0
  %v787 = vpack.c.bf16 %v773, %v771
  %v788 = vpack.c.bf16 %v774, %v772
  %v789 = vpack.c.bf16 %v777, %v775
  %v790 = vpack.c.bf16 %v778, %v776
  %v791 = vpack.c.bf16 %v781, %v779
  %v792 = vpack.c.bf16 %v782, %v780
  %v793 = vpack.c.bf16 %v785, %v783
  %v794 = vpack.c.bf16 %v786, %v784
  %v803 = vunpack.c.l.b16 %v787
  %v804 = vunpack.c.l.b16 %v788
  %v805 = vunpack.c.h.b16 %v787
  %v806 = vunpack.c.h.b16 %v788
  %v807 = vunpack.c.l.b16 %v789
  %v808 = vunpack.c.l.b16 %v790
  %v809 = vunpack.c.h.b16 %v789
  %v810 = vunpack.c.h.b16 %v790
  %v811 = vunpack.c.l.b16 %v791
  %v812 = vunpack.c.l.b16 %v792
  %v813 = vunpack.c.h.b16 %v791
  %v814 = vunpack.c.h.b16 %v792
  %v815 = vunpack.c.l.b16 %v793
  %v816 = vunpack.c.l.b16 %v794
  %v817 = vunpack.c.h.b16 %v793
  %v818 = vunpack.c.h.b16 %v794
  %v819 = vpack.c.b16 %v804, %v803
  %v820 = vpack.c.b16 %v806, %v805
  %v821 = vpack.c.b16 %v808, %v807
  %v822 = vpack.c.b16 %v810, %v809
  %v823 = vpack.c.b16 %v812, %v811
  %v824 = vpack.c.b16 %v814, %v813
  %v825 = vpack.c.b16 %v816, %v815
  %v826 = vpack.c.b16 %v818, %v817
  %vm835 = vcmask 1043456
  %vm836 = vcmask 277508
  %vm837 = vmor %vm836, %vm835
  %838 = vst.msk [vmem:[%s4] sm:$0xff] %vm837, %v819
  %839 = vst.msk [vmem:[%s4 + $0x8] sm:$0xff] %vm837, %v820
  %840 = vst.msk [vmem:[%s4 + $0x10] sm:$0xff] %vm837, %v821
  %841 = vst.msk [vmem:[%s4 + $0x18] sm:$0xff] %vm837, %v822
  %842 = vst.msk [vmem:[%s4 + $0x20] sm:$0xff] %vm837, %v823
  %843 = vst.msk [vmem:[%s4 + $0x28] sm:$0xff] %vm837, %v824
  %844 = vst.msk [vmem:[%s4 + $0x30] sm:$0xff] %vm837, %v825
  %845 = vst.msk [vmem:[%s4 + $0x38] sm:$0xff] %vm837, %v826
  // Predicated region
  $region18: #{nn_forward.5} parent=0 // pred_check
    _
  $region19: #{nn_forward.5} parent=0 // pred_check_branch
    %847 = sbr.rel (0) target = $region21
  $region20: #{nn_forward.5} parent=0 // pred_region
    _
  $region21: #{nn_forward.5} parent=0 // pred_fallthru
    _
  // Predicated region
  $region22: #{nn_forward.5} parent=0 // pred_check
    _
  $region23: #{nn_forward.5} parent=0 // pred_check_branch
    %849 = sbr.rel (0) target = $region25
  $region24: #{nn_forward.5} parent=0 // pred_region
    _
  $region25: #{nn_forward.5} parent=0 // pred_fallthru
    _

// kernel: nn_forward.6
$region0: #{nn_forward.6}
  #allocation0 [shape = 'u32[]', space=smem, size = 0x4, offset = 0x4, fixed_abs, tag = 'smem constant byte address 0x4 - core index']
  #allocation1 [shape = 'u32[144,128]{1,0:T(1,128)}', space=vmem, size = 0x12000, scoped, tag = 'internal scratch']
  %s0 = inlined_call_operand.vmem [shape: bf16[128,576], index: 0, kind: input, shape index: {}]
  %s1 = inlined_call_operand.vmem [shape: bf16[576,32], index: 1, kind: input, shape index: {}]
  %s2 = inlined_call_operand.vmem [shape: f32[128,1], index: 2, kind: input, shape index: {}]
  %s3 = inlined_call_operand.vmem [shape: f32[128,1], index: 3, kind: input, shape index: {}]
  %s4 = inlined_call_operand.vmem [shape: bf16[128,32], index: 4, kind: output, shape index: {}]
  %s5 = sld [smem:[#allocation0]]
  $region26: #{nn_forward.6} parent=0
    _
  %s7 = ssub.s32 1, %s5
  %s8 = scalar_select 0, %s7, %s5
  // Predicated region
  $region2: #{nn_forward.6} parent=0 // pred_check
    _
  $region3: #{nn_forward.6} parent=0 // pred_check_branch
    %10 = sbr.rel (0) target = $region5
  $region4: #{nn_forward.6} parent=0 // pred_region
    _
  $region5: #{nn_forward.6} parent=0 // pred_fallthru
    _
  // Predicated region
  $region6: #{nn_forward.6} parent=0 // pred_check
    _
  $region7: #{nn_forward.6} parent=0 // pred_check_branch
    %12 = sbr.rel (0) target = $region9
  $region8: #{nn_forward.6} parent=0 // pred_region
    _
  $region9: #{nn_forward.6} parent=0 // pred_fallthru
    _
  // Predicated region
  $region10: #{nn_forward.6} parent=0 // pred_check
    _
  $region11: #{nn_forward.6} parent=0 // pred_check_branch
    %14 = sbr.rel (0) target = $region13
  $region12: #{nn_forward.6} parent=0 // pred_region
    _
  $region13: #{nn_forward.6} parent=0 // pred_fallthru
    _
  // Predicated region
  $region14: #{nn_forward.6} parent=0 // pred_check
    _
  $region15: #{nn_forward.6} parent=0 // pred_check_branch
    %16 = sbr.rel (0) target = $region17
  $region16: #{nn_forward.6} parent=0 // pred_region
    _
  $region17: #{nn_forward.6} parent=0 // pred_fallthru
    _
  %v18 = vld [vmem:[%s0] sm:$0xff]
  %v19 = vld [vmem:[%s0 + $0x8] sm:$0xff]
  %v20 = vld [vmem:[%s0 + $0x10] sm:$0xf]
  %v21 = vld [vmem:[%s0 + $0x14] sm:$0xff]
  %v22 = vld [vmem:[%s0 + $0x1c] sm:$0xff]
  %v23 = vld [vmem:[%s0 + $0x24] sm:$0xf]
  %v24 = vld [vmem:[%s0 + $0x28] sm:$0xff]
  %v25 = vld [vmem:[%s0 + $0x30] sm:$0xff]
  %v26 = vld [vmem:[%s0 + $0x38] sm:$0xf]
  %v27 = vld [vmem:[%s0 + $0x3c] sm:$0xff]
  %v28 = vld [vmem:[%s0 + $0x44] sm:$0xff]
  %v29 = vld [vmem:[%s0 + $0x4c] sm:$0xf]
  %v30 = vld [vmem:[%s0 + $0x50] sm:$0xff]
  %v31 = vld [vmem:[%s0 + $0x58] sm:$0xff]
  %v32 = vld [vmem:[%s0 + $0x60] sm:$0xf]
  %v33 = vld [vmem:[%s0 + $0x64] sm:$0xff]
  %v34 = vld [vmem:[%s0 + $0x6c] sm:$0xff]
  %v35 = vld [vmem:[%s0 + $0x74] sm:$0xf]
  %v36 = vld [vmem:[%s0 + $0x78] sm:$0xff]
  %v37 = vld [vmem:[%s0 + $0x80] sm:$0xff]
  %v38 = vld [vmem:[%s0 + $0x88] sm:$0xf]
  %v39 = vld [vmem:[%s0 + $0x8c] sm:$0xff]
  %v40 = vld [vmem:[%s0 + $0x94] sm:$0xff]
  %v41 = vld [vmem:[%s0 + $0x9c] sm:$0xf]
  %v42 = vld [vmem:[%s0 + $0xa0] sm:$0xff]
  %v43 = vld [vmem:[%s0 + $0xa8] sm:$0xff]
  %v44 = vld [vmem:[%s0 + $0xb0] sm:$0xf]
  %v45 = vld [vmem:[%s0 + $0xb4] sm:$0xff]
  %v46 = vld [vmem:[%s0 + $0xbc] sm:$0xff]
  %v47 = vld [vmem:[%s0 + $0xc4] sm:$0xf]
  %v48 = vld [vmem:[%s0 + $0xc8] sm:$0xff]
  %v49 = vld [vmem:[%s0 + $0xd0] sm:$0xff]
  %v50 = vld [vmem:[%s0 + $0xd8] sm:$0xf]
  %v51 = vld [vmem:[%s0 + $0xdc] sm:$0xff]
  %v52 = vld [vmem:[%s0 + $0xe4] sm:$0xff]
  %v53 = vld [vmem:[%s0 + $0xec] sm:$0xf]
  %v54 = vld [vmem:[%s0 + $0xf0] sm:$0xff]
  %v55 = vld [vmem:[%s0 + $0xf8] sm:$0xff]
  %v56 = vld [vmem:[%s0 + $0x100] sm:$0xf]
  %v57 = vld [vmem:[%s0 + $0x104] sm:$0xff]
  %v58 = vld [vmem:[%s0 + $0x10c] sm:$0xff]
  %v59 = vld [vmem:[%s0 + $0x114] sm:$0xf]
  %v60 = vld [vmem:[%s0 + $0x118] sm:$0xff]
  %v61 = vld [vmem:[%s0 + $0x120] sm:$0xff]
  %v62 = vld [vmem:[%s0 + $0x128] sm:$0xf]
  %v63 = vld [vmem:[%s0 + $0x12c] sm:$0xff]
  %v64 = vld [vmem:[%s0 + $0x134] sm:$0xff]
  %v65 = vld [vmem:[%s0 + $0x13c] sm:$0xf]
  %v66 = vld [vmem:[%s1] sm:$0xf]
  %v67 = vld [vmem:[%s1 + $0x4] sm:$0xf]
  %v68 = vld [vmem:[%s1 + $0x8] sm:$0xf]
  %v69 = vld [vmem:[%s1 + $0xc] sm:$0xf]
  %v70 = vld [vmem:[%s1 + $0x10] sm:$0xf]
  %v71 = vld [vmem:[%s1 + $0x14] sm:$0xf]
  %v72 = vld [vmem:[%s1 + $0x18] sm:$0xf]
  %v73 = vld [vmem:[%s1 + $0x1c] sm:$0xf]
  %v74 = vld [vmem:[%s1 + $0x20] sm:$0xf]
  %v75 = vld [vmem:[%s1 + $0x24] sm:$0xf]
  %v76 = vld [vmem:[%s1 + $0x28] sm:$0xf]
  %v77 = vld [vmem:[%s1 + $0x2c] sm:$0xf]
  %v78 = vld [vmem:[%s1 + $0x30] sm:$0xf]
  %v79 = vld [vmem:[%s1 + $0x34] sm:$0xf]
  %v80 = vld [vmem:[%s1 + $0x38] sm:$0xf]
  %v81 = vld [vmem:[%s1 + $0x3c] sm:$0xf]
  %v82 = vld [vmem:[%s1 + $0x40] sm:$0xf]
  %v83 = vld [vmem:[%s1 + $0x44] sm:$0xf]
  %v84 = vld [vmem:[%s1 + $0x48] sm:$0xf]
  %v85 = vld [vmem:[%s1 + $0x4c] sm:$0xf]
  %v86 = vld [vmem:[%s1 + $0x50] sm:$0xf]
  %v87 = vld [vmem:[%s1 + $0x54] sm:$0xf]
  %v88 = vld [vmem:[%s1 + $0x58] sm:$0xf]
  %v89 = vld [vmem:[%s1 + $0x5c] sm:$0xf]
  %v90 = vld [vmem:[%s1 + $0x60] sm:$0xf]
  %v91 = vld [vmem:[%s1 + $0x64] sm:$0xf]
  %v92 = vld [vmem:[%s1 + $0x68] sm:$0xf]
  %v93 = vld [vmem:[%s1 + $0x6c] sm:$0xf]
  %v94 = vld [vmem:[%s1 + $0x70] sm:$0xf]
  %v95 = vld [vmem:[%s1 + $0x74] sm:$0xf]
  %v96 = vld [vmem:[%s1 + $0x78] sm:$0xf]
  %v97 = vld [vmem:[%s1 + $0x7c] sm:$0xf]
  %v98 = vld [vmem:[%s1 + $0x80] sm:$0xf]
  %v99 = vld [vmem:[%s1 + $0x84] sm:$0xf]
  %v100 = vld [vmem:[%s1 + $0x88] sm:$0xf]
  %v101 = vld [vmem:[%s1 + $0x8c] sm:$0xf]
  %v102 = vld [vmem:[%s1 + $0x90] sm:$0xf]
  %v103 = vld [vmem:[%s1 + $0x94] sm:$0xf]
  %v104 = vld [vmem:[%s1 + $0x98] sm:$0xf]
  %v105 = vld [vmem:[%s1 + $0x9c] sm:$0xf]
  %v106 = vld [vmem:[%s1 + $0xa0] sm:$0xf]
  %v107 = vld [vmem:[%s1 + $0xa4] sm:$0xf]
  %v108 = vld [vmem:[%s1 + $0xa8] sm:$0xf]
  %v109 = vld [vmem:[%s1 + $0xac] sm:$0xf]
  %v110 = vld [vmem:[%s1 + $0xb0] sm:$0xf]
  %v111 = vld [vmem:[%s1 + $0xb4] sm:$0xf]
  %v112 = vld [vmem:[%s1 + $0xb8] sm:$0xf]
  %v113 = vld [vmem:[%s1 + $0xbc] sm:$0xf]
  %v114 = vld [vmem:[%s1 + $0xc0] sm:$0xf]
  %v115 = vld [vmem:[%s1 + $0xc4] sm:$0xf]
  %v116 = vld [vmem:[%s1 + $0xc8] sm:$0xf]
  %v117 = vld [vmem:[%s1 + $0xcc] sm:$0xf]
  %v118 = vld [vmem:[%s1 + $0xd0] sm:$0xf]
  %v119 = vld [vmem:[%s1 + $0xd4] sm:$0xf]
  %v120 = vld [vmem:[%s1 + $0xd8] sm:$0xf]
  %v121 = vld [vmem:[%s1 + $0xdc] sm:$0xf]
  %v122 = vld [vmem:[%s1 + $0xe0] sm:$0xf]
  %v123 = vld [vmem:[%s1 + $0xe4] sm:$0xf]
  %v124 = vld [vmem:[%s1 + $0xe8] sm:$0xf]
  %v125 = vld [vmem:[%s1 + $0xec] sm:$0xf]
  %v126 = vld [vmem:[%s1 + $0xf0] sm:$0xf]
  %v127 = vld [vmem:[%s1 + $0xf4] sm:$0xf]
  %v128 = vld [vmem:[%s1 + $0xf8] sm:$0xf]
  %v129 = vld [vmem:[%s1 + $0xfc] sm:$0xf]
  %v130 = vld [vmem:[%s1 + $0x100] sm:$0xf]
  %v131 = vld [vmem:[%s1 + $0x104] sm:$0xf]
  %v132 = vld [vmem:[%s1 + $0x108] sm:$0xf]
  %v133 = vld [vmem:[%s1 + $0x10c] sm:$0xf]
  %v134 = vld [vmem:[%s1 + $0x110] sm:$0xf]
  %v135 = vld [vmem:[%s1 + $0x114] sm:$0xf]
  %v136 = vld [vmem:[%s1 + $0x118] sm:$0xf]
  %v137 = vld [vmem:[%s1 + $0x11c] sm:$0xf]
  %v186 = vunpack.c.l.b16 %v18
  %v187 = vunpack.c.h.b16 %v18
  %v188 = vunpack.c.l.b16 %v19
  %v189 = vunpack.c.h.b16 %v19
  %v190 = vunpack.c.l.b16 %v20
  %v191 = vunpack.c.l.b16 %v21
  %v192 = vunpack.c.h.b16 %v21
  %v193 = vunpack.c.l.b16 %v22
  %v194 = vunpack.c.h.b16 %v22
  %v195 = vunpack.c.l.b16 %v23
  %v196 = vunpack.c.l.b16 %v24
  %v197 = vunpack.c.h.b16 %v24
  %v198 = vunpack.c.l.b16 %v25
  %v199 = vunpack.c.h.b16 %v25
  %v200 = vunpack.c.l.b16 %v26
  %v201 = vunpack.c.l.b16 %v27
  %v202 = vunpack.c.h.b16 %v27
  %v203 = vunpack.c.l.b16 %v28
  %v204 = vunpack.c.h.b16 %v28
  %v205 = vunpack.c.l.b16 %v29
  %v206 = vunpack.c.l.b16 %v30
  %v207 = vunpack.c.h.b16 %v30
  %v208 = vunpack.c.l.b16 %v31
  %v209 = vunpack.c.h.b16 %v31
  %v210 = vunpack.c.l.b16 %v32
  %v211 = vunpack.c.l.b16 %v33
  %v212 = vunpack.c.h.b16 %v33
  %v213 = vunpack.c.l.b16 %v34
  %v214 = vunpack.c.h.b16 %v34
  %v215 = vunpack.c.l.b16 %v35
  %v216 = vunpack.c.l.b16 %v36
  %v217 = vunpack.c.h.b16 %v36
  %v218 = vunpack.c.l.b16 %v37
  %v219 = vunpack.c.h.b16 %v37
  %v220 = vunpack.c.l.b16 %v38
  %v221 = vunpack.c.l.b16 %v39
  %v222 = vunpack.c.h.b16 %v39
  %v223 = vunpack.c.l.b16 %v40
  %v224 = vunpack.c.h.b16 %v40
  %v225 = vunpack.c.l.b16 %v41
  %v226 = vunpack.c.l.b16 %v42
  %v227 = vunpack.c.h.b16 %v42
  %v228 = vunpack.c.l.b16 %v43
  %v229 = vunpack.c.h.b16 %v43
  %v230 = vunpack.c.l.b16 %v44
  %v231 = vunpack.c.l.b16 %v45
  %v232 = vunpack.c.h.b16 %v45
  %v233 = vunpack.c.l.b16 %v46
  %v234 = vunpack.c.h.b16 %v46
  %v235 = vunpack.c.l.b16 %v47
  %v236 = vunpack.c.l.b16 %v48
  %v237 = vunpack.c.h.b16 %v48
  %v238 = vunpack.c.l.b16 %v49
  %v239 = vunpack.c.h.b16 %v49
  %v240 = vunpack.c.l.b16 %v50
  %v241 = vunpack.c.l.b16 %v51
  %v242 = vunpack.c.h.b16 %v51
  %v243 = vunpack.c.l.b16 %v52
  %v244 = vunpack.c.h.b16 %v52
  %v245 = vunpack.c.l.b16 %v53
  %v246 = vunpack.c.l.b16 %v54
  %v247 = vunpack.c.h.b16 %v54
  %v248 = vunpack.c.l.b16 %v55
  %v249 = vunpack.c.h.b16 %v55
  %v250 = vunpack.c.l.b16 %v56
  %v251 = vunpack.c.l.b16 %v57
  %v252 = vunpack.c.h.b16 %v57
  %v253 = vunpack.c.l.b16 %v58
  %v254 = vunpack.c.h.b16 %v58
  %v255 = vunpack.c.l.b16 %v59
  %v256 = vunpack.c.l.b16 %v60
  %v257 = vunpack.c.h.b16 %v60
  %v258 = vunpack.c.l.b16 %v61
  %v259 = vunpack.c.h.b16 %v61
  %v260 = vunpack.c.l.b16 %v62
  %v261 = vunpack.c.l.b16 %v63
  %v262 = vunpack.c.h.b16 %v63
  %v263 = vunpack.c.l.b16 %v64
  %v264 = vunpack.c.h.b16 %v64
  %v265 = vunpack.c.l.b16 %v65
  %v266 = vpack.c.b16 %v191, %v186
  %v267 = vpack.c.b16 %v192, %v187
  %v268 = vpack.c.b16 %v193, %v188
  %v269 = vpack.c.b16 %v194, %v189
  %v270 = vpack.c.b16 %v195, %v190
  %v271 = vpack.c.b16 %v201, %v196
  %v272 = vpack.c.b16 %v202, %v197
  %v273 = vpack.c.b16 %v203, %v198
  %v274 = vpack.c.b16 %v204, %v199
  %v275 = vpack.c.b16 %v205, %v200
  %v276 = vpack.c.b16 %v211, %v206
  %v277 = vpack.c.b16 %v212, %v207
  %v278 = vpack.c.b16 %v213, %v208
  %v279 = vpack.c.b16 %v214, %v209
  %v280 = vpack.c.b16 %v215, %v210
  %v281 = vpack.c.b16 %v221, %v216
  %v282 = vpack.c.b16 %v222, %v217
  %v283 = vpack.c.b16 %v223, %v218
  %v284 = vpack.c.b16 %v224, %v219
  %v285 = vpack.c.b16 %v225, %v220
  %v286 = vpack.c.b16 %v231, %v226
  %v287 = vpack.c.b16 %v232, %v227
  %v288 = vpack.c.b16 %v233, %v228
  %v289 = vpack.c.b16 %v234, %v229
  %v290 = vpack.c.b16 %v235, %v230
  %v291 = vpack.c.b16 %v241, %v236
  %v292 = vpack.c.b16 %v242, %v237
  %v293 = vpack.c.b16 %v243, %v238
  %v294 = vpack.c.b16 %v244, %v239
  %v295 = vpack.c.b16 %v245, %v240
  %v296 = vpack.c.b16 %v251, %v246
  %v297 = vpack.c.b16 %v252, %v247
  %v298 = vpack.c.b16 %v253, %v248
  %v299 = vpack.c.b16 %v254, %v249
  %v300 = vpack.c.b16 %v255, %v250
  %v301 = vpack.c.b16 %v261, %v256
  %v302 = vpack.c.b16 %v262, %v257
  %v303 = vpack.c.b16 %v263, %v258
  %v304 = vpack.c.b16 %v264, %v259
  %v305 = vpack.c.b16 %v265, %v260
  %v410 = vunpack.c.l.b16 %v66
  %v411 = vunpack.c.l.b16 %v67
  %v412 = vunpack.c.l.b16 %v68
  %v413 = vunpack.c.l.b16 %v69
  %v414 = vunpack.c.l.b16 %v70
  %v415 = vunpack.c.l.b16 %v71
  %v416 = vunpack.c.l.b16 %v72
  %v417 = vunpack.c.l.b16 %v73
  %v418 = vunpack.c.l.b16 %v74
  %v419 = vunpack.c.l.b16 %v75
  %v420 = vunpack.c.l.b16 %v76
  %v421 = vunpack.c.l.b16 %v77
  %v422 = vunpack.c.l.b16 %v78
  %v423 = vunpack.c.l.b16 %v79
  %v424 = vunpack.c.l.b16 %v80
  %v425 = vunpack.c.l.b16 %v81
  %v426 = vunpack.c.l.b16 %v82
  %v427 = vunpack.c.l.b16 %v83
  %v428 = vunpack.c.l.b16 %v84
  %v429 = vunpack.c.l.b16 %v85
  %v430 = vunpack.c.l.b16 %v86
  %v431 = vunpack.c.l.b16 %v87
  %v432 = vunpack.c.l.b16 %v88
  %v433 = vunpack.c.l.b16 %v89
  %v434 = vunpack.c.l.b16 %v90
  %v435 = vunpack.c.l.b16 %v91
  %v436 = vunpack.c.l.b16 %v92
  %v437 = vunpack.c.l.b16 %v93
  %v438 = vunpack.c.l.b16 %v94
  %v439 = vunpack.c.l.b16 %v95
  %v440 = vunpack.c.l.b16 %v96
  %v441 = vunpack.c.l.b16 %v97
  %v442 = vunpack.c.l.b16 %v98
  %v443 = vunpack.c.l.b16 %v99
  %v444 = vunpack.c.l.b16 %v100
  %v445 = vunpack.c.l.b16 %v101
  %v446 = vunpack.c.l.b16 %v102
  %v447 = vunpack.c.l.b16 %v103
  %v448 = vunpack.c.l.b16 %v104
  %v449 = vunpack.c.l.b16 %v105
  %v450 = vunpack.c.l.b16 %v106
  %v451 = vunpack.c.l.b16 %v107
  %v452 = vunpack.c.l.b16 %v108
  %v453 = vunpack.c.l.b16 %v109
  %v454 = vunpack.c.l.b16 %v110
  %v455 = vunpack.c.l.b16 %v111
  %v456 = vunpack.c.l.b16 %v112
  %v457 = vunpack.c.l.b16 %v113
  %v458 = vunpack.c.l.b16 %v114
  %v459 = vunpack.c.l.b16 %v115
  %v460 = vunpack.c.l.b16 %v116
  %v461 = vunpack.c.l.b16 %v117
  %v462 = vunpack.c.l.b16 %v118
  %v463 = vunpack.c.l.b16 %v119
  %v464 = vunpack.c.l.b16 %v120
  %v465 = vunpack.c.l.b16 %v121
  %v466 = vunpack.c.l.b16 %v122
  %v467 = vunpack.c.l.b16 %v123
  %v468 = vunpack.c.l.b16 %v124
  %v469 = vunpack.c.l.b16 %v125
  %v470 = vunpack.c.l.b16 %v126
  %v471 = vunpack.c.l.b16 %v127
  %v472 = vunpack.c.l.b16 %v128
  %v473 = vunpack.c.l.b16 %v129
  %v474 = vunpack.c.l.b16 %v130
  %v475 = vunpack.c.l.b16 %v131
  %v476 = vunpack.c.l.b16 %v132
  %v477 = vunpack.c.l.b16 %v133
  %v478 = vunpack.c.l.b16 %v134
  %v479 = vunpack.c.l.b16 %v135
  %v480 = vunpack.c.l.b16 %v136
  %v481 = vunpack.c.l.b16 %v137
  %v482 = vpack.c.b16 %v411, %v410
  %v483 = vpack.c.b16 %v413, %v412
  %v484 = vpack.c.b16 %v415, %v414
  %v485 = vpack.c.b16 %v417, %v416
  %v486 = vpack.c.b16 %v419, %v418
  %v487 = vpack.c.b16 %v421, %v420
  %v488 = vpack.c.b16 %v423, %v422
  %v489 = vpack.c.b16 %v425, %v424
  %v490 = vpack.c.b16 %v427, %v426
  %v491 = vpack.c.b16 %v429, %v428
  %v492 = vpack.c.b16 %v431, %v430
  %v493 = vpack.c.b16 %v433, %v432
  %v494 = vpack.c.b16 %v435, %v434
  %v495 = vpack.c.b16 %v437, %v436
  %v496 = vpack.c.b16 %v439, %v438
  %v497 = vpack.c.b16 %v441, %v440
  %v498 = vpack.c.b16 %v443, %v442
  %v499 = vpack.c.b16 %v445, %v444
  %v500 = vpack.c.b16 %v447, %v446
  %v501 = vpack.c.b16 %v449, %v448
  %v502 = vpack.c.b16 %v451, %v450
  %v503 = vpack.c.b16 %v453, %v452
  %v504 = vpack.c.b16 %v455, %v454
  %v505 = vpack.c.b16 %v457, %v456
  %v506 = vpack.c.b16 %v459, %v458
  %v507 = vpack.c.b16 %v461, %v460
  %v508 = vpack.c.b16 %v463, %v462
  %v509 = vpack.c.b16 %v465, %v464
  %v510 = vpack.c.b16 %v467, %v466
  %v511 = vpack.c.b16 %v469, %v468
  %v512 = vpack.c.b16 %v471, %v470
  %v513 = vpack.c.b16 %v473, %v472
  %v514 = vpack.c.b16 %v475, %v474
  %v515 = vpack.c.b16 %v477, %v476
  %v516 = vpack.c.b16 %v479, %v478
  %v517 = vpack.c.b16 %v481, %v480
  %vm554 = vcmask 523264
  %v556 = vsel %vm554, %v270, 0
  %v559 = vsel %vm554, %v275, 0
  %v562 = vsel %vm554, %v280, 0
  %v565 = vsel %vm554, %v285, 0
  %v568 = vsel %vm554, %v290, 0
  %v571 = vsel %vm554, %v295, 0
  %v574 = vsel %vm554, %v300, 0
  %v577 = vsel %vm554, %v305, 0
  %579 = vmatprep.subr.bf16.mxu0 0
  %580 = vmatpush1.bf16.msra.mxu0 %v482
  %581 = vmatprep.subr.bf16.mxu0 0
  %582 = vmatpush1.bf16.msra.mxu0 %v483
  %583 = vmatprep.subr.bf16.mxu0 0
  %584 = vmatpush1.bf16.msra.mxu0 %v484
  %585 = vmatprep.subr.bf16.mxu0 0
  %586 = vmatpush1.bf16.msra.mxu0 %v485
  %587 = vmatprep.subr.bf16.mxu0 0
  %588 = vmatpush1.bf16.msra.mxu0 %v486
  %589 = vmatprep.subr.bf16.mxu0 0
  %590 = vmatpush1.bf16.msra.mxu0 %v487
  %591 = vmatprep.subr.bf16.mxu0 0
  %592 = vmatpush1.bf16.msra.mxu0 %v488
  %593 = vmatprep.subr.bf16.mxu0 0
  %594 = vmatpush1.bf16.msra.mxu0 %v489
  %595 = vmatprep.subr.bf16.mxu0 0
  %596 = vmatpush1.bf16.msra.mxu0 %v490
  %597 = vmatprep.subr.bf16.mxu0 0
  %598 = vmatpush1.bf16.msra.mxu0 %v491
  %599 = vmatprep.subr.bf16.mxu0 0
  %600 = vmatpush1.bf16.msra.mxu0 %v492
  %601 = vmatprep.subr.bf16.mxu0 0
  %602 = vmatpush1.bf16.msra.mxu0 %v493
  %603 = vmatprep.subr.bf16.mxu0 0
  %604 = vmatpush1.bf16.msra.mxu0 %v494
  %605 = vmatprep.subr.bf16.mxu0 0
  %606 = vmatpush1.bf16.msra.mxu0 %v495
  %607 = vmatprep.subr.bf16.mxu0 0
  %608 = vmatpush1.bf16.msra.mxu0 %v496
  %609 = vmatprep.subr.bf16.mxu0 0
  %610 = vmatpush1.bf16.msra.mxu0 %v497
  %611 = vmatprep.mubr.bf16.mxu0 %v267
  %612 = vmatmul.mubr.bf16.gmra.mrb[0].mxu0 %v266
  %v613 = vpop.f32.mrb[0].mxu0
  %v614 = vadd.f32 0.0, %v613
  %v615 = vpop.f32.mrb[0].mxu0
  %v616 = vpop.f32.mrb[0].mxu0
  %v617 = vadd.f32 0.0, %v616
  %v618 = vpop.f32.mrb[0].mxu0
  %619 = vmatprep.mubr.bf16.mxu0 %v272
  %620 = vmatmul.mubr.bf16.gmra.mrb[0].mxu0 %v271
  %v621 = vpop.f32.mrb[0].mxu0
  %v622 = vadd.f32 0.0, %v621
  %v623 = vpop.f32.mrb[0].mxu0
  %v624 = vpop.f32.mrb[0].mxu0
  %v625 = vadd.f32 0.0, %v624
  %v626 = vpop.f32.mrb[0].mxu0
  %627 = vmatprep.mubr.bf16.mxu0 %v277
  %628 = vmatmul.mubr.bf16.gmra.mrb[0].mxu0 %v276
  %v629 = vpop.f32.mrb[0].mxu0
  %v630 = vadd.f32 0.0, %v629
  %v631 = vpop.f32.mrb[0].mxu0
  %v632 = vpop.f32.mrb[0].mxu0
  %v633 = vadd.f32 0.0, %v632
  %v634 = vpop.f32.mrb[0].mxu0
  %635 = vmatprep.mubr.bf16.mxu0 %v282
  %636 = vmatmul.mubr.bf16.gmra.mrb[0].mxu0 %v281
  %v637 = vpop.f32.mrb[0].mxu0
  %v638 = vadd.f32 0.0, %v637
  %v639 = vpop.f32.mrb[0].mxu0
  %v640 = vpop.f32.mrb[0].mxu0
  %v641 = vadd.f32 0.0, %v640
  %v642 = vpop.f32.mrb[0].mxu0
  %643 = vmatprep.mubr.bf16.mxu0 %v287
  %644 = vmatmul.mubr.bf16.gmra.mrb[0].mxu0 %v286
  %v645 = vpop.f32.mrb[0].mxu0
  %v646 = vadd.f32 0.0, %v645
  %v647 = vpop.f32.mrb[0].mxu0
  %v648 = vpop.f32.mrb[0].mxu0
  %v649 = vadd.f32 0.0, %v648
  %v650 = vpop.f32.mrb[0].mxu0
  %651 = vmatprep.mubr.bf16.mxu0 %v292
  %652 = vmatmul.mubr.bf16.gmra.mrb[0].mxu0 %v291
  %v653 = vpop.f32.mrb[0].mxu0
  %v654 = vadd.f32 0.0, %v653
  %v655 = vpop.f32.mrb[0].mxu0
  %v656 = vpop.f32.mrb[0].mxu0
  %v657 = vadd.f32 0.0, %v656
  %v658 = vpop.f32.mrb[0].mxu0
  %659 = vmatprep.mubr.bf16.mxu0 %v297
  %660 = vmatmul.mubr.bf16.gmra.mrb[0].mxu0 %v296
  %v661 = vpop.f32.mrb[0].mxu0
  %v662 = vadd.f32 0.0, %v661
  %v663 = vpop.f32.mrb[0].mxu0
  %v664 = vpop.f32.mrb[0].mxu0
  %v665 = vadd.f32 0.0, %v664
  %v666 = vpop.f32.mrb[0].mxu0
  %667 = vmatprep.mubr.bf16.mxu0 %v302
  %668 = vmatmul.mubr.bf16.gmra.mrb[0].mxu0 %v301
  %v669 = vpop.f32.mrb[0].mxu0
  %v670 = vadd.f32 0.0, %v669
  %v671 = vpop.f32.mrb[0].mxu0
  %v672 = vpop.f32.mrb[0].mxu0
  %v673 = vadd.f32 0.0, %v672
  %v674 = vpop.f32.mrb[0].mxu0
  %675 = vdwg.mxu0
  %676 = vmatprep.subr.bf16.mxu0 0
  %677 = vmatpush1.bf16.msra.mxu0 %v498
  %678 = vmatprep.subr.bf16.mxu0 0
  %679 = vmatpush1.bf16.msra.mxu0 %v499
  %680 = vmatprep.subr.bf16.mxu0 0
  %681 = vmatpush1.bf16.msra.mxu0 %v500
  %682 = vmatprep.subr.bf16.mxu0 0
  %683 = vmatpush1.bf16.msra.mxu0 %v501
  %684 = vmatprep.subr.bf16.mxu0 0
  %685 = vmatpush1.bf16.msra.mxu0 %v502
  %686 = vmatprep.subr.bf16.mxu0 0
  %687 = vmatpush1.bf16.msra.mxu0 %v503
  %688 = vmatprep.subr.bf16.mxu0 0
  %689 = vmatpush1.bf16.msra.mxu0 %v504
  %690 = vmatprep.subr.bf16.mxu0 0
  %691 = vmatpush1.bf16.msra.mxu0 %v505
  %692 = vmatprep.subr.bf16.mxu0 0
  %693 = vmatpush1.bf16.msra.mxu0 %v506
  %694 = vmatprep.subr.bf16.mxu0 0
  %695 = vmatpush1.bf16.msra.mxu0 %v507
  %696 = vmatprep.subr.bf16.mxu0 0
  %697 = vmatpush1.bf16.msra.mxu0 %v508
  %698 = vmatprep.subr.bf16.mxu0 0
  %699 = vmatpush1.bf16.msra.mxu0 %v509
  %700 = vmatprep.subr.bf16.mxu0 0
  %701 = vmatpush1.bf16.msra.mxu0 %v510
  %702 = vmatprep.subr.bf16.mxu0 0
  %703 = vmatpush1.bf16.msra.mxu0 %v511
  %704 = vmatprep.subr.bf16.mxu0 0
  %705 = vmatpush1.bf16.msra.mxu0 %v512
  %706 = vmatprep.subr.bf16.mxu0 0
  %707 = vmatpush1.bf16.msra.mxu0 %v513
  %708 = vmatprep.mubr.bf16.mxu0 %v269
  %709 = vmatmul.mubr.bf16.gmra.mrb[0].mxu0 %v268
  %v710 = vpop.f32.mrb[0].mxu0
  %v711 = vadd.f32 %v614, %v710
  %v712 = vpop.f32.mrb[0].mxu0
  %v713 = vpop.f32.mrb[0].mxu0
  %v714 = vadd.f32 %v617, %v713
  %v715 = vpop.f32.mrb[0].mxu0
  %716 = vmatprep.mubr.bf16.mxu0 %v274
  %717 = vmatmul.mubr.bf16.gmra.mrb[0].mxu0 %v273
  %v718 = vpop.f32.mrb[0].mxu0
  %v719 = vadd.f32 %v622, %v718
  %v720 = vpop.f32.mrb[0].mxu0
  %v721 = vpop.f32.mrb[0].mxu0
  %v722 = vadd.f32 %v625, %v721
  %v723 = vpop.f32.mrb[0].mxu0
  %724 = vmatprep.mubr.bf16.mxu0 %v279
  %725 = vmatmul.mubr.bf16.gmra.mrb[0].mxu0 %v278
  %v726 = vpop.f32.mrb[0].mxu0
  %v727 = vadd.f32 %v630, %v726
  %v728 = vpop.f32.mrb[0].mxu0
  %v729 = vpop.f32.mrb[0].mxu0
  %v730 = vadd.f32 %v633, %v729
  %v731 = vpop.f32.mrb[0].mxu0
  %732 = vmatprep.mubr.bf16.mxu0 %v284
  %733 = vmatmul.mubr.bf16.gmra.mrb[0].mxu0 %v283
  %v734 = vpop.f32.mrb[0].mxu0
  %v735 = vadd.f32 %v638, %v734
  %v736 = vpop.f32.mrb[0].mxu0
  %v737 = vpop.f32.mrb[0].mxu0
  %v738 = vadd.f32 %v641, %v737
  %v739 = vpop.f32.mrb[0].mxu0
  %740 = vmatprep.mubr.bf16.mxu0 %v289
  %741 = vmatmul.mubr.bf16.gmra.mrb[0].mxu0 %v288
  %v742 = vpop.f32.mrb[0].mxu0
  %v743 = vadd.f32 %v646, %v742
  %v744 = vpop.f32.mrb[0].mxu0
  %v745 = vpop.f32.mrb[0].mxu0
  %v746 = vadd.f32 %v649, %v745
  %v747 = vpop.f32.mrb[0].mxu0
  %748 = vmatprep.mubr.bf16.mxu0 %v294
  %749 = vmatmul.mubr.bf16.gmra.mrb[0].mxu0 %v293
  %v750 = vpop.f32.mrb[0].mxu0
  %v751 = vadd.f32 %v654, %v750
  %v752 = vpop.f32.mrb[0].mxu0
  %v753 = vpop.f32.mrb[0].mxu0
  %v754 = vadd.f32 %v657, %v753
  %v755 = vpop.f32.mrb[0].mxu0
  %756 = vmatprep.mubr.bf16.mxu0 %v299
  %757 = vmatmul.mubr.bf16.gmra.mrb[0].mxu0 %v298
  %v758 = vpop.f32.mrb[0].mxu0
  %v759 = vadd.f32 %v662, %v758
  %v760 = vpop.f32.mrb[0].mxu0
  %v761 = vpop.f32.mrb[0].mxu0
  %v762 = vadd.f32 %v665, %v761
  %v763 = vpop.f32.mrb[0].mxu0
  %764 = vmatprep.mubr.bf16.mxu0 %v304
  %765 = vmatmul.mubr.bf16.gmra.mrb[0].mxu0 %v303
  %v766 = vpop.f32.mrb[0].mxu0
  %v767 = vadd.f32 %v670, %v766
  %v768 = vpop.f32.mrb[0].mxu0
  %v769 = vpop.f32.mrb[0].mxu0
  %v770 = vadd.f32 %v673, %v769
  %v771 = vpop.f32.mrb[0].mxu0
  %772 = vdwg.mxu0
  %773 = vmatprep.subr.bf16.mxu0 0
  %774 = vmatpush1.bf16.msra.mxu0 %v514
  %775 = vmatprep.subr.bf16.mxu0 0
  %776 = vmatpush1.bf16.msra.mxu0 %v515
  %777 = vmatprep.subr.bf16.mxu0 0
  %778 = vmatpush1.bf16.msra.mxu0 %v516
  %779 = vmatprep.subr.bf16.mxu0 0
  %780 = vmatpush1.bf16.msra.mxu0 %v517
  %781 = vmatprep.subr.bf16.mxu0 0
  %782 = vmatpush1.bf16.msra.mxu0 0
  %783 = vmatprep.subr.bf16.mxu0 0
  %784 = vmatpush1.bf16.msra.mxu0 0
  %785 = vmatprep.subr.bf16.mxu0 0
  %786 = vmatpush1.bf16.msra.mxu0 0
  %787 = vmatprep.subr.bf16.mxu0 0
  %788 = vmatpush1.bf16.msra.mxu0 0
  %789 = vmatprep.subr.bf16.mxu0 0
  %790 = vmatpush1.bf16.msra.mxu0 0
  %791 = vmatprep.subr.bf16.mxu0 0
  %792 = vmatpush1.bf16.msra.mxu0 0
  %793 = vmatprep.subr.bf16.mxu0 0
  %794 = vmatpush1.bf16.msra.mxu0 0
  %795 = vmatprep.subr.bf16.mxu0 0
  %796 = vmatpush1.bf16.msra.mxu0 0
  %797 = vmatprep.subr.bf16.mxu0 0
  %798 = vmatpush1.bf16.msra.mxu0 0
  %799 = vmatprep.subr.bf16.mxu0 0
  %800 = vmatpush1.bf16.msra.mxu0 0
  %801 = vmatprep.subr.bf16.mxu0 0
  %802 = vmatpush1.bf16.msra.mxu0 0
  %803 = vmatprep.subr.bf16.mxu0 0
  %804 = vmatpush1.bf16.msra.mxu0 0
  %805 = vmatprep.mubr.bf16.mxu0 0
  %806 = vmatmul.mubr.bf16.gmra.mrb[0].mxu0 %v556
  %v807 = vpop.f32.mrb[0].mxu0
  %v808 = vadd.f32 %v711, %v807
  %v809 = vpop.f32.mrb[0].mxu0
  %v810 = vpop.f32.mrb[0].mxu0
  %v811 = vadd.f32 %v714, %v810
  %v812 = vpop.f32.mrb[0].mxu0
  %813 = vmatprep.mubr.bf16.mxu0 0
  %814 = vmatmul.mubr.bf16.gmra.mrb[0].mxu0 %v559
  %v815 = vpop.f32.mrb[0].mxu0
  %v816 = vadd.f32 %v719, %v815
  %v817 = vpop.f32.mrb[0].mxu0
  %v818 = vpop.f32.mrb[0].mxu0
  %v819 = vadd.f32 %v722, %v818
  %v820 = vpop.f32.mrb[0].mxu0
  %821 = vmatprep.mubr.bf16.mxu0 0
  %822 = vmatmul.mubr.bf16.gmra.mrb[0].mxu0 %v562
  %v823 = vpop.f32.mrb[0].mxu0
  %v824 = vadd.f32 %v727, %v823
  %v825 = vpop.f32.mrb[0].mxu0
  %v826 = vpop.f32.mrb[0].mxu0
  %v827 = vadd.f32 %v730, %v826
  %v828 = vpop.f32.mrb[0].mxu0
  %829 = vmatprep.mubr.bf16.mxu0 0
  %830 = vmatmul.mubr.bf16.gmra.mrb[0].mxu0 %v565
  %v831 = vpop.f32.mrb[0].mxu0
  %v832 = vadd.f32 %v735, %v831
  %v833 = vpop.f32.mrb[0].mxu0
  %v834 = vpop.f32.mrb[0].mxu0
  %v835 = vadd.f32 %v738, %v834
  %v836 = vpop.f32.mrb[0].mxu0
  %837 = vmatprep.mubr.bf16.mxu0 0
  %838 = vmatmul.mubr.bf16.gmra.mrb[0].mxu0 %v568
  %v839 = vpop.f32.mrb[0].mxu0
  %v840 = vadd.f32 %v743, %v839
  %v841 = vpop.f32.mrb[0].mxu0
  %v842 = vpop.f32.mrb[0].mxu0
  %v843 = vadd.f32 %v746, %v842
  %v844 = vpop.f32.mrb[0].mxu0
  %845 = vmatprep.mubr.bf16.mxu0 0
  %846 = vmatmul.mubr.bf16.gmra.mrb[0].mxu0 %v571
  %v847 = vpop.f32.mrb[0].mxu0
  %v848 = vadd.f32 %v751, %v847
  %v849 = vpop.f32.mrb[0].mxu0
  %v850 = vpop.f32.mrb[0].mxu0
  %v851 = vadd.f32 %v754, %v850
  %v852 = vpop.f32.mrb[0].mxu0
  %853 = vmatprep.mubr.bf16.mxu0 0
  %854 = vmatmul.mubr.bf16.gmra.mrb[0].mxu0 %v574
  %v855 = vpop.f32.mrb[0].mxu0
  %v856 = vadd.f32 %v759, %v855
  %v857 = vpop.f32.mrb[0].mxu0
  %v858 = vpop.f32.mrb[0].mxu0
  %v859 = vadd.f32 %v762, %v858
  %v860 = vpop.f32.mrb[0].mxu0
  %861 = vmatprep.mubr.bf16.mxu0 0
  %862 = vmatmul.mubr.bf16.gmra.mrb[0].mxu0 %v577
  %v863 = vpop.f32.mrb[0].mxu0
  %v864 = vadd.f32 %v767, %v863
  %v865 = vpop.f32.mrb[0].mxu0
  %v866 = vpop.f32.mrb[0].mxu0
  %v867 = vadd.f32 %v770, %v866
  %v868 = vpop.f32.mrb[0].mxu0
  %869 = vdwg.mxu0
  %v870 = vld [vmem:[%s2] sm:$0xff]
  %v871 = vld [vmem:[%s2 + $0x8] sm:$0xff]
  %v872 = vld [vmem:[%s2 + $0x10] sm:$0xff]
  %v873 = vld [vmem:[%s2 + $0x18] sm:$0xff]
  %v874 = vld [vmem:[%s2 + $0x20] sm:$0xff]
  %v875 = vld [vmem:[%s2 + $0x28] sm:$0xff]
  %v876 = vld [vmem:[%s2 + $0x30] sm:$0xff]
  %v877 = vld [vmem:[%s2 + $0x38] sm:$0xff]
  %v878 = vld [vmem:[%s2 + $0x40] sm:$0xff]
  %v879 = vld [vmem:[%s2 + $0x48] sm:$0xff]
  %v880 = vld [vmem:[%s2 + $0x50] sm:$0xff]
  %v881 = vld [vmem:[%s2 + $0x58] sm:$0xff]
  %v882 = vld [vmem:[%s2 + $0x60] sm:$0xff]
  %v883 = vld [vmem:[%s2 + $0x68] sm:$0xff]
  %v884 = vld [vmem:[%s2 + $0x70] sm:$0xff]
  %v885 = vld [vmem:[%s2 + $0x78] sm:$0xff]
  %887 = vset.pattern.permute.xlu0 0
  %888 = vperm.xlu0 %887, %v870
  %v889 = vpop.permute.xlu0 %888
  %892 = vset.pattern.permute.xlu0 0
  %893 = vperm.xlu0 %892, %v871
  %v894 = vpop.permute.xlu0 %893
  %897 = vset.pattern.permute.xlu0 0
  %898 = vperm.xlu0 %897, %v872
  %v899 = vpop.permute.xlu0 %898
  %902 = vset.pattern.permute.xlu0 0
  %903 = vperm.xlu0 %902, %v873
  %v904 = vpop.permute.xlu0 %903
  %907 = vset.pattern.permute.xlu0 0
  %908 = vperm.xlu0 %907, %v874
  %v909 = vpop.permute.xlu0 %908
  %912 = vset.pattern.permute.xlu0 0
  %913 = vperm.xlu0 %912, %v875
  %v914 = vpop.permute.xlu0 %913
  %917 = vset.pattern.permute.xlu0 0
  %918 = vperm.xlu0 %917, %v876
  %v919 = vpop.permute.xlu0 %918
  %922 = vset.pattern.permute.xlu0 0
  %923 = vperm.xlu0 %922, %v877
  %v924 = vpop.permute.xlu0 %923
  %927 = vset.pattern.permute.xlu0 0
  %928 = vperm.xlu0 %927, %v878
  %v929 = vpop.permute.xlu0 %928
  %932 = vset.pattern.permute.xlu0 0
  %933 = vperm.xlu0 %932, %v879
  %v934 = vpop.permute.xlu0 %933
  %937 = vset.pattern.permute.xlu0 0
  %938 = vperm.xlu0 %937, %v880
  %v939 = vpop.permute.xlu0 %938
  %942 = vset.pattern.permute.xlu0 0
  %943 = vperm.xlu0 %942, %v881
  %v944 = vpop.permute.xlu0 %943
  %947 = vset.pattern.permute.xlu0 0
  %948 = vperm.xlu0 %947, %v882
  %v949 = vpop.permute.xlu0 %948
  %952 = vset.pattern.permute.xlu0 0
  %953 = vperm.xlu0 %952, %v883
  %v954 = vpop.permute.xlu0 %953
  %957 = vset.pattern.permute.xlu0 0
  %958 = vperm.xlu0 %957, %v884
  %v959 = vpop.permute.xlu0 %958
  %962 = vset.pattern.permute.xlu0 0
  %963 = vperm.xlu0 %962, %v885
  %v964 = vpop.permute.xlu0 %963
  %v966 = vmul.f32 %v808, %v889
  %v967 = vmul.f32 %v811, %v894
  %v968 = vmul.f32 %v816, %v899
  %v969 = vmul.f32 %v819, %v904
  %v970 = vmul.f32 %v824, %v909
  %v971 = vmul.f32 %v827, %v914
  %v972 = vmul.f32 %v832, %v919
  %v973 = vmul.f32 %v835, %v924
  %v974 = vmul.f32 %v840, %v929
  %v975 = vmul.f32 %v843, %v934
  %v976 = vmul.f32 %v848, %v939
  %v977 = vmul.f32 %v851, %v944
  %v978 = vmul.f32 %v856, %v949
  %v979 = vmul.f32 %v859, %v954
  %v980 = vmul.f32 %v864, %v959
  %v981 = vmul.f32 %v867, %v964
  %v982 = vld [vmem:[%s3] sm:$0xff]
  %v983 = vld [vmem:[%s3 + $0x8] sm:$0xff]
  %v984 = vld [vmem:[%s3 + $0x10] sm:$0xff]
  %v985 = vld [vmem:[%s3 + $0x18] sm:$0xff]
  %v986 = vld [vmem:[%s3 + $0x20] sm:$0xff]
  %v987 = vld [vmem:[%s3 + $0x28] sm:$0xff]
  %v988 = vld [vmem:[%s3 + $0x30] sm:$0xff]
  %v989 = vld [vmem:[%s3 + $0x38] sm:$0xff]
  %v990 = vld [vmem:[%s3 + $0x40] sm:$0xff]
  %v991 = vld [vmem:[%s3 + $0x48] sm:$0xff]
  %v992 = vld [vmem:[%s3 + $0x50] sm:$0xff]
  %v993 = vld [vmem:[%s3 + $0x58] sm:$0xff]
  %v994 = vld [vmem:[%s3 + $0x60] sm:$0xff]
  %v995 = vld [vmem:[%s3 + $0x68] sm:$0xff]
  %v996 = vld [vmem:[%s3 + $0x70] sm:$0xff]
  %v997 = vld [vmem:[%s3 + $0x78] sm:$0xff]
  %999 = vset.pattern.permute.xlu0 0
  %1000 = vperm.xlu0 %999, %v982
  %v1001 = vpop.permute.xlu0 %1000
  %1004 = vset.pattern.permute.xlu0 0
  %1005 = vperm.xlu0 %1004, %v983
  %v1006 = vpop.permute.xlu0 %1005
  %1009 = vset.pattern.permute.xlu0 0
  %1010 = vperm.xlu0 %1009, %v984
  %v1011 = vpop.permute.xlu0 %1010
  %1014 = vset.pattern.permute.xlu0 0
  %1015 = vperm.xlu0 %1014, %v985
  %v1016 = vpop.permute.xlu0 %1015
  %1019 = vset.pattern.permute.xlu0 0
  %1020 = vperm.xlu0 %1019, %v986
  %v1021 = vpop.permute.xlu0 %1020
  %1024 = vset.pattern.permute.xlu0 0
  %1025 = vperm.xlu0 %1024, %v987
  %v1026 = vpop.permute.xlu0 %1025
  %1029 = vset.pattern.permute.xlu0 0
  %1030 = vperm.xlu0 %1029, %v988
  %v1031 = vpop.permute.xlu0 %1030
  %1034 = vset.pattern.permute.xlu0 0
  %1035 = vperm.xlu0 %1034, %v989
  %v1036 = vpop.permute.xlu0 %1035
  %1039 = vset.pattern.permute.xlu0 0
  %1040 = vperm.xlu0 %1039, %v990
  %v1041 = vpop.permute.xlu0 %1040
  %1044 = vset.pattern.permute.xlu0 0
  %1045 = vperm.xlu0 %1044, %v991
  %v1046 = vpop.permute.xlu0 %1045
  %1049 = vset.pattern.permute.xlu0 0
  %1050 = vperm.xlu0 %1049, %v992
  %v1051 = vpop.permute.xlu0 %1050
  %1054 = vset.pattern.permute.xlu0 0
  %1055 = vperm.xlu0 %1054, %v993
  %v1056 = vpop.permute.xlu0 %1055
  %1059 = vset.pattern.permute.xlu0 0
  %1060 = vperm.xlu0 %1059, %v994
  %v1061 = vpop.permute.xlu0 %1060
  %1064 = vset.pattern.permute.xlu0 0
  %1065 = vperm.xlu0 %1064, %v995
  %v1066 = vpop.permute.xlu0 %1065
  %1069 = vset.pattern.permute.xlu0 0
  %1070 = vperm.xlu0 %1069, %v996
  %v1071 = vpop.permute.xlu0 %1070
  %1074 = vset.pattern.permute.xlu0 0
  %1075 = vperm.xlu0 %1074, %v997
  %v1076 = vpop.permute.xlu0 %1075
  %v1078 = vadd.f32 %v966, %v1001
  %v1079 = vadd.f32 %v967, %v1006
  %v1080 = vadd.f32 %v968, %v1011
  %v1081 = vadd.f32 %v969, %v1016
  %v1082 = vadd.f32 %v970, %v1021
  %v1083 = vadd.f32 %v971, %v1026
  %v1084 = vadd.f32 %v972, %v1031
  %v1085 = vadd.f32 %v973, %v1036
  %v1086 = vadd.f32 %v974, %v1041
  %v1087 = vadd.f32 %v975, %v1046
  %v1088 = vadd.f32 %v976, %v1051
  %v1089 = vadd.f32 %v977, %v1056
  %v1090 = vadd.f32 %v978, %v1061
  %v1091 = vadd.f32 %v979, %v1066
  %v1092 = vadd.f32 %v980, %v1071
  %v1093 = vadd.f32 %v981, %v1076
  %v1094 = vmax.f32 %v1078, 0.0
  %v1095 = vmax.f32 %v1079, 0.0
  %v1096 = vmax.f32 %v1080, 0.0
  %v1097 = vmax.f32 %v1081, 0.0
  %v1098 = vmax.f32 %v1082, 0.0
  %v1099 = vmax.f32 %v1083, 0.0
  %v1100 = vmax.f32 %v1084, 0.0
  %v1101 = vmax.f32 %v1085, 0.0
  %v1102 = vmax.f32 %v1086, 0.0
  %v1103 = vmax.f32 %v1087, 0.0
  %v1104 = vmax.f32 %v1088, 0.0
  %v1105 = vmax.f32 %v1089, 0.0
  %v1106 = vmax.f32 %v1090, 0.0
  %v1107 = vmax.f32 %v1091, 0.0
  %v1108 = vmax.f32 %v1092, 0.0
  %v1109 = vmax.f32 %v1093, 0.0
  %v1110 = vpack.c.bf16 %v1095, %v1094
  %v1111 = vpack.c.bf16 %v1097, %v1096
  %v1112 = vpack.c.bf16 %v1099, %v1098
  %v1113 = vpack.c.bf16 %v1101, %v1100
  %v1114 = vpack.c.bf16 %v1103, %v1102
  %v1115 = vpack.c.bf16 %v1105, %v1104
  %v1116 = vpack.c.bf16 %v1107, %v1106
  %v1117 = vpack.c.bf16 %v1109, %v1108
  %v1126 = vunpack.c.l.b16 %v1110
  %v1127 = vunpack.c.h.b16 %v1110
  %v1128 = vunpack.c.l.b16 %v1111
  %v1129 = vunpack.c.h.b16 %v1111
  %v1130 = vunpack.c.l.b16 %v1112
  %v1131 = vunpack.c.h.b16 %v1112
  %v1132 = vunpack.c.l.b16 %v1113
  %v1133 = vunpack.c.h.b16 %v1113
  %v1134 = vunpack.c.l.b16 %v1114
  %v1135 = vunpack.c.h.b16 %v1114
  %v1136 = vunpack.c.l.b16 %v1115
  %v1137 = vunpack.c.h.b16 %v1115
  %v1138 = vunpack.c.l.b16 %v1116
  %v1139 = vunpack.c.h.b16 %v1116
  %v1140 = vunpack.c.l.b16 %v1117
  %v1141 = vunpack.c.h.b16 %v1117
  %v1142 = vpack.c.b16 %v1126, %v1126
  %v1143 = vpack.c.b16 %v1127, %v1127
  %v1144 = vpack.c.b16 %v1128, %v1128
  %v1145 = vpack.c.b16 %v1129, %v1129
  %v1146 = vpack.c.b16 %v1130, %v1130
  %v1147 = vpack.c.b16 %v1131, %v1131
  %v1148 = vpack.c.b16 %v1132, %v1132
  %v1149 = vpack.c.b16 %v1133, %v1133
  %v1150 = vpack.c.b16 %v1134, %v1134
  %v1151 = vpack.c.b16 %v1135, %v1135
  %v1152 = vpack.c.b16 %v1136, %v1136
  %v1153 = vpack.c.b16 %v1137, %v1137
  %v1154 = vpack.c.b16 %v1138, %v1138
  %v1155 = vpack.c.b16 %v1139, %v1139
  %v1156 = vpack.c.b16 %v1140, %v1140
  %v1157 = vpack.c.b16 %v1141, %v1141
  %vm1174 = vcmask 257024
  %1175 = vst.msk [vmem:[%s4] sm:$0xf] %vm1174, %v1142
  %1176 = vst.msk [vmem:[%s4 + $0x4] sm:$0xf] %vm1174, %v1143
  %1177 = vst.msk [vmem:[%s4 + $0x8] sm:$0xf] %vm1174, %v1144
  %1178 = vst.msk [vmem:[%s4 + $0xc] sm:$0xf] %vm1174, %v1145
  %1179 = vst.msk [vmem:[%s4 + $0x10] sm:$0xf] %vm1174, %v1146
  %1180 = vst.msk [vmem:[%s4 + $0x14] sm:$0xf] %vm1174, %v1147
  %1181 = vst.msk [vmem:[%s4 + $0x18] sm:$0xf] %vm1174, %v1148
  %1182 = vst.msk [vmem:[%s4 + $0x1c] sm:$0xf] %vm1174, %v1149
  %1183 = vst.msk [vmem:[%s4 + $0x20] sm:$0xf] %vm1174, %v1150
  %1184 = vst.msk [vmem:[%s4 + $0x24] sm:$0xf] %vm1174, %v1151
  %1185 = vst.msk [vmem:[%s4 + $0x28] sm:$0xf] %vm1174, %v1152
  %1186 = vst.msk [vmem:[%s4 + $0x2c] sm:$0xf] %vm1174, %v1153
  %1187 = vst.msk [vmem:[%s4 + $0x30] sm:$0xf] %vm1174, %v1154
  %1188 = vst.msk [vmem:[%s4 + $0x34] sm:$0xf] %vm1174, %v1155
  %1189 = vst.msk [vmem:[%s4 + $0x38] sm:$0xf] %vm1174, %v1156
  %1190 = vst.msk [vmem:[%s4 + $0x3c] sm:$0xf] %vm1174, %v1157
  // Predicated region
  $region18: #{nn_forward.6} parent=0 // pred_check
    _
  $region19: #{nn_forward.6} parent=0 // pred_check_branch
    %1192 = sbr.rel (0) target = $region21
  $region20: #{nn_forward.6} parent=0 // pred_region
    _
  $region21: #{nn_forward.6} parent=0 // pred_fallthru
    _
  // Predicated region
  $region22: #{nn_forward.6} parent=0 // pred_check
    _
  $region23: #{nn_forward.6} parent=0 // pred_check_branch
    %1194 = sbr.rel (0) target = $region25
  $region24: #{nn_forward.6} parent=0 // pred_region
    _
  $region25: #{nn_forward.6} parent=0 // pred_fallthru
    _

// kernel: nn_forward.7
$region0: #{nn_forward.7}
  #allocation0 [shape = 'u32[]', space=smem, size = 0x4, offset = 0x4, fixed_abs, tag = 'smem constant byte address 0x4 - core index']
  #allocation1 [shape = 'u32[144,128]{1,0:T(1,128)}', space=vmem, size = 0x12000, scoped, tag = 'internal scratch']
  %s0 = inlined_call_operand.vmem [shape: bf16[2,2048], index: 0, kind: input, shape index: {}]
  %s1 = inlined_call_operand.vmem [shape: bf16[2048,512], index: 1, kind: input, shape index: {}]
  %s2 = inlined_call_operand.vmem [shape: f32[1,512], index: 2, kind: input, shape index: {}]
  %s3 = inlined_call_operand.vmem [shape: bf16[512,32], index: 3, kind: input, shape index: {}]
  %s4 = inlined_call_operand.vmem [shape: f32[1,32], index: 4, kind: input, shape index: {}]
  %s5 = inlined_call_operand.vmem [shape: bf16[32,2], index: 5, kind: input, shape index: {}]
  %s6 = inlined_call_operand.vmem [shape: f32[1,2], index: 6, kind: input, shape index: {}]
  %s7 = inlined_call_operand.hbm [shape: f32[2,2], index: 7, kind: output, shape index: {}]
  %s8 = sld [smem:[#allocation0]]
  $region38: #{nn_forward.7} parent=0
    _
  %s10 = ssub.s32 1, %s8
  %s11 = scalar_select 0, %s10, %s8
  $region1: #{nn_forward.7} parent=0
    #allocation2 [shape = 'u8[1024]{0}', space=vmem, size = 0x400, scoped, tag = 'output window, operand 0, single buffered']
    #allocation3 [shape = 's32[1]{0}', space=sflag, size = 0x4, scoped, tag = 'scoped memory for nn_forward.7']
    %12 = vsyncpa [#allocation3], 0
    // Predicated region
    $region2: #{nn_forward.7} parent=1 // pred_check
      _
    $region3: #{nn_forward.7} parent=1 // pred_check_branch
      %14 = sbr.rel (0) target = $region5
    $region4: #{nn_forward.7} parent=1 // pred_region
      _
    $region5: #{nn_forward.7} parent=1 // pred_fallthru
      _
    // Predicated region
    $region6: #{nn_forward.7} parent=1 // pred_check
      _
    $region7: #{nn_forward.7} parent=1 // pred_check_branch
      %16 = sbr.rel (0) target = $region9
    $region8: #{nn_forward.7} parent=1 // pred_region
      _
    $region9: #{nn_forward.7} parent=1 // pred_fallthru
      _
    // Predicated region
    $region10: #{nn_forward.7} parent=1 // pred_check
      _
    $region11: #{nn_forward.7} parent=1 // pred_check_branch
      %18 = sbr.rel (0) target = $region13
    $region12: #{nn_forward.7} parent=1 // pred_region
      _
    $region13: #{nn_forward.7} parent=1 // pred_fallthru
      _
    // Predicated region
    $region14: #{nn_forward.7} parent=1 // pred_check
      _
    $region15: #{nn_forward.7} parent=1 // pred_check_branch
      %20 = sbr.rel (0) target = $region17
    $region16: #{nn_forward.7} parent=1 // pred_region
      _
    $region17: #{nn_forward.7} parent=1 // pred_fallthru
      _
    // Predicated region
    $region18: #{nn_forward.7} parent=1 // pred_check
      _
    $region19: #{nn_forward.7} parent=1 // pred_check_branch
      %22 = sbr.rel (0) target = $region21
    $region20: #{nn_forward.7} parent=1 // pred_region
      _
    $region21: #{nn_forward.7} parent=1 // pred_fallthru
      _
    // Predicated region
    $region22: #{nn_forward.7} parent=1 // pred_check
      _
    $region23: #{nn_forward.7} parent=1 // pred_check_branch
      %24 = sbr.rel (0) target = $region25
    $region24: #{nn_forward.7} parent=1 // pred_region
      _
    $region25: #{nn_forward.7} parent=1 // pred_fallthru
      _
    // Predicated region
    $region26: #{nn_forward.7} parent=1 // pred_check
      _
    $region27: #{nn_forward.7} parent=1 // pred_check_branch
      %26 = sbr.rel (0) target = $region29
    $region28: #{nn_forward.7} parent=1 // pred_region
      _
    $region29: #{nn_forward.7} parent=1 // pred_fallthru
      _
    %v28 = vld [vmem:[%s0] sm:$0xff]
    %v29 = vld [vmem:[%s0 + $0x8] sm:$0xff]
    %v30 = vld [vmem:[%s1] sm:$0xff]
    %v31 = vld [vmem:[%s1 + $0x8] sm:$0xff]
    %v32 = vld [vmem:[%s1 + $0x10] sm:$0xff]
    %v33 = vld [vmem:[%s1 + $0x18] sm:$0xff]
    %v34 = vld [vmem:[%s1 + $0x20] sm:$0xff]
    %v35 = vld [vmem:[%s1 + $0x28] sm:$0xff]
    %v36 = vld [vmem:[%s1 + $0x30] sm:$0xff]
    %v37 = vld [vmem:[%s1 + $0x38] sm:$0xff]
    %v38 = vld [vmem:[%s1 + $0x40] sm:$0xff]
    %v39 = vld [vmem:[%s1 + $0x48] sm:$0xff]
    %v40 = vld [vmem:[%s1 + $0x50] sm:$0xff]
    %v41 = vld [vmem:[%s1 + $0x58] sm:$0xff]
    %v42 = vld [vmem:[%s1 + $0x60] sm:$0xff]
    %v43 = vld [vmem:[%s1 + $0x68] sm:$0xff]
    %v44 = vld [vmem:[%s1 + $0x70] sm:$0xff]
    %v45 = vld [vmem:[%s1 + $0x78] sm:$0xff]
    %v46 = vld [vmem:[%s1 + $0x80] sm:$0xff]
    %v47 = vld [vmem:[%s1 + $0x88] sm:$0xff]
    %v48 = vld [vmem:[%s1 + $0x90] sm:$0xff]
    %v49 = vld [vmem:[%s1 + $0x98] sm:$0xff]
    %v50 = vld [vmem:[%s1 + $0xa0] sm:$0xff]
    %v51 = vld [vmem:[%s1 + $0xa8] sm:$0xff]
    %v52 = vld [vmem:[%s1 + $0xb0] sm:$0xff]
    %v53 = vld [vmem:[%s1 + $0xb8] sm:$0xff]
    %v54 = vld [vmem:[%s1 + $0xc0] sm:$0xff]
    %v55 = vld [vmem:[%s1 + $0xc8] sm:$0xff]
    %v56 = vld [vmem:[%s1 + $0xd0] sm:$0xff]
    %v57 = vld [vmem:[%s1 + $0xd8] sm:$0xff]
    %v58 = vld [vmem:[%s1 + $0xe0] sm:$0xff]
    %v59 = vld [vmem:[%s1 + $0xe8] sm:$0xff]
    %v60 = vld [vmem:[%s1 + $0xf0] sm:$0xff]
    %v61 = vld [vmem:[%s1 + $0xf8] sm:$0xff]
    %v62 = vld [vmem:[%s1 + $0x100] sm:$0xff]
    %v63 = vld [vmem:[%s1 + $0x108] sm:$0xff]
    %v64 = vld [vmem:[%s1 + $0x110] sm:$0xff]
    %v65 = vld [vmem:[%s1 + $0x118] sm:$0xff]
    %v66 = vld [vmem:[%s1 + $0x120] sm:$0xff]
    %v67 = vld [vmem:[%s1 + $0x128] sm:$0xff]
    %v68 = vld [vmem:[%s1 + $0x130] sm:$0xff]
    %v69 = vld [vmem:[%s1 + $0x138] sm:$0xff]
    %v70 = vld [vmem:[%s1 + $0x140] sm:$0xff]
    %v71 = vld [vmem:[%s1 + $0x148] sm:$0xff]
    %v72 = vld [vmem:[%s1 + $0x150] sm:$0xff]
    %v73 = vld [vmem:[%s1 + $0x158] sm:$0xff]
    %v74 = vld [vmem:[%s1 + $0x160] sm:$0xff]
    %v75 = vld [vmem:[%s1 + $0x168] sm:$0xff]
    %v76 = vld [vmem:[%s1 + $0x170] sm:$0xff]
    %v77 = vld [vmem:[%s1 + $0x178] sm:$0xff]
    %v78 = vld [vmem:[%s1 + $0x180] sm:$0xff]
    %v79 = vld [vmem:[%s1 + $0x188] sm:$0xff]
    %v80 = vld [vmem:[%s1 + $0x190] sm:$0xff]
    %v81 = vld [vmem:[%s1 + $0x198] sm:$0xff]
    %v82 = vld [vmem:[%s1 + $0x1a0] sm:$0xff]
    %v83 = vld [vmem:[%s1 + $0x1a8] sm:$0xff]
    %v84 = vld [vmem:[%s1 + $0x1b0] sm:$0xff]
    %v85 = vld [vmem:[%s1 + $0x1b8] sm:$0xff]
    %v86 = vld [vmem:[%s1 + $0x1c0] sm:$0xff]
    %v87 = vld [vmem:[%s1 + $0x1c8] sm:$0xff]
    %v88 = vld [vmem:[%s1 + $0x1d0] sm:$0xff]
    %v89 = vld [vmem:[%s1 + $0x1d8] sm:$0xff]
    %v90 = vld [vmem:[%s1 + $0x1e0] sm:$0xff]
    %v91 = vld [vmem:[%s1 + $0x1e8] sm:$0xff]
    %v92 = vld [vmem:[%s1 + $0x1f0] sm:$0xff]
    %v93 = vld [vmem:[%s1 + $0x1f8] sm:$0xff]
    %v94 = vld [vmem:[%s1 + $0x200] sm:$0xff]
    %v95 = vld [vmem:[%s1 + $0x208] sm:$0xff]
    %v96 = vld [vmem:[%s1 + $0x210] sm:$0xff]
    %v97 = vld [vmem:[%s1 + $0x218] sm:$0xff]
    %v98 = vld [vmem:[%s1 + $0x220] sm:$0xff]
    %v99 = vld [vmem:[%s1 + $0x228] sm:$0xff]
    %v100 = vld [vmem:[%s1 + $0x230] sm:$0xff]
    %v101 = vld [vmem:[%s1 + $0x238] sm:$0xff]
    %v102 = vld [vmem:[%s1 + $0x240] sm:$0xff]
    %v103 = vld [vmem:[%s1 + $0x248] sm:$0xff]
    %v104 = vld [vmem:[%s1 + $0x250] sm:$0xff]
    %v105 = vld [vmem:[%s1 + $0x258] sm:$0xff]
    %v106 = vld [vmem:[%s1 + $0x260] sm:$0xff]
    %v107 = vld [vmem:[%s1 + $0x268] sm:$0xff]
    %v108 = vld [vmem:[%s1 + $0x270] sm:$0xff]
    %v109 = vld [vmem:[%s1 + $0x278] sm:$0xff]
    %v110 = vld [vmem:[%s1 + $0x280] sm:$0xff]
    %v111 = vld [vmem:[%s1 + $0x288] sm:$0xff]
    %v112 = vld [vmem:[%s1 + $0x290] sm:$0xff]
    %v113 = vld [vmem:[%s1 + $0x298] sm:$0xff]
    %v114 = vld [vmem:[%s1 + $0x2a0] sm:$0xff]
    %v115 = vld [vmem:[%s1 + $0x2a8] sm:$0xff]
    %v116 = vld [vmem:[%s1 + $0x2b0] sm:$0xff]
    %v117 = vld [vmem:[%s1 + $0x2b8] sm:$0xff]
    %v118 = vld [vmem:[%s1 + $0x2c0] sm:$0xff]
    %v119 = vld [vmem:[%s1 + $0x2c8] sm:$0xff]
    %v120 = vld [vmem:[%s1 + $0x2d0] sm:$0xff]
    %v121 = vld [vmem:[%s1 + $0x2d8] sm:$0xff]
    %v122 = vld [vmem:[%s1 + $0x2e0] sm:$0xff]
    %v123 = vld [vmem:[%s1 + $0x2e8] sm:$0xff]
    %v124 = vld [vmem:[%s1 + $0x2f0] sm:$0xff]
    %v125 = vld [vmem:[%s1 + $0x2f8] sm:$0xff]
    %v126 = vld [vmem:[%s1 + $0x300] sm:$0xff]
    %v127 = vld [vmem:[%s1 + $0x308] sm:$0xff]
    %v128 = vld [vmem:[%s1 + $0x310] sm:$0xff]
    %v129 = vld [vmem:[%s1 + $0x318] sm:$0xff]
    %v130 = vld [vmem:[%s1 + $0x320] sm:$0xff]
    %v131 = vld [vmem:[%s1 + $0x328] sm:$0xff]
    %v132 = vld [vmem:[%s1 + $0x330] sm:$0xff]
    %v133 = vld [vmem:[%s1 + $0x338] sm:$0xff]
    %v134 = vld [vmem:[%s1 + $0x340] sm:$0xff]
    %v135 = vld [vmem:[%s1 + $0x348] sm:$0xff]
    %v136 = vld [vmem:[%s1 + $0x350] sm:$0xff]
    %v137 = vld [vmem:[%s1 + $0x358] sm:$0xff]
    %v138 = vld [vmem:[%s1 + $0x360] sm:$0xff]
    %v139 = vld [vmem:[%s1 + $0x368] sm:$0xff]
    %v140 = vld [vmem:[%s1 + $0x370] sm:$0xff]
    %v141 = vld [vmem:[%s1 + $0x378] sm:$0xff]
    %v142 = vld [vmem:[%s1 + $0x380] sm:$0xff]
    %v143 = vld [vmem:[%s1 + $0x388] sm:$0xff]
    %v144 = vld [vmem:[%s1 + $0x390] sm:$0xff]
    %v145 = vld [vmem:[%s1 + $0x398] sm:$0xff]
    %v146 = vld [vmem:[%s1 + $0x3a0] sm:$0xff]
    %v147 = vld [vmem:[%s1 + $0x3a8] sm:$0xff]
    %v148 = vld [vmem:[%s1 + $0x3b0] sm:$0xff]
    %v149 = vld [vmem:[%s1 + $0x3b8] sm:$0xff]
    %v150 = vld [vmem:[%s1 + $0x3c0] sm:$0xff]
    %v151 = vld [vmem:[%s1 + $0x3c8] sm:$0xff]
    %v152 = vld [vmem:[%s1 + $0x3d0] sm:$0xff]
    %v153 = vld [vmem:[%s1 + $0x3d8] sm:$0xff]
    %v154 = vld [vmem:[%s1 + $0x3e0] sm:$0xff]
    %v155 = vld [vmem:[%s1 + $0x3e8] sm:$0xff]
    %v156 = vld [vmem:[%s1 + $0x3f0] sm:$0xff]
    %v157 = vld [vmem:[%s1 + $0x3f8] sm:$0xff]
    %v158 = vld [vmem:[%s1 + $0x400] sm:$0xff]
    %v159 = vld [vmem:[%s1 + $0x408] sm:$0xff]
    %v160 = vld [vmem:[%s1 + $0x410] sm:$0xff]
    %v161 = vld [vmem:[%s1 + $0x418] sm:$0xff]
    %v162 = vld [vmem:[%s1 + $0x420] sm:$0xff]
    %v163 = vld [vmem:[%s1 + $0x428] sm:$0xff]
    %v164 = vld [vmem:[%s1 + $0x430] sm:$0xff]
    %v165 = vld [vmem:[%s1 + $0x438] sm:$0xff]
    %v166 = vld [vmem:[%s1 + $0x440] sm:$0xff]
    %v167 = vld [vmem:[%s1 + $0x448] sm:$0xff]
    %v168 = vld [vmem:[%s1 + $0x450] sm:$0xff]
    %v169 = vld [vmem:[%s1 + $0x458] sm:$0xff]
    %v170 = vld [vmem:[%s1 + $0x460] sm:$0xff]
    %v171 = vld [vmem:[%s1 + $0x468] sm:$0xff]
    %v172 = vld [vmem:[%s1 + $0x470] sm:$0xff]
    %v173 = vld [vmem:[%s1 + $0x478] sm:$0xff]
    %v174 = vld [vmem:[%s1 + $0x480] sm:$0xff]
    %v175 = vld [vmem:[%s1 + $0x488] sm:$0xff]
    %v176 = vld [vmem:[%s1 + $0x490] sm:$0xff]
    %v177 = vld [vmem:[%s1 + $0x498] sm:$0xff]
    %v178 = vld [vmem:[%s1 + $0x4a0] sm:$0xff]
    %v179 = vld [vmem:[%s1 + $0x4a8] sm:$0xff]
    %v180 = vld [vmem:[%s1 + $0x4b0] sm:$0xff]
    %v181 = vld [vmem:[%s1 + $0x4b8] sm:$0xff]
    %v182 = vld [vmem:[%s1 + $0x4c0] sm:$0xff]
    %v183 = vld [vmem:[%s1 + $0x4c8] sm:$0xff]
    %v184 = vld [vmem:[%s1 + $0x4d0] sm:$0xff]
    %v185 = vld [vmem:[%s1 + $0x4d8] sm:$0xff]
    %v186 = vld [vmem:[%s1 + $0x4e0] sm:$0xff]
    %v187 = vld [vmem:[%s1 + $0x4e8] sm:$0xff]
    %v188 = vld [vmem:[%s1 + $0x4f0] sm:$0xff]
    %v189 = vld [vmem:[%s1 + $0x4f8] sm:$0xff]
    %v190 = vld [vmem:[%s1 + $0x500] sm:$0xff]
    %v191 = vld [vmem:[%s1 + $0x508] sm:$0xff]
    %v192 = vld [vmem:[%s1 + $0x510] sm:$0xff]
    %v193 = vld [vmem:[%s1 + $0x518] sm:$0xff]
    %v194 = vld [vmem:[%s1 + $0x520] sm:$0xff]
    %v195 = vld [vmem:[%s1 + $0x528] sm:$0xff]
    %v196 = vld [vmem:[%s1 + $0x530] sm:$0xff]
    %v197 = vld [vmem:[%s1 + $0x538] sm:$0xff]
    %v198 = vld [vmem:[%s1 + $0x540] sm:$0xff]
    %v199 = vld [vmem:[%s1 + $0x548] sm:$0xff]
    %v200 = vld [vmem:[%s1 + $0x550] sm:$0xff]
    %v201 = vld [vmem:[%s1 + $0x558] sm:$0xff]
    %v202 = vld [vmem:[%s1 + $0x560] sm:$0xff]
    %v203 = vld [vmem:[%s1 + $0x568] sm:$0xff]
    %v204 = vld [vmem:[%s1 + $0x570] sm:$0xff]
    %v205 = vld [vmem:[%s1 + $0x578] sm:$0xff]
    %v206 = vld [vmem:[%s1 + $0x580] sm:$0xff]
    %v207 = vld [vmem:[%s1 + $0x588] sm:$0xff]
    %v208 = vld [vmem:[%s1 + $0x590] sm:$0xff]
    %v209 = vld [vmem:[%s1 + $0x598] sm:$0xff]
    %v210 = vld [vmem:[%s1 + $0x5a0] sm:$0xff]
    %v211 = vld [vmem:[%s1 + $0x5a8] sm:$0xff]
    %v212 = vld [vmem:[%s1 + $0x5b0] sm:$0xff]
    %v213 = vld [vmem:[%s1 + $0x5b8] sm:$0xff]
    %v214 = vld [vmem:[%s1 + $0x5c0] sm:$0xff]
    %v215 = vld [vmem:[%s1 + $0x5c8] sm:$0xff]
    %v216 = vld [vmem:[%s1 + $0x5d0] sm:$0xff]
    %v217 = vld [vmem:[%s1 + $0x5d8] sm:$0xff]
    %v218 = vld [vmem:[%s1 + $0x5e0] sm:$0xff]
    %v219 = vld [vmem:[%s1 + $0x5e8] sm:$0xff]
    %v220 = vld [vmem:[%s1 + $0x5f0] sm:$0xff]
    %v221 = vld [vmem:[%s1 + $0x5f8] sm:$0xff]
    %v222 = vld [vmem:[%s1 + $0x600] sm:$0xff]
    %v223 = vld [vmem:[%s1 + $0x608] sm:$0xff]
    %v224 = vld [vmem:[%s1 + $0x610] sm:$0xff]
    %v225 = vld [vmem:[%s1 + $0x618] sm:$0xff]
    %v226 = vld [vmem:[%s1 + $0x620] sm:$0xff]
    %v227 = vld [vmem:[%s1 + $0x628] sm:$0xff]
    %v228 = vld [vmem:[%s1 + $0x630] sm:$0xff]
    %v229 = vld [vmem:[%s1 + $0x638] sm:$0xff]
    %v230 = vld [vmem:[%s1 + $0x640] sm:$0xff]
    %v231 = vld [vmem:[%s1 + $0x648] sm:$0xff]
    %v232 = vld [vmem:[%s1 + $0x650] sm:$0xff]
    %v233 = vld [vmem:[%s1 + $0x658] sm:$0xff]
    %v234 = vld [vmem:[%s1 + $0x660] sm:$0xff]
    %v235 = vld [vmem:[%s1 + $0x668] sm:$0xff]
    %v236 = vld [vmem:[%s1 + $0x670] sm:$0xff]
    %v237 = vld [vmem:[%s1 + $0x678] sm:$0xff]
    %v238 = vld [vmem:[%s1 + $0x680] sm:$0xff]
    %v239 = vld [vmem:[%s1 + $0x688] sm:$0xff]
    %v240 = vld [vmem:[%s1 + $0x690] sm:$0xff]
    %v241 = vld [vmem:[%s1 + $0x698] sm:$0xff]
    %v242 = vld [vmem:[%s1 + $0x6a0] sm:$0xff]
    %v243 = vld [vmem:[%s1 + $0x6a8] sm:$0xff]
    %v244 = vld [vmem:[%s1 + $0x6b0] sm:$0xff]
    %v245 = vld [vmem:[%s1 + $0x6b8] sm:$0xff]
    %v246 = vld [vmem:[%s1 + $0x6c0] sm:$0xff]
    %v247 = vld [vmem:[%s1 + $0x6c8] sm:$0xff]
    %v248 = vld [vmem:[%s1 + $0x6d0] sm:$0xff]
    %v249 = vld [vmem:[%s1 + $0x6d8] sm:$0xff]
    %v250 = vld [vmem:[%s1 + $0x6e0] sm:$0xff]
    %v251 = vld [vmem:[%s1 + $0x6e8] sm:$0xff]
    %v252 = vld [vmem:[%s1 + $0x6f0] sm:$0xff]
    %v253 = vld [vmem:[%s1 + $0x6f8] sm:$0xff]
    %v254 = vld [vmem:[%s1 + $0x700] sm:$0xff]
    %v255 = vld [vmem:[%s1 + $0x708] sm:$0xff]
    %v256 = vld [vmem:[%s1 + $0x710] sm:$0xff]
    %v257 = vld [vmem:[%s1 + $0x718] sm:$0xff]
    %v258 = vld [vmem:[%s1 + $0x720] sm:$0xff]
    %v259 = vld [vmem:[%s1 + $0x728] sm:$0xff]
    %v260 = vld [vmem:[%s1 + $0x730] sm:$0xff]
    %v261 = vld [vmem:[%s1 + $0x738] sm:$0xff]
    %v262 = vld [vmem:[%s1 + $0x740] sm:$0xff]
    %v263 = vld [vmem:[%s1 + $0x748] sm:$0xff]
    %v264 = vld [vmem:[%s1 + $0x750] sm:$0xff]
    %v265 = vld [vmem:[%s1 + $0x758] sm:$0xff]
    %v266 = vld [vmem:[%s1 + $0x760] sm:$0xff]
    %v267 = vld [vmem:[%s1 + $0x768] sm:$0xff]
    %v268 = vld [vmem:[%s1 + $0x770] sm:$0xff]
    %v269 = vld [vmem:[%s1 + $0x778] sm:$0xff]
    %v270 = vld [vmem:[%s1 + $0x780] sm:$0xff]
    %v271 = vld [vmem:[%s1 + $0x788] sm:$0xff]
    %v272 = vld [vmem:[%s1 + $0x790] sm:$0xff]
    %v273 = vld [vmem:[%s1 + $0x798] sm:$0xff]
    %v274 = vld [vmem:[%s1 + $0x7a0] sm:$0xff]
    %v275 = vld [vmem:[%s1 + $0x7a8] sm:$0xff]
    %v276 = vld [vmem:[%s1 + $0x7b0] sm:$0xff]
    %v277 = vld [vmem:[%s1 + $0x7b8] sm:$0xff]
    %v278 = vld [vmem:[%s1 + $0x7c0] sm:$0xff]
    %v279 = vld [vmem:[%s1 + $0x7c8] sm:$0xff]
    %v280 = vld [vmem:[%s1 + $0x7d0] sm:$0xff]
    %v281 = vld [vmem:[%s1 + $0x7d8] sm:$0xff]
    %v282 = vld [vmem:[%s1 + $0x7e0] sm:$0xff]
    %v283 = vld [vmem:[%s1 + $0x7e8] sm:$0xff]
    %v284 = vld [vmem:[%s1 + $0x7f0] sm:$0xff]
    %v285 = vld [vmem:[%s1 + $0x7f8] sm:$0xff]
    %v286 = vld [vmem:[%s1 + $0x800] sm:$0xff]
    %v287 = vld [vmem:[%s1 + $0x808] sm:$0xff]
    %v288 = vld [vmem:[%s1 + $0x810] sm:$0xff]
    %v289 = vld [vmem:[%s1 + $0x818] sm:$0xff]
    %v290 = vld [vmem:[%s1 + $0x820] sm:$0xff]
    %v291 = vld [vmem:[%s1 + $0x828] sm:$0xff]
    %v292 = vld [vmem:[%s1 + $0x830] sm:$0xff]
    %v293 = vld [vmem:[%s1 + $0x838] sm:$0xff]
    %v294 = vld [vmem:[%s1 + $0x840] sm:$0xff]
    %v295 = vld [vmem:[%s1 + $0x848] sm:$0xff]
    %v296 = vld [vmem:[%s1 + $0x850] sm:$0xff]
    %v297 = vld [vmem:[%s1 + $0x858] sm:$0xff]
    %v298 = vld [vmem:[%s1 + $0x860] sm:$0xff]
    %v299 = vld [vmem:[%s1 + $0x868] sm:$0xff]
    %v300 = vld [vmem:[%s1 + $0x870] sm:$0xff]
    %v301 = vld [vmem:[%s1 + $0x878] sm:$0xff]
    %v302 = vld [vmem:[%s1 + $0x880] sm:$0xff]
    %v303 = vld [vmem:[%s1 + $0x888] sm:$0xff]
    %v304 = vld [vmem:[%s1 + $0x890] sm:$0xff]
    %v305 = vld [vmem:[%s1 + $0x898] sm:$0xff]
    %v306 = vld [vmem:[%s1 + $0x8a0] sm:$0xff]
    %v307 = vld [vmem:[%s1 + $0x8a8] sm:$0xff]
    %v308 = vld [vmem:[%s1 + $0x8b0] sm:$0xff]
    %v309 = vld [vmem:[%s1 + $0x8b8] sm:$0xff]
    %v310 = vld [vmem:[%s1 + $0x8c0] sm:$0xff]
    %v311 = vld [vmem:[%s1 + $0x8c8] sm:$0xff]
    %v312 = vld [vmem:[%s1 + $0x8d0] sm:$0xff]
    %v313 = vld [vmem:[%s1 + $0x8d8] sm:$0xff]
    %v314 = vld [vmem:[%s1 + $0x8e0] sm:$0xff]
    %v315 = vld [vmem:[%s1 + $0x8e8] sm:$0xff]
    %v316 = vld [vmem:[%s1 + $0x8f0] sm:$0xff]
    %v317 = vld [vmem:[%s1 + $0x8f8] sm:$0xff]
    %v318 = vld [vmem:[%s1 + $0x900] sm:$0xff]
    %v319 = vld [vmem:[%s1 + $0x908] sm:$0xff]
    %v320 = vld [vmem:[%s1 + $0x910] sm:$0xff]
    %v321 = vld [vmem:[%s1 + $0x918] sm:$0xff]
    %v322 = vld [vmem:[%s1 + $0x920] sm:$0xff]
    %v323 = vld [vmem:[%s1 + $0x928] sm:$0xff]
    %v324 = vld [vmem:[%s1 + $0x930] sm:$0xff]
    %v325 = vld [vmem:[%s1 + $0x938] sm:$0xff]
    %v326 = vld [vmem:[%s1 + $0x940] sm:$0xff]
    %v327 = vld [vmem:[%s1 + $0x948] sm:$0xff]
    %v328 = vld [vmem:[%s1 + $0x950] sm:$0xff]
    %v329 = vld [vmem:[%s1 + $0x958] sm:$0xff]
    %v330 = vld [vmem:[%s1 + $0x960] sm:$0xff]
    %v331 = vld [vmem:[%s1 + $0x968] sm:$0xff]
    %v332 = vld [vmem:[%s1 + $0x970] sm:$0xff]
    %v333 = vld [vmem:[%s1 + $0x978] sm:$0xff]
    %v334 = vld [vmem:[%s1 + $0x980] sm:$0xff]
    %v335 = vld [vmem:[%s1 + $0x988] sm:$0xff]
    %v336 = vld [vmem:[%s1 + $0x990] sm:$0xff]
    %v337 = vld [vmem:[%s1 + $0x998] sm:$0xff]
    %v338 = vld [vmem:[%s1 + $0x9a0] sm:$0xff]
    %v339 = vld [vmem:[%s1 + $0x9a8] sm:$0xff]
    %v340 = vld [vmem:[%s1 + $0x9b0] sm:$0xff]
    %v341 = vld [vmem:[%s1 + $0x9b8] sm:$0xff]
    %v342 = vld [vmem:[%s1 + $0x9c0] sm:$0xff]
    %v343 = vld [vmem:[%s1 + $0x9c8] sm:$0xff]
    %v344 = vld [vmem:[%s1 + $0x9d0] sm:$0xff]
    %v345 = vld [vmem:[%s1 + $0x9d8] sm:$0xff]
    %v346 = vld [vmem:[%s1 + $0x9e0] sm:$0xff]
    %v347 = vld [vmem:[%s1 + $0x9e8] sm:$0xff]
    %v348 = vld [vmem:[%s1 + $0x9f0] sm:$0xff]
    %v349 = vld [vmem:[%s1 + $0x9f8] sm:$0xff]
    %v350 = vld [vmem:[%s1 + $0xa00] sm:$0xff]
    %v351 = vld [vmem:[%s1 + $0xa08] sm:$0xff]
    %v352 = vld [vmem:[%s1 + $0xa10] sm:$0xff]
    %v353 = vld [vmem:[%s1 + $0xa18] sm:$0xff]
    %v354 = vld [vmem:[%s1 + $0xa20] sm:$0xff]
    %v355 = vld [vmem:[%s1 + $0xa28] sm:$0xff]
    %v356 = vld [vmem:[%s1 + $0xa30] sm:$0xff]
    %v357 = vld [vmem:[%s1 + $0xa38] sm:$0xff]
    %v358 = vld [vmem:[%s1 + $0xa40] sm:$0xff]
    %v359 = vld [vmem:[%s1 + $0xa48] sm:$0xff]
    %v360 = vld [vmem:[%s1 + $0xa50] sm:$0xff]
    %v361 = vld [vmem:[%s1 + $0xa58] sm:$0xff]
    %v362 = vld [vmem:[%s1 + $0xa60] sm:$0xff]
    %v363 = vld [vmem:[%s1 + $0xa68] sm:$0xff]
    %v364 = vld [vmem:[%s1 + $0xa70] sm:$0xff]
    %v365 = vld [vmem:[%s1 + $0xa78] sm:$0xff]
    %v366 = vld [vmem:[%s1 + $0xa80] sm:$0xff]
    %v367 = vld [vmem:[%s1 + $0xa88] sm:$0xff]
    %v368 = vld [vmem:[%s1 + $0xa90] sm:$0xff]
    %v369 = vld [vmem:[%s1 + $0xa98] sm:$0xff]
    %v370 = vld [vmem:[%s1 + $0xaa0] sm:$0xff]
    %v371 = vld [vmem:[%s1 + $0xaa8] sm:$0xff]
    %v372 = vld [vmem:[%s1 + $0xab0] sm:$0xff]
    %v373 = vld [vmem:[%s1 + $0xab8] sm:$0xff]
    %v374 = vld [vmem:[%s1 + $0xac0] sm:$0xff]
    %v375 = vld [vmem:[%s1 + $0xac8] sm:$0xff]
    %v376 = vld [vmem:[%s1 + $0xad0] sm:$0xff]
    %v377 = vld [vmem:[%s1 + $0xad8] sm:$0xff]
    %v378 = vld [vmem:[%s1 + $0xae0] sm:$0xff]
    %v379 = vld [vmem:[%s1 + $0xae8] sm:$0xff]
    %v380 = vld [vmem:[%s1 + $0xaf0] sm:$0xff]
    %v381 = vld [vmem:[%s1 + $0xaf8] sm:$0xff]
    %v382 = vld [vmem:[%s1 + $0xb00] sm:$0xff]
    %v383 = vld [vmem:[%s1 + $0xb08] sm:$0xff]
    %v384 = vld [vmem:[%s1 + $0xb10] sm:$0xff]
    %v385 = vld [vmem:[%s1 + $0xb18] sm:$0xff]
    %v386 = vld [vmem:[%s1 + $0xb20] sm:$0xff]
    %v387 = vld [vmem:[%s1 + $0xb28] sm:$0xff]
    %v388 = vld [vmem:[%s1 + $0xb30] sm:$0xff]
    %v389 = vld [vmem:[%s1 + $0xb38] sm:$0xff]
    %v390 = vld [vmem:[%s1 + $0xb40] sm:$0xff]
    %v391 = vld [vmem:[%s1 + $0xb48] sm:$0xff]
    %v392 = vld [vmem:[%s1 + $0xb50] sm:$0xff]
    %v393 = vld [vmem:[%s1 + $0xb58] sm:$0xff]
    %v394 = vld [vmem:[%s1 + $0xb60] sm:$0xff]
    %v395 = vld [vmem:[%s1 + $0xb68] sm:$0xff]
    %v396 = vld [vmem:[%s1 + $0xb70] sm:$0xff]
    %v397 = vld [vmem:[%s1 + $0xb78] sm:$0xff]
    %v398 = vld [vmem:[%s1 + $0xb80] sm:$0xff]
    %v399 = vld [vmem:[%s1 + $0xb88] sm:$0xff]
    %v400 = vld [vmem:[%s1 + $0xb90] sm:$0xff]
    %v401 = vld [vmem:[%s1 + $0xb98] sm:$0xff]
    %v402 = vld [vmem:[%s1 + $0xba0] sm:$0xff]
    %v403 = vld [vmem:[%s1 + $0xba8] sm:$0xff]
    %v404 = vld [vmem:[%s1 + $0xbb0] sm:$0xff]
    %v405 = vld [vmem:[%s1 + $0xbb8] sm:$0xff]
    %v406 = vld [vmem:[%s1 + $0xbc0] sm:$0xff]
    %v407 = vld [vmem:[%s1 + $0xbc8] sm:$0xff]
    %v408 = vld [vmem:[%s1 + $0xbd0] sm:$0xff]
    %v409 = vld [vmem:[%s1 + $0xbd8] sm:$0xff]
    %v410 = vld [vmem:[%s1 + $0xbe0] sm:$0xff]
    %v411 = vld [vmem:[%s1 + $0xbe8] sm:$0xff]
    %v412 = vld [vmem:[%s1 + $0xbf0] sm:$0xff]
    %v413 = vld [vmem:[%s1 + $0xbf8] sm:$0xff]
    %v414 = vld [vmem:[%s1 + $0xc00] sm:$0xff]
    %v415 = vld [vmem:[%s1 + $0xc08] sm:$0xff]
    %v416 = vld [vmem:[%s1 + $0xc10] sm:$0xff]
    %v417 = vld [vmem:[%s1 + $0xc18] sm:$0xff]
    %v418 = vld [vmem:[%s1 + $0xc20] sm:$0xff]
    %v419 = vld [vmem:[%s1 + $0xc28] sm:$0xff]
    %v420 = vld [vmem:[%s1 + $0xc30] sm:$0xff]
    %v421 = vld [vmem:[%s1 + $0xc38] sm:$0xff]
    %v422 = vld [vmem:[%s1 + $0xc40] sm:$0xff]
    %v423 = vld [vmem:[%s1 + $0xc48] sm:$0xff]
    %v424 = vld [vmem:[%s1 + $0xc50] sm:$0xff]
    %v425 = vld [vmem:[%s1 + $0xc58] sm:$0xff]
    %v426 = vld [vmem:[%s1 + $0xc60] sm:$0xff]
    %v427 = vld [vmem:[%s1 + $0xc68] sm:$0xff]
    %v428 = vld [vmem:[%s1 + $0xc70] sm:$0xff]
    %v429 = vld [vmem:[%s1 + $0xc78] sm:$0xff]
    %v430 = vld [vmem:[%s1 + $0xc80] sm:$0xff]
    %v431 = vld [vmem:[%s1 + $0xc88] sm:$0xff]
    %v432 = vld [vmem:[%s1 + $0xc90] sm:$0xff]
    %v433 = vld [vmem:[%s1 + $0xc98] sm:$0xff]
    %v434 = vld [vmem:[%s1 + $0xca0] sm:$0xff]
    %v435 = vld [vmem:[%s1 + $0xca8] sm:$0xff]
    %v436 = vld [vmem:[%s1 + $0xcb0] sm:$0xff]
    %v437 = vld [vmem:[%s1 + $0xcb8] sm:$0xff]
    %v438 = vld [vmem:[%s1 + $0xcc0] sm:$0xff]
    %v439 = vld [vmem:[%s1 + $0xcc8] sm:$0xff]
    %v440 = vld [vmem:[%s1 + $0xcd0] sm:$0xff]
    %v441 = vld [vmem:[%s1 + $0xcd8] sm:$0xff]
    %v442 = vld [vmem:[%s1 + $0xce0] sm:$0xff]
    %v443 = vld [vmem:[%s1 + $0xce8] sm:$0xff]
    %v444 = vld [vmem:[%s1 + $0xcf0] sm:$0xff]
    %v445 = vld [vmem:[%s1 + $0xcf8] sm:$0xff]
    %v446 = vld [vmem:[%s1 + $0xd00] sm:$0xff]
    %v447 = vld [vmem:[%s1 + $0xd08] sm:$0xff]
    %v448 = vld [vmem:[%s1 + $0xd10] sm:$0xff]
    %v449 = vld [vmem:[%s1 + $0xd18] sm:$0xff]
    %v450 = vld [vmem:[%s1 + $0xd20] sm:$0xff]
    %v451 = vld [vmem:[%s1 + $0xd28] sm:$0xff]
    %v452 = vld [vmem:[%s1 + $0xd30] sm:$0xff]
    %v453 = vld [vmem:[%s1 + $0xd38] sm:$0xff]
    %v454 = vld [vmem:[%s1 + $0xd40] sm:$0xff]
    %v455 = vld [vmem:[%s1 + $0xd48] sm:$0xff]
    %v456 = vld [vmem:[%s1 + $0xd50] sm:$0xff]
    %v457 = vld [vmem:[%s1 + $0xd58] sm:$0xff]
    %v458 = vld [vmem:[%s1 + $0xd60] sm:$0xff]
    %v459 = vld [vmem:[%s1 + $0xd68] sm:$0xff]
    %v460 = vld [vmem:[%s1 + $0xd70] sm:$0xff]
    %v461 = vld [vmem:[%s1 + $0xd78] sm:$0xff]
    %v462 = vld [vmem:[%s1 + $0xd80] sm:$0xff]
    %v463 = vld [vmem:[%s1 + $0xd88] sm:$0xff]
    %v464 = vld [vmem:[%s1 + $0xd90] sm:$0xff]
    %v465 = vld [vmem:[%s1 + $0xd98] sm:$0xff]
    %v466 = vld [vmem:[%s1 + $0xda0] sm:$0xff]
    %v467 = vld [vmem:[%s1 + $0xda8] sm:$0xff]
    %v468 = vld [vmem:[%s1 + $0xdb0] sm:$0xff]
    %v469 = vld [vmem:[%s1 + $0xdb8] sm:$0xff]
    %v470 = vld [vmem:[%s1 + $0xdc0] sm:$0xff]
    %v471 = vld [vmem:[%s1 + $0xdc8] sm:$0xff]
    %v472 = vld [vmem:[%s1 + $0xdd0] sm:$0xff]
    %v473 = vld [vmem:[%s1 + $0xdd8] sm:$0xff]
    %v474 = vld [vmem:[%s1 + $0xde0] sm:$0xff]
    %v475 = vld [vmem:[%s1 + $0xde8] sm:$0xff]
    %v476 = vld [vmem:[%s1 + $0xdf0] sm:$0xff]
    %v477 = vld [vmem:[%s1 + $0xdf8] sm:$0xff]
    %v478 = vld [vmem:[%s1 + $0xe00] sm:$0xff]
    %v479 = vld [vmem:[%s1 + $0xe08] sm:$0xff]
    %v480 = vld [vmem:[%s1 + $0xe10] sm:$0xff]
    %v481 = vld [vmem:[%s1 + $0xe18] sm:$0xff]
    %v482 = vld [vmem:[%s1 + $0xe20] sm:$0xff]
    %v483 = vld [vmem:[%s1 + $0xe28] sm:$0xff]
    %v484 = vld [vmem:[%s1 + $0xe30] sm:$0xff]
    %v485 = vld [vmem:[%s1 + $0xe38] sm:$0xff]
    %v486 = vld [vmem:[%s1 + $0xe40] sm:$0xff]
    %v487 = vld [vmem:[%s1 + $0xe48] sm:$0xff]
    %v488 = vld [vmem:[%s1 + $0xe50] sm:$0xff]
    %v489 = vld [vmem:[%s1 + $0xe58] sm:$0xff]
    %v490 = vld [vmem:[%s1 + $0xe60] sm:$0xff]
    %v491 = vld [vmem:[%s1 + $0xe68] sm:$0xff]
    %v492 = vld [vmem:[%s1 + $0xe70] sm:$0xff]
    %v493 = vld [vmem:[%s1 + $0xe78] sm:$0xff]
    %v494 = vld [vmem:[%s1 + $0xe80] sm:$0xff]
    %v495 = vld [vmem:[%s1 + $0xe88] sm:$0xff]
    %v496 = vld [vmem:[%s1 + $0xe90] sm:$0xff]
    %v497 = vld [vmem:[%s1 + $0xe98] sm:$0xff]
    %v498 = vld [vmem:[%s1 + $0xea0] sm:$0xff]
    %v499 = vld [vmem:[%s1 + $0xea8] sm:$0xff]
    %v500 = vld [vmem:[%s1 + $0xeb0] sm:$0xff]
    %v501 = vld [vmem:[%s1 + $0xeb8] sm:$0xff]
    %v502 = vld [vmem:[%s1 + $0xec0] sm:$0xff]
    %v503 = vld [vmem:[%s1 + $0xec8] sm:$0xff]
    %v504 = vld [vmem:[%s1 + $0xed0] sm:$0xff]
    %v505 = vld [vmem:[%s1 + $0xed8] sm:$0xff]
    %v506 = vld [vmem:[%s1 + $0xee0] sm:$0xff]
    %v507 = vld [vmem:[%s1 + $0xee8] sm:$0xff]
    %v508 = vld [vmem:[%s1 + $0xef0] sm:$0xff]
    %v509 = vld [vmem:[%s1 + $0xef8] sm:$0xff]
    %v510 = vld [vmem:[%s1 + $0xf00] sm:$0xff]
    %v511 = vld [vmem:[%s1 + $0xf08] sm:$0xff]
    %v512 = vld [vmem:[%s1 + $0xf10] sm:$0xff]
    %v513 = vld [vmem:[%s1 + $0xf18] sm:$0xff]
    %v514 = vld [vmem:[%s1 + $0xf20] sm:$0xff]
    %v515 = vld [vmem:[%s1 + $0xf28] sm:$0xff]
    %v516 = vld [vmem:[%s1 + $0xf30] sm:$0xff]
    %v517 = vld [vmem:[%s1 + $0xf38] sm:$0xff]
    %v518 = vld [vmem:[%s1 + $0xf40] sm:$0xff]
    %v519 = vld [vmem:[%s1 + $0xf48] sm:$0xff]
    %v520 = vld [vmem:[%s1 + $0xf50] sm:$0xff]
    %v521 = vld [vmem:[%s1 + $0xf58] sm:$0xff]
    %v522 = vld [vmem:[%s1 + $0xf60] sm:$0xff]
    %v523 = vld [vmem:[%s1 + $0xf68] sm:$0xff]
    %v524 = vld [vmem:[%s1 + $0xf70] sm:$0xff]
    %v525 = vld [vmem:[%s1 + $0xf78] sm:$0xff]
    %v526 = vld [vmem:[%s1 + $0xf80] sm:$0xff]
    %v527 = vld [vmem:[%s1 + $0xf88] sm:$0xff]
    %v528 = vld [vmem:[%s1 + $0xf90] sm:$0xff]
    %v529 = vld [vmem:[%s1 + $0xf98] sm:$0xff]
    %v530 = vld [vmem:[%s1 + $0xfa0] sm:$0xff]
    %v531 = vld [vmem:[%s1 + $0xfa8] sm:$0xff]
    %v532 = vld [vmem:[%s1 + $0xfb0] sm:$0xff]
    %v533 = vld [vmem:[%s1 + $0xfb8] sm:$0xff]
    %v534 = vld [vmem:[%s1 + $0xfc0] sm:$0xff]
    %v535 = vld [vmem:[%s1 + $0xfc8] sm:$0xff]
    %v536 = vld [vmem:[%s1 + $0xfd0] sm:$0xff]
    %v537 = vld [vmem:[%s1 + $0xfd8] sm:$0xff]
    %v538 = vld [vmem:[%s1 + $0xfe0] sm:$0xff]
    %v539 = vld [vmem:[%s1 + $0xfe8] sm:$0xff]
    %v540 = vld [vmem:[%s1 + $0xff0] sm:$0xff]
    %v541 = vld [vmem:[%s1 + $0xff8] sm:$0xff]
    %v542 = vld [vmem:[%s2] sm:$0xf]
    %v544 = vlaneseq
    %v545 = vshrl.u32 %v544, 7
    %v546 = vsub.s32 0, %v545
    %v547 = vrot.slane %v542, %v546
    %v548 = vlaneseq
    %v549 = vshrl.u32 %v548, 7
    %v550 = vsub.s32 1, %v549
    %v551 = vrot.slane %v542, %v550
    %v552 = vlaneseq
    %v553 = vshrl.u32 %v552, 7
    %v554 = vsub.s32 2, %v553
    %v555 = vrot.slane %v542, %v554
    %v556 = vlaneseq
    %v557 = vshrl.u32 %v556, 7
    %v558 = vsub.s32 3, %v557
    %v559 = vrot.slane %v542, %v558
    %v566 = vcombine.high %v28, %v28
    %v568 = vunpack.c.l.s4 1966171168
    %v569 = vunpack.c.0.s8 %v568
    %v570 = vlaneseq
    %v571 = vshrl.u32 %v570, 7
    %v572 = vsub.s32 %v569, %v571
    %v573 = vrot.slane %v28, %v572
    %v575 = vunpack.c.l.s4 1966171168
    %v576 = vunpack.c.0.s8 %v575
    %v577 = vlaneseq
    %v578 = vshrl.u32 %v577, 7
    %v579 = vsub.s32 %v576, %v578
    %v580 = vrot.slane %v566, %v579
    %v581 = vcombine.high %v573, %v573
    %v582 = vcombine.high %v580, %v580
    %v584 = vunpack.c.l.s4 1966171168
    %v585 = vunpack.c.0.s8 %v584
    %v586 = vlaneseq
    %v587 = vshrl.u32 %v586, 7
    %v588 = vsub.s32 %v585, %v587
    %v589 = vrot.slane %v573, %v588
    %v591 = vunpack.c.l.s4 1966171168
    %v592 = vunpack.c.0.s8 %v591
    %v593 = vlaneseq
    %v594 = vshrl.u32 %v593, 7
    %v595 = vsub.s32 %v592, %v594
    %v596 = vrot.slane %v580, %v595
    %v598 = vunpack.c.l.s4 1966171168
    %v599 = vunpack.c.0.s8 %v598
    %v600 = vlaneseq
    %v601 = vshrl.u32 %v600, 7
    %v602 = vsub.s32 %v599, %v601
    %v603 = vrot.slane %v581, %v602
    %v605 = vunpack.c.l.s4 1966171168
    %v606 = vunpack.c.0.s8 %v605
    %v607 = vlaneseq
    %v608 = vshrl.u32 %v607, 7
    %v609 = vsub.s32 %v606, %v608
    %v610 = vrot.slane %v582, %v609
    %v611 = vcombine.high %v589, %v589
    %v612 = vcombine.high %v596, %v596
    %v613 = vcombine.high %v603, %v603
    %v614 = vcombine.high %v610, %v610
    %v615 = vcombine.high %v29, %v29
    %v617 = vunpack.c.l.s4 1966171168
    %v618 = vunpack.c.0.s8 %v617
    %v619 = vlaneseq
    %v620 = vshrl.u32 %v619, 7
    %v621 = vsub.s32 %v618, %v620
    %v622 = vrot.slane %v29, %v621
    %v624 = vunpack.c.l.s4 1966171168
    %v625 = vunpack.c.0.s8 %v624
    %v626 = vlaneseq
    %v627 = vshrl.u32 %v626, 7
    %v628 = vsub.s32 %v625, %v627
    %v629 = vrot.slane %v615, %v628
    %v630 = vcombine.high %v622, %v622
    %v631 = vcombine.high %v629, %v629
    %v633 = vunpack.c.l.s4 1966171168
    %v634 = vunpack.c.0.s8 %v633
    %v635 = vlaneseq
    %v636 = vshrl.u32 %v635, 7
    %v637 = vsub.s32 %v634, %v636
    %v638 = vrot.slane %v622, %v637
    %v640 = vunpack.c.l.s4 1966171168
    %v641 = vunpack.c.0.s8 %v640
    %v642 = vlaneseq
    %v643 = vshrl.u32 %v642, 7
    %v644 = vsub.s32 %v641, %v643
    %v645 = vrot.slane %v629, %v644
    %v647 = vunpack.c.l.s4 1966171168
    %v648 = vunpack.c.0.s8 %v647
    %v649 = vlaneseq
    %v650 = vshrl.u32 %v649, 7
    %v651 = vsub.s32 %v648, %v650
    %v652 = vrot.slane %v630, %v651
    %v654 = vunpack.c.l.s4 1966171168
    %v655 = vunpack.c.0.s8 %v654
    %v656 = vlaneseq
    %v657 = vshrl.u32 %v656, 7
    %v658 = vsub.s32 %v655, %v657
    %v659 = vrot.slane %v631, %v658
    %v660 = vcombine.high %v638, %v638
    %v661 = vcombine.high %v645, %v645
    %v662 = vcombine.high %v652, %v652
    %v663 = vcombine.high %v659, %v659
    %v1192 = vunpack.c.l.b16 %v30
    %v1193 = vunpack.c.h.b16 %v30
    %v1194 = vunpack.c.l.b16 %v31
    %v1195 = vunpack.c.h.b16 %v31
    %v1196 = vunpack.c.l.b16 %v32
    %v1197 = vunpack.c.h.b16 %v32
    %v1198 = vunpack.c.l.b16 %v33
    %v1199 = vunpack.c.h.b16 %v33
    %v1200 = vunpack.c.l.b16 %v34
    %v1201 = vunpack.c.h.b16 %v34
    %v1202 = vunpack.c.l.b16 %v35
    %v1203 = vunpack.c.h.b16 %v35
    %v1204 = vunpack.c.l.b16 %v36
    %v1205 = vunpack.c.h.b16 %v36
    %v1206 = vunpack.c.l.b16 %v37
    %v1207 = vunpack.c.h.b16 %v37
    %v1208 = vunpack.c.l.b16 %v38
    %v1209 = vunpack.c.h.b16 %v38
    %v1210 = vunpack.c.l.b16 %v39
    %v1211 = vunpack.c.h.b16 %v39
    %v1212 = vunpack.c.l.b16 %v40
    %v1213 = vunpack.c.h.b16 %v40
    %v1214 = vunpack.c.l.b16 %v41
    %v1215 = vunpack.c.h.b16 %v41
    %v1216 = vunpack.c.l.b16 %v42
    %v1217 = vunpack.c.h.b16 %v42
    %v1218 = vunpack.c.l.b16 %v43
    %v1219 = vunpack.c.h.b16 %v43
    %v1220 = vunpack.c.l.b16 %v44
    %v1221 = vunpack.c.h.b16 %v44
    %v1222 = vunpack.c.l.b16 %v45
    %v1223 = vunpack.c.h.b16 %v45
    %v1224 = vunpack.c.l.b16 %v46
    %v1225 = vunpack.c.h.b16 %v46
    %v1226 = vunpack.c.l.b16 %v47
    %v1227 = vunpack.c.h.b16 %v47
    %v1228 = vunpack.c.l.b16 %v48
    %v1229 = vunpack.c.h.b16 %v48
    %v1230 = vunpack.c.l.b16 %v49
    %v1231 = vunpack.c.h.b16 %v49
    %v1232 = vunpack.c.l.b16 %v50
    %v1233 = vunpack.c.h.b16 %v50
    %v1234 = vunpack.c.l.b16 %v51
    %v1235 = vunpack.c.h.b16 %v51
    %v1236 = vunpack.c.l.b16 %v52
    %v1237 = vunpack.c.h.b16 %v52
    %v1238 = vunpack.c.l.b16 %v53
    %v1239 = vunpack.c.h.b16 %v53
    %v1240 = vunpack.c.l.b16 %v54
    %v1241 = vunpack.c.h.b16 %v54
    %v1242 = vunpack.c.l.b16 %v55
    %v1243 = vunpack.c.h.b16 %v55
    %v1244 = vunpack.c.l.b16 %v56
    %v1245 = vunpack.c.h.b16 %v56
    %v1246 = vunpack.c.l.b16 %v57
    %v1247 = vunpack.c.h.b16 %v57
    %v1248 = vunpack.c.l.b16 %v58
    %v1249 = vunpack.c.h.b16 %v58
    %v1250 = vunpack.c.l.b16 %v59
    %v1251 = vunpack.c.h.b16 %v59
    %v1252 = vunpack.c.l.b16 %v60
    %v1253 = vunpack.c.h.b16 %v60
    %v1254 = vunpack.c.l.b16 %v61
    %v1255 = vunpack.c.h.b16 %v61
    %v1256 = vunpack.c.l.b16 %v62
    %v1257 = vunpack.c.h.b16 %v62
    %v1258 = vunpack.c.l.b16 %v63
    %v1259 = vunpack.c.h.b16 %v63
    %v1260 = vunpack.c.l.b16 %v64
    %v1261 = vunpack.c.h.b16 %v64
    %v1262 = vunpack.c.l.b16 %v65
    %v1263 = vunpack.c.h.b16 %v65
    %v1264 = vunpack.c.l.b16 %v66
    %v1265 = vunpack.c.h.b16 %v66
    %v1266 = vunpack.c.l.b16 %v67
    %v1267 = vunpack.c.h.b16 %v67
    %v1268 = vunpack.c.l.b16 %v68
    %v1269 = vunpack.c.h.b16 %v68
    %v1270 = vunpack.c.l.b16 %v69
    %v1271 = vunpack.c.h.b16 %v69
    %v1272 = vunpack.c.l.b16 %v70
    %v1273 = vunpack.c.h.b16 %v70
    %v1274 = vunpack.c.l.b16 %v71
    %v1275 = vunpack.c.h.b16 %v71
    %v1276 = vunpack.c.l.b16 %v72
    %v1277 = vunpack.c.h.b16 %v72
    %v1278 = vunpack.c.l.b16 %v73
    %v1279 = vunpack.c.h.b16 %v73
    %v1280 = vunpack.c.l.b16 %v74
    %v1281 = vunpack.c.h.b16 %v74
    %v1282 = vunpack.c.l.b16 %v75
    %v1283 = vunpack.c.h.b16 %v75
    %v1284 = vunpack.c.l.b16 %v76
    %v1285 = vunpack.c.h.b16 %v76
    %v1286 = vunpack.c.l.b16 %v77
    %v1287 = vunpack.c.h.b16 %v77
    %v1288 = vunpack.c.l.b16 %v78
    %v1289 = vunpack.c.h.b16 %v78
    %v1290 = vunpack.c.l.b16 %v79
    %v1291 = vunpack.c.h.b16 %v79
    %v1292 = vunpack.c.l.b16 %v80
    %v1293 = vunpack.c.h.b16 %v80
    %v1294 = vunpack.c.l.b16 %v81
    %v1295 = vunpack.c.h.b16 %v81
    %v1296 = vunpack.c.l.b16 %v82
    %v1297 = vunpack.c.h.b16 %v82
    %v1298 = vunpack.c.l.b16 %v83
    %v1299 = vunpack.c.h.b16 %v83
    %v1300 = vunpack.c.l.b16 %v84
    %v1301 = vunpack.c.h.b16 %v84
    %v1302 = vunpack.c.l.b16 %v85
    %v1303 = vunpack.c.h.b16 %v85
    %v1304 = vunpack.c.l.b16 %v86
    %v1305 = vunpack.c.h.b16 %v86
    %v1306 = vunpack.c.l.b16 %v87
    %v1307 = vunpack.c.h.b16 %v87
    %v1308 = vunpack.c.l.b16 %v88
    %v1309 = vunpack.c.h.b16 %v88
    %v1310 = vunpack.c.l.b16 %v89
    %v1311 = vunpack.c.h.b16 %v89
    %v1312 = vunpack.c.l.b16 %v90
    %v1313 = vunpack.c.h.b16 %v90
    %v1314 = vunpack.c.l.b16 %v91
    %v1315 = vunpack.c.h.b16 %v91
    %v1316 = vunpack.c.l.b16 %v92
    %v1317 = vunpack.c.h.b16 %v92
    %v1318 = vunpack.c.l.b16 %v93
    %v1319 = vunpack.c.h.b16 %v93
    %v1320 = vunpack.c.l.b16 %v94
    %v1321 = vunpack.c.h.b16 %v94
    %v1322 = vunpack.c.l.b16 %v95
    %v1323 = vunpack.c.h.b16 %v95
    %v1324 = vunpack.c.l.b16 %v96
    %v1325 = vunpack.c.h.b16 %v96
    %v1326 = vunpack.c.l.b16 %v97
    %v1327 = vunpack.c.h.b16 %v97
    %v1328 = vunpack.c.l.b16 %v98
    %v1329 = vunpack.c.h.b16 %v98
    %v1330 = vunpack.c.l.b16 %v99
    %v1331 = vunpack.c.h.b16 %v99
    %v1332 = vunpack.c.l.b16 %v100
    %v1333 = vunpack.c.h.b16 %v100
    %v1334 = vunpack.c.l.b16 %v101
    %v1335 = vunpack.c.h.b16 %v101
    %v1336 = vunpack.c.l.b16 %v102
    %v1337 = vunpack.c.h.b16 %v102
    %v1338 = vunpack.c.l.b16 %v103
    %v1339 = vunpack.c.h.b16 %v103
    %v1340 = vunpack.c.l.b16 %v104
    %v1341 = vunpack.c.h.b16 %v104
    %v1342 = vunpack.c.l.b16 %v105
    %v1343 = vunpack.c.h.b16 %v105
    %v1344 = vunpack.c.l.b16 %v106
    %v1345 = vunpack.c.h.b16 %v106
    %v1346 = vunpack.c.l.b16 %v107
    %v1347 = vunpack.c.h.b16 %v107
    %v1348 = vunpack.c.l.b16 %v108
    %v1349 = vunpack.c.h.b16 %v108
    %v1350 = vunpack.c.l.b16 %v109
    %v1351 = vunpack.c.h.b16 %v109
    %v1352 = vunpack.c.l.b16 %v110
    %v1353 = vunpack.c.h.b16 %v110
    %v1354 = vunpack.c.l.b16 %v111
    %v1355 = vunpack.c.h.b16 %v111
    %v1356 = vunpack.c.l.b16 %v112
    %v1357 = vunpack.c.h.b16 %v112
    %v1358 = vunpack.c.l.b16 %v113
    %v1359 = vunpack.c.h.b16 %v113
    %v1360 = vunpack.c.l.b16 %v114
    %v1361 = vunpack.c.h.b16 %v114
    %v1362 = vunpack.c.l.b16 %v115
    %v1363 = vunpack.c.h.b16 %v115
    %v1364 = vunpack.c.l.b16 %v116
    %v1365 = vunpack.c.h.b16 %v116
    %v1366 = vunpack.c.l.b16 %v117
    %v1367 = vunpack.c.h.b16 %v117
    %v1368 = vunpack.c.l.b16 %v118
    %v1369 = vunpack.c.h.b16 %v118
    %v1370 = vunpack.c.l.b16 %v119
    %v1371 = vunpack.c.h.b16 %v119
    %v1372 = vunpack.c.l.b16 %v120
    %v1373 = vunpack.c.h.b16 %v120
    %v1374 = vunpack.c.l.b16 %v121
    %v1375 = vunpack.c.h.b16 %v121
    %v1376 = vunpack.c.l.b16 %v122
    %v1377 = vunpack.c.h.b16 %v122
    %v1378 = vunpack.c.l.b16 %v123
    %v1379 = vunpack.c.h.b16 %v123
    %v1380 = vunpack.c.l.b16 %v124
    %v1381 = vunpack.c.h.b16 %v124
    %v1382 = vunpack.c.l.b16 %v125
    %v1383 = vunpack.c.h.b16 %v125
    %v1384 = vunpack.c.l.b16 %v126
    %v1385 = vunpack.c.h.b16 %v126
    %v1386 = vunpack.c.l.b16 %v127
    %v1387 = vunpack.c.h.b16 %v127
    %v1388 = vunpack.c.l.b16 %v128
    %v1389 = vunpack.c.h.b16 %v128
    %v1390 = vunpack.c.l.b16 %v129
    %v1391 = vunpack.c.h.b16 %v129
    %v1392 = vunpack.c.l.b16 %v130
    %v1393 = vunpack.c.h.b16 %v130
    %v1394 = vunpack.c.l.b16 %v131
    %v1395 = vunpack.c.h.b16 %v131
    %v1396 = vunpack.c.l.b16 %v132
    %v1397 = vunpack.c.h.b16 %v132
    %v1398 = vunpack.c.l.b16 %v133
    %v1399 = vunpack.c.h.b16 %v133
    %v1400 = vunpack.c.l.b16 %v134
    %v1401 = vunpack.c.h.b16 %v134
    %v1402 = vunpack.c.l.b16 %v135
    %v1403 = vunpack.c.h.b16 %v135
    %v1404 = vunpack.c.l.b16 %v136
    %v1405 = vunpack.c.h.b16 %v136
    %v1406 = vunpack.c.l.b16 %v137
    %v1407 = vunpack.c.h.b16 %v137
    %v1408 = vunpack.c.l.b16 %v138
    %v1409 = vunpack.c.h.b16 %v138
    %v1410 = vunpack.c.l.b16 %v139
    %v1411 = vunpack.c.h.b16 %v139
    %v1412 = vunpack.c.l.b16 %v140
    %v1413 = vunpack.c.h.b16 %v140
    %v1414 = vunpack.c.l.b16 %v141
    %v1415 = vunpack.c.h.b16 %v141
    %v1416 = vunpack.c.l.b16 %v142
    %v1417 = vunpack.c.h.b16 %v142
    %v1418 = vunpack.c.l.b16 %v143
    %v1419 = vunpack.c.h.b16 %v143
    %v1420 = vunpack.c.l.b16 %v144
    %v1421 = vunpack.c.h.b16 %v144
    %v1422 = vunpack.c.l.b16 %v145
    %v1423 = vunpack.c.h.b16 %v145
    %v1424 = vunpack.c.l.b16 %v146
    %v1425 = vunpack.c.h.b16 %v146
    %v1426 = vunpack.c.l.b16 %v147
    %v1427 = vunpack.c.h.b16 %v147
    %v1428 = vunpack.c.l.b16 %v148
    %v1429 = vunpack.c.h.b16 %v148
    %v1430 = vunpack.c.l.b16 %v149
    %v1431 = vunpack.c.h.b16 %v149
    %v1432 = vunpack.c.l.b16 %v150
    %v1433 = vunpack.c.h.b16 %v150
    %v1434 = vunpack.c.l.b16 %v151
    %v1435 = vunpack.c.h.b16 %v151
    %v1436 = vunpack.c.l.b16 %v152
    %v1437 = vunpack.c.h.b16 %v152
    %v1438 = vunpack.c.l.b16 %v153
    %v1439 = vunpack.c.h.b16 %v153
    %v1440 = vunpack.c.l.b16 %v154
    %v1441 = vunpack.c.h.b16 %v154
    %v1442 = vunpack.c.l.b16 %v155
    %v1443 = vunpack.c.h.b16 %v155
    %v1444 = vunpack.c.l.b16 %v156
    %v1445 = vunpack.c.h.b16 %v156
    %v1446 = vunpack.c.l.b16 %v157
    %v1447 = vunpack.c.h.b16 %v157
    %v1448 = vunpack.c.l.b16 %v158
    %v1449 = vunpack.c.h.b16 %v158
    %v1450 = vunpack.c.l.b16 %v159
    %v1451 = vunpack.c.h.b16 %v159
    %v1452 = vunpack.c.l.b16 %v160
    %v1453 = vunpack.c.h.b16 %v160
    %v1454 = vunpack.c.l.b16 %v161
    %v1455 = vunpack.c.h.b16 %v161
    %v1456 = vunpack.c.l.b16 %v162
    %v1457 = vunpack.c.h.b16 %v162
    %v1458 = vunpack.c.l.b16 %v163
    %v1459 = vunpack.c.h.b16 %v163
    %v1460 = vunpack.c.l.b16 %v164
    %v1461 = vunpack.c.h.b16 %v164
    %v1462 = vunpack.c.l.b16 %v165
    %v1463 = vunpack.c.h.b16 %v165
    %v1464 = vunpack.c.l.b16 %v166
    %v1465 = vunpack.c.h.b16 %v166
    %v1466 = vunpack.c.l.b16 %v167
    %v1467 = vunpack.c.h.b16 %v167
    %v1468 = vunpack.c.l.b16 %v168
    %v1469 = vunpack.c.h.b16 %v168
    %v1470 = vunpack.c.l.b16 %v169
    %v1471 = vunpack.c.h.b16 %v169
    %v1472 = vunpack.c.l.b16 %v170
    %v1473 = vunpack.c.h.b16 %v170
    %v1474 = vunpack.c.l.b16 %v171
    %v1475 = vunpack.c.h.b16 %v171
    %v1476 = vunpack.c.l.b16 %v172
    %v1477 = vunpack.c.h.b16 %v172
    %v1478 = vunpack.c.l.b16 %v173
    %v1479 = vunpack.c.h.b16 %v173
    %v1480 = vunpack.c.l.b16 %v174
    %v1481 = vunpack.c.h.b16 %v174
    %v1482 = vunpack.c.l.b16 %v175
    %v1483 = vunpack.c.h.b16 %v175
    %v1484 = vunpack.c.l.b16 %v176
    %v1485 = vunpack.c.h.b16 %v176
    %v1486 = vunpack.c.l.b16 %v177
    %v1487 = vunpack.c.h.b16 %v177
    %v1488 = vunpack.c.l.b16 %v178
    %v1489 = vunpack.c.h.b16 %v178
    %v1490 = vunpack.c.l.b16 %v179
    %v1491 = vunpack.c.h.b16 %v179
    %v1492 = vunpack.c.l.b16 %v180
    %v1493 = vunpack.c.h.b16 %v180
    %v1494 = vunpack.c.l.b16 %v181
    %v1495 = vunpack.c.h.b16 %v181
    %v1496 = vunpack.c.l.b16 %v182
    %v1497 = vunpack.c.h.b16 %v182
    %v1498 = vunpack.c.l.b16 %v183
    %v1499 = vunpack.c.h.b16 %v183
    %v1500 = vunpack.c.l.b16 %v184
    %v1501 = vunpack.c.h.b16 %v184
    %v1502 = vunpack.c.l.b16 %v185
    %v1503 = vunpack.c.h.b16 %v185
    %v1504 = vunpack.c.l.b16 %v186
    %v1505 = vunpack.c.h.b16 %v186
    %v1506 = vunpack.c.l.b16 %v187
    %v1507 = vunpack.c.h.b16 %v187
    %v1508 = vunpack.c.l.b16 %v188
    %v1509 = vunpack.c.h.b16 %v188
    %v1510 = vunpack.c.l.b16 %v189
    %v1511 = vunpack.c.h.b16 %v189
    %v1512 = vunpack.c.l.b16 %v190
    %v1513 = vunpack.c.h.b16 %v190
    %v1514 = vunpack.c.l.b16 %v191
    %v1515 = vunpack.c.h.b16 %v191
    %v1516 = vunpack.c.l.b16 %v192
    %v1517 = vunpack.c.h.b16 %v192
    %v1518 = vunpack.c.l.b16 %v193
    %v1519 = vunpack.c.h.b16 %v193
    %v1520 = vunpack.c.l.b16 %v194
    %v1521 = vunpack.c.h.b16 %v194
    %v1522 = vunpack.c.l.b16 %v195
    %v1523 = vunpack.c.h.b16 %v195
    %v1524 = vunpack.c.l.b16 %v196
    %v1525 = vunpack.c.h.b16 %v196
    %v1526 = vunpack.c.l.b16 %v197
    %v1527 = vunpack.c.h.b16 %v197
    %v1528 = vunpack.c.l.b16 %v198
    %v1529 = vunpack.c.h.b16 %v198
    %v1530 = vunpack.c.l.b16 %v199
    %v1531 = vunpack.c.h.b16 %v199
    %v1532 = vunpack.c.l.b16 %v200
    %v1533 = vunpack.c.h.b16 %v200
    %v1534 = vunpack.c.l.b16 %v201
    %v1535 = vunpack.c.h.b16 %v201
    %v1536 = vunpack.c.l.b16 %v202
    %v1537 = vunpack.c.h.b16 %v202
    %v1538 = vunpack.c.l.b16 %v203
    %v1539 = vunpack.c.h.b16 %v203
    %v1540 = vunpack.c.l.b16 %v204
    %v1541 = vunpack.c.h.b16 %v204
    %v1542 = vunpack.c.l.b16 %v205
    %v1543 = vunpack.c.h.b16 %v205
    %v1544 = vunpack.c.l.b16 %v206
    %v1545 = vunpack.c.h.b16 %v206
    %v1546 = vunpack.c.l.b16 %v207
    %v1547 = vunpack.c.h.b16 %v207
    %v1548 = vunpack.c.l.b16 %v208
    %v1549 = vunpack.c.h.b16 %v208
    %v1550 = vunpack.c.l.b16 %v209
    %v1551 = vunpack.c.h.b16 %v209
    %v1552 = vunpack.c.l.b16 %v210
    %v1553 = vunpack.c.h.b16 %v210
    %v1554 = vunpack.c.l.b16 %v211
    %v1555 = vunpack.c.h.b16 %v211
    %v1556 = vunpack.c.l.b16 %v212
    %v1557 = vunpack.c.h.b16 %v212
    %v1558 = vunpack.c.l.b16 %v213
    %v1559 = vunpack.c.h.b16 %v213
    %v1560 = vunpack.c.l.b16 %v214
    %v1561 = vunpack.c.h.b16 %v214
    %v1562 = vunpack.c.l.b16 %v215
    %v1563 = vunpack.c.h.b16 %v215
    %v1564 = vunpack.c.l.b16 %v216
    %v1565 = vunpack.c.h.b16 %v216
    %v1566 = vunpack.c.l.b16 %v217
    %v1567 = vunpack.c.h.b16 %v217
    %v1568 = vunpack.c.l.b16 %v218
    %v1569 = vunpack.c.h.b16 %v218
    %v1570 = vunpack.c.l.b16 %v219
    %v1571 = vunpack.c.h.b16 %v219
    %v1572 = vunpack.c.l.b16 %v220
    %v1573 = vunpack.c.h.b16 %v220
    %v1574 = vunpack.c.l.b16 %v221
    %v1575 = vunpack.c.h.b16 %v221
    %v1576 = vunpack.c.l.b16 %v222
    %v1577 = vunpack.c.h.b16 %v222
    %v1578 = vunpack.c.l.b16 %v223
    %v1579 = vunpack.c.h.b16 %v223
    %v1580 = vunpack.c.l.b16 %v224
    %v1581 = vunpack.c.h.b16 %v224
    %v1582 = vunpack.c.l.b16 %v225
    %v1583 = vunpack.c.h.b16 %v225
    %v1584 = vunpack.c.l.b16 %v226
    %v1585 = vunpack.c.h.b16 %v226
    %v1586 = vunpack.c.l.b16 %v227
    %v1587 = vunpack.c.h.b16 %v227
    %v1588 = vunpack.c.l.b16 %v228
    %v1589 = vunpack.c.h.b16 %v228
    %v1590 = vunpack.c.l.b16 %v229
    %v1591 = vunpack.c.h.b16 %v229
    %v1592 = vunpack.c.l.b16 %v230
    %v1593 = vunpack.c.h.b16 %v230
    %v1594 = vunpack.c.l.b16 %v231
    %v1595 = vunpack.c.h.b16 %v231
    %v1596 = vunpack.c.l.b16 %v232
    %v1597 = vunpack.c.h.b16 %v232
    %v1598 = vunpack.c.l.b16 %v233
    %v1599 = vunpack.c.h.b16 %v233
    %v1600 = vunpack.c.l.b16 %v234
    %v1601 = vunpack.c.h.b16 %v234
    %v1602 = vunpack.c.l.b16 %v235
    %v1603 = vunpack.c.h.b16 %v235
    %v1604 = vunpack.c.l.b16 %v236
    %v1605 = vunpack.c.h.b16 %v236
    %v1606 = vunpack.c.l.b16 %v237
    %v1607 = vunpack.c.h.b16 %v237
    %v1608 = vunpack.c.l.b16 %v238
    %v1609 = vunpack.c.h.b16 %v238
    %v1610 = vunpack.c.l.b16 %v239
    %v1611 = vunpack.c.h.b16 %v239
    %v1612 = vunpack.c.l.b16 %v240
    %v1613 = vunpack.c.h.b16 %v240
    %v1614 = vunpack.c.l.b16 %v241
    %v1615 = vunpack.c.h.b16 %v241
    %v1616 = vunpack.c.l.b16 %v242
    %v1617 = vunpack.c.h.b16 %v242
    %v1618 = vunpack.c.l.b16 %v243
    %v1619 = vunpack.c.h.b16 %v243
    %v1620 = vunpack.c.l.b16 %v244
    %v1621 = vunpack.c.h.b16 %v244
    %v1622 = vunpack.c.l.b16 %v245
    %v1623 = vunpack.c.h.b16 %v245
    %v1624 = vunpack.c.l.b16 %v246
    %v1625 = vunpack.c.h.b16 %v246
    %v1626 = vunpack.c.l.b16 %v247
    %v1627 = vunpack.c.h.b16 %v247
    %v1628 = vunpack.c.l.b16 %v248
    %v1629 = vunpack.c.h.b16 %v248
    %v1630 = vunpack.c.l.b16 %v249
    %v1631 = vunpack.c.h.b16 %v249
    %v1632 = vunpack.c.l.b16 %v250
    %v1633 = vunpack.c.h.b16 %v250
    %v1634 = vunpack.c.l.b16 %v251
    %v1635 = vunpack.c.h.b16 %v251
    %v1636 = vunpack.c.l.b16 %v252
    %v1637 = vunpack.c.h.b16 %v252
    %v1638 = vunpack.c.l.b16 %v253
    %v1639 = vunpack.c.h.b16 %v253
    %v1640 = vunpack.c.l.b16 %v254
    %v1641 = vunpack.c.h.b16 %v254
    %v1642 = vunpack.c.l.b16 %v255
    %v1643 = vunpack.c.h.b16 %v255
    %v1644 = vunpack.c.l.b16 %v256
    %v1645 = vunpack.c.h.b16 %v256
    %v1646 = vunpack.c.l.b16 %v257
    %v1647 = vunpack.c.h.b16 %v257
    %v1648 = vunpack.c.l.b16 %v258
    %v1649 = vunpack.c.h.b16 %v258
    %v1650 = vunpack.c.l.b16 %v259
    %v1651 = vunpack.c.h.b16 %v259
    %v1652 = vunpack.c.l.b16 %v260
    %v1653 = vunpack.c.h.b16 %v260
    %v1654 = vunpack.c.l.b16 %v261
    %v1655 = vunpack.c.h.b16 %v261
    %v1656 = vunpack.c.l.b16 %v262
    %v1657 = vunpack.c.h.b16 %v262
    %v1658 = vunpack.c.l.b16 %v263
    %v1659 = vunpack.c.h.b16 %v263
    %v1660 = vunpack.c.l.b16 %v264
    %v1661 = vunpack.c.h.b16 %v264
    %v1662 = vunpack.c.l.b16 %v265
    %v1663 = vunpack.c.h.b16 %v265
    %v1664 = vunpack.c.l.b16 %v266
    %v1665 = vunpack.c.h.b16 %v266
    %v1666 = vunpack.c.l.b16 %v267
    %v1667 = vunpack.c.h.b16 %v267
    %v1668 = vunpack.c.l.b16 %v268
    %v1669 = vunpack.c.h.b16 %v268
    %v1670 = vunpack.c.l.b16 %v269
    %v1671 = vunpack.c.h.b16 %v269
    %v1672 = vunpack.c.l.b16 %v270
    %v1673 = vunpack.c.h.b16 %v270
    %v1674 = vunpack.c.l.b16 %v271
    %v1675 = vunpack.c.h.b16 %v271
    %v1676 = vunpack.c.l.b16 %v272
    %v1677 = vunpack.c.h.b16 %v272
    %v1678 = vunpack.c.l.b16 %v273
    %v1679 = vunpack.c.h.b16 %v273
    %v1680 = vunpack.c.l.b16 %v274
    %v1681 = vunpack.c.h.b16 %v274
    %v1682 = vunpack.c.l.b16 %v275
    %v1683 = vunpack.c.h.b16 %v275
    %v1684 = vunpack.c.l.b16 %v276
    %v1685 = vunpack.c.h.b16 %v276
    %v1686 = vunpack.c.l.b16 %v277
    %v1687 = vunpack.c.h.b16 %v277
    %v1688 = vunpack.c.l.b16 %v278
    %v1689 = vunpack.c.h.b16 %v278
    %v1690 = vunpack.c.l.b16 %v279
    %v1691 = vunpack.c.h.b16 %v279
    %v1692 = vunpack.c.l.b16 %v280
    %v1693 = vunpack.c.h.b16 %v280
    %v1694 = vunpack.c.l.b16 %v281
    %v1695 = vunpack.c.h.b16 %v281
    %v1696 = vunpack.c.l.b16 %v282
    %v1697 = vunpack.c.h.b16 %v282
    %v1698 = vunpack.c.l.b16 %v283
    %v1699 = vunpack.c.h.b16 %v283
    %v1700 = vunpack.c.l.b16 %v284
    %v1701 = vunpack.c.h.b16 %v284
    %v1702 = vunpack.c.l.b16 %v285
    %v1703 = vunpack.c.h.b16 %v285
    %v1704 = vunpack.c.l.b16 %v286
    %v1705 = vunpack.c.h.b16 %v286
    %v1706 = vunpack.c.l.b16 %v287
    %v1707 = vunpack.c.h.b16 %v287
    %v1708 = vunpack.c.l.b16 %v288
    %v1709 = vunpack.c.h.b16 %v288
    %v1710 = vunpack.c.l.b16 %v289
    %v1711 = vunpack.c.h.b16 %v289
    %v1712 = vunpack.c.l.b16 %v290
    %v1713 = vunpack.c.h.b16 %v290
    %v1714 = vunpack.c.l.b16 %v291
    %v1715 = vunpack.c.h.b16 %v291
    %v1716 = vunpack.c.l.b16 %v292
    %v1717 = vunpack.c.h.b16 %v292
    %v1718 = vunpack.c.l.b16 %v293
    %v1719 = vunpack.c.h.b16 %v293
    %v1720 = vunpack.c.l.b16 %v294
    %v1721 = vunpack.c.h.b16 %v294
    %v1722 = vunpack.c.l.b16 %v295
    %v1723 = vunpack.c.h.b16 %v295
    %v1724 = vunpack.c.l.b16 %v296
    %v1725 = vunpack.c.h.b16 %v296
    %v1726 = vunpack.c.l.b16 %v297
    %v1727 = vunpack.c.h.b16 %v297
    %v1728 = vunpack.c.l.b16 %v298
    %v1729 = vunpack.c.h.b16 %v298
    %v1730 = vunpack.c.l.b16 %v299
    %v1731 = vunpack.c.h.b16 %v299
    %v1732 = vunpack.c.l.b16 %v300
    %v1733 = vunpack.c.h.b16 %v300
    %v1734 = vunpack.c.l.b16 %v301
    %v1735 = vunpack.c.h.b16 %v301
    %v1736 = vunpack.c.l.b16 %v302
    %v1737 = vunpack.c.h.b16 %v302
    %v1738 = vunpack.c.l.b16 %v303
    %v1739 = vunpack.c.h.b16 %v303
    %v1740 = vunpack.c.l.b16 %v304
    %v1741 = vunpack.c.h.b16 %v304
    %v1742 = vunpack.c.l.b16 %v305
    %v1743 = vunpack.c.h.b16 %v305
    %v1744 = vunpack.c.l.b16 %v306
    %v1745 = vunpack.c.h.b16 %v306
    %v1746 = vunpack.c.l.b16 %v307
    %v1747 = vunpack.c.h.b16 %v307
    %v1748 = vunpack.c.l.b16 %v308
    %v1749 = vunpack.c.h.b16 %v308
    %v1750 = vunpack.c.l.b16 %v309
    %v1751 = vunpack.c.h.b16 %v309
    %v1752 = vunpack.c.l.b16 %v310
    %v1753 = vunpack.c.h.b16 %v310
    %v1754 = vunpack.c.l.b16 %v311
    %v1755 = vunpack.c.h.b16 %v311
    %v1756 = vunpack.c.l.b16 %v312
    %v1757 = vunpack.c.h.b16 %v312
    %v1758 = vunpack.c.l.b16 %v313
    %v1759 = vunpack.c.h.b16 %v313
    %v1760 = vunpack.c.l.b16 %v314
    %v1761 = vunpack.c.h.b16 %v314
    %v1762 = vunpack.c.l.b16 %v315
    %v1763 = vunpack.c.h.b16 %v315
    %v1764 = vunpack.c.l.b16 %v316
    %v1765 = vunpack.c.h.b16 %v316
    %v1766 = vunpack.c.l.b16 %v317
    %v1767 = vunpack.c.h.b16 %v317
    %v1768 = vunpack.c.l.b16 %v318
    %v1769 = vunpack.c.h.b16 %v318
    %v1770 = vunpack.c.l.b16 %v319
    %v1771 = vunpack.c.h.b16 %v319
    %v1772 = vunpack.c.l.b16 %v320
    %v1773 = vunpack.c.h.b16 %v320
    %v1774 = vunpack.c.l.b16 %v321
    %v1775 = vunpack.c.h.b16 %v321
    %v1776 = vunpack.c.l.b16 %v322
    %v1777 = vunpack.c.h.b16 %v322
    %v1778 = vunpack.c.l.b16 %v323
    %v1779 = vunpack.c.h.b16 %v323
    %v1780 = vunpack.c.l.b16 %v324
    %v1781 = vunpack.c.h.b16 %v324
    %v1782 = vunpack.c.l.b16 %v325
    %v1783 = vunpack.c.h.b16 %v325
    %v1784 = vunpack.c.l.b16 %v326
    %v1785 = vunpack.c.h.b16 %v326
    %v1786 = vunpack.c.l.b16 %v327
    %v1787 = vunpack.c.h.b16 %v327
    %v1788 = vunpack.c.l.b16 %v328
    %v1789 = vunpack.c.h.b16 %v328
    %v1790 = vunpack.c.l.b16 %v329
    %v1791 = vunpack.c.h.b16 %v329
    %v1792 = vunpack.c.l.b16 %v330
    %v1793 = vunpack.c.h.b16 %v330
    %v1794 = vunpack.c.l.b16 %v331
    %v1795 = vunpack.c.h.b16 %v331
    %v1796 = vunpack.c.l.b16 %v332
    %v1797 = vunpack.c.h.b16 %v332
    %v1798 = vunpack.c.l.b16 %v333
    %v1799 = vunpack.c.h.b16 %v333
    %v1800 = vunpack.c.l.b16 %v334
    %v1801 = vunpack.c.h.b16 %v334
    %v1802 = vunpack.c.l.b16 %v335
    %v1803 = vunpack.c.h.b16 %v335
    %v1804 = vunpack.c.l.b16 %v336
    %v1805 = vunpack.c.h.b16 %v336
    %v1806 = vunpack.c.l.b16 %v337
    %v1807 = vunpack.c.h.b16 %v337
    %v1808 = vunpack.c.l.b16 %v338
    %v1809 = vunpack.c.h.b16 %v338
    %v1810 = vunpack.c.l.b16 %v339
    %v1811 = vunpack.c.h.b16 %v339
    %v1812 = vunpack.c.l.b16 %v340
    %v1813 = vunpack.c.h.b16 %v340
    %v1814 = vunpack.c.l.b16 %v341
    %v1815 = vunpack.c.h.b16 %v341
    %v1816 = vunpack.c.l.b16 %v342
    %v1817 = vunpack.c.h.b16 %v342
    %v1818 = vunpack.c.l.b16 %v343
    %v1819 = vunpack.c.h.b16 %v343
    %v1820 = vunpack.c.l.b16 %v344
    %v1821 = vunpack.c.h.b16 %v344
    %v1822 = vunpack.c.l.b16 %v345
    %v1823 = vunpack.c.h.b16 %v345
    %v1824 = vunpack.c.l.b16 %v346
    %v1825 = vunpack.c.h.b16 %v346
    %v1826 = vunpack.c.l.b16 %v347
    %v1827 = vunpack.c.h.b16 %v347
    %v1828 = vunpack.c.l.b16 %v348
    %v1829 = vunpack.c.h.b16 %v348
    %v1830 = vunpack.c.l.b16 %v349
    %v1831 = vunpack.c.h.b16 %v349
    %v1832 = vunpack.c.l.b16 %v350
    %v1833 = vunpack.c.h.b16 %v350
    %v1834 = vunpack.c.l.b16 %v351
    %v1835 = vunpack.c.h.b16 %v351
    %v1836 = vunpack.c.l.b16 %v352
    %v1837 = vunpack.c.h.b16 %v352
    %v1838 = vunpack.c.l.b16 %v353
    %v1839 = vunpack.c.h.b16 %v353
    %v1840 = vunpack.c.l.b16 %v354
    %v1841 = vunpack.c.h.b16 %v354
    %v1842 = vunpack.c.l.b16 %v355
    %v1843 = vunpack.c.h.b16 %v355
    %v1844 = vunpack.c.l.b16 %v356
    %v1845 = vunpack.c.h.b16 %v356
    %v1846 = vunpack.c.l.b16 %v357
    %v1847 = vunpack.c.h.b16 %v357
    %v1848 = vunpack.c.l.b16 %v358
    %v1849 = vunpack.c.h.b16 %v358
    %v1850 = vunpack.c.l.b16 %v359
    %v1851 = vunpack.c.h.b16 %v359
    %v1852 = vunpack.c.l.b16 %v360
    %v1853 = vunpack.c.h.b16 %v360
    %v1854 = vunpack.c.l.b16 %v361
    %v1855 = vunpack.c.h.b16 %v361
    %v1856 = vunpack.c.l.b16 %v362
    %v1857 = vunpack.c.h.b16 %v362
    %v1858 = vunpack.c.l.b16 %v363
    %v1859 = vunpack.c.h.b16 %v363
    %v1860 = vunpack.c.l.b16 %v364
    %v1861 = vunpack.c.h.b16 %v364
    %v1862 = vunpack.c.l.b16 %v365
    %v1863 = vunpack.c.h.b16 %v365
    %v1864 = vunpack.c.l.b16 %v366
    %v1865 = vunpack.c.h.b16 %v366
    %v1866 = vunpack.c.l.b16 %v367
    %v1867 = vunpack.c.h.b16 %v367
    %v1868 = vunpack.c.l.b16 %v368
    %v1869 = vunpack.c.h.b16 %v368
    %v1870 = vunpack.c.l.b16 %v369
    %v1871 = vunpack.c.h.b16 %v369
    %v1872 = vunpack.c.l.b16 %v370
    %v1873 = vunpack.c.h.b16 %v370
    %v1874 = vunpack.c.l.b16 %v371
    %v1875 = vunpack.c.h.b16 %v371
    %v1876 = vunpack.c.l.b16 %v372
    %v1877 = vunpack.c.h.b16 %v372
    %v1878 = vunpack.c.l.b16 %v373
    %v1879 = vunpack.c.h.b16 %v373
    %v1880 = vunpack.c.l.b16 %v374
    %v1881 = vunpack.c.h.b16 %v374
    %v1882 = vunpack.c.l.b16 %v375
    %v1883 = vunpack.c.h.b16 %v375
    %v1884 = vunpack.c.l.b16 %v376
    %v1885 = vunpack.c.h.b16 %v376
    %v1886 = vunpack.c.l.b16 %v377
    %v1887 = vunpack.c.h.b16 %v377
    %v1888 = vunpack.c.l.b16 %v378
    %v1889 = vunpack.c.h.b16 %v378
    %v1890 = vunpack.c.l.b16 %v379
    %v1891 = vunpack.c.h.b16 %v379
    %v1892 = vunpack.c.l.b16 %v380
    %v1893 = vunpack.c.h.b16 %v380
    %v1894 = vunpack.c.l.b16 %v381
    %v1895 = vunpack.c.h.b16 %v381
    %v1896 = vunpack.c.l.b16 %v382
    %v1897 = vunpack.c.h.b16 %v382
    %v1898 = vunpack.c.l.b16 %v383
    %v1899 = vunpack.c.h.b16 %v383
    %v1900 = vunpack.c.l.b16 %v384
    %v1901 = vunpack.c.h.b16 %v384
    %v1902 = vunpack.c.l.b16 %v385
    %v1903 = vunpack.c.h.b16 %v385
    %v1904 = vunpack.c.l.b16 %v386
    %v1905 = vunpack.c.h.b16 %v386
    %v1906 = vunpack.c.l.b16 %v387
    %v1907 = vunpack.c.h.b16 %v387
    %v1908 = vunpack.c.l.b16 %v388
    %v1909 = vunpack.c.h.b16 %v388
    %v1910 = vunpack.c.l.b16 %v389
    %v1911 = vunpack.c.h.b16 %v389
    %v1912 = vunpack.c.l.b16 %v390
    %v1913 = vunpack.c.h.b16 %v390
    %v1914 = vunpack.c.l.b16 %v391
    %v1915 = vunpack.c.h.b16 %v391
    %v1916 = vunpack.c.l.b16 %v392
    %v1917 = vunpack.c.h.b16 %v392
    %v1918 = vunpack.c.l.b16 %v393
    %v1919 = vunpack.c.h.b16 %v393
    %v1920 = vunpack.c.l.b16 %v394
    %v1921 = vunpack.c.h.b16 %v394
    %v1922 = vunpack.c.l.b16 %v395
    %v1923 = vunpack.c.h.b16 %v395
    %v1924 = vunpack.c.l.b16 %v396
    %v1925 = vunpack.c.h.b16 %v396
    %v1926 = vunpack.c.l.b16 %v397
    %v1927 = vunpack.c.h.b16 %v397
    %v1928 = vunpack.c.l.b16 %v398
    %v1929 = vunpack.c.h.b16 %v398
    %v1930 = vunpack.c.l.b16 %v399
    %v1931 = vunpack.c.h.b16 %v399
    %v1932 = vunpack.c.l.b16 %v400
    %v1933 = vunpack.c.h.b16 %v400
    %v1934 = vunpack.c.l.b16 %v401
    %v1935 = vunpack.c.h.b16 %v401
    %v1936 = vunpack.c.l.b16 %v402
    %v1937 = vunpack.c.h.b16 %v402
    %v1938 = vunpack.c.l.b16 %v403
    %v1939 = vunpack.c.h.b16 %v403
    %v1940 = vunpack.c.l.b16 %v404
    %v1941 = vunpack.c.h.b16 %v404
    %v1942 = vunpack.c.l.b16 %v405
    %v1943 = vunpack.c.h.b16 %v405
    %v1944 = vunpack.c.l.b16 %v406
    %v1945 = vunpack.c.h.b16 %v406
    %v1946 = vunpack.c.l.b16 %v407
    %v1947 = vunpack.c.h.b16 %v407
    %v1948 = vunpack.c.l.b16 %v408
    %v1949 = vunpack.c.h.b16 %v408
    %v1950 = vunpack.c.l.b16 %v409
    %v1951 = vunpack.c.h.b16 %v409
    %v1952 = vunpack.c.l.b16 %v410
    %v1953 = vunpack.c.h.b16 %v410
    %v1954 = vunpack.c.l.b16 %v411
    %v1955 = vunpack.c.h.b16 %v411
    %v1956 = vunpack.c.l.b16 %v412
    %v1957 = vunpack.c.h.b16 %v412
    %v1958 = vunpack.c.l.b16 %v413
    %v1959 = vunpack.c.h.b16 %v413
    %v1960 = vunpack.c.l.b16 %v414
    %v1961 = vunpack.c.h.b16 %v414
    %v1962 = vunpack.c.l.b16 %v415
    %v1963 = vunpack.c.h.b16 %v415
    %v1964 = vunpack.c.l.b16 %v416
    %v1965 = vunpack.c.h.b16 %v416
    %v1966 = vunpack.c.l.b16 %v417
    %v1967 = vunpack.c.h.b16 %v417
    %v1968 = vunpack.c.l.b16 %v418
    %v1969 = vunpack.c.h.b16 %v418
    %v1970 = vunpack.c.l.b16 %v419
    %v1971 = vunpack.c.h.b16 %v419
    %v1972 = vunpack.c.l.b16 %v420
    %v1973 = vunpack.c.h.b16 %v420
    %v1974 = vunpack.c.l.b16 %v421
    %v1975 = vunpack.c.h.b16 %v421
    %v1976 = vunpack.c.l.b16 %v422
    %v1977 = vunpack.c.h.b16 %v422
    %v1978 = vunpack.c.l.b16 %v423
    %v1979 = vunpack.c.h.b16 %v423
    %v1980 = vunpack.c.l.b16 %v424
    %v1981 = vunpack.c.h.b16 %v424
    %v1982 = vunpack.c.l.b16 %v425
    %v1983 = vunpack.c.h.b16 %v425
    %v1984 = vunpack.c.l.b16 %v426
    %v1985 = vunpack.c.h.b16 %v426
    %v1986 = vunpack.c.l.b16 %v427
    %v1987 = vunpack.c.h.b16 %v427
    %v1988 = vunpack.c.l.b16 %v428
    %v1989 = vunpack.c.h.b16 %v428
    %v1990 = vunpack.c.l.b16 %v429
    %v1991 = vunpack.c.h.b16 %v429
    %v1992 = vunpack.c.l.b16 %v430
    %v1993 = vunpack.c.h.b16 %v430
    %v1994 = vunpack.c.l.b16 %v431
    %v1995 = vunpack.c.h.b16 %v431
    %v1996 = vunpack.c.l.b16 %v432
    %v1997 = vunpack.c.h.b16 %v432
    %v1998 = vunpack.c.l.b16 %v433
    %v1999 = vunpack.c.h.b16 %v433
    %v2000 = vunpack.c.l.b16 %v434
    %v2001 = vunpack.c.h.b16 %v434
    %v2002 = vunpack.c.l.b16 %v435
    %v2003 = vunpack.c.h.b16 %v435
    %v2004 = vunpack.c.l.b16 %v436
    %v2005 = vunpack.c.h.b16 %v436
    %v2006 = vunpack.c.l.b16 %v437
    %v2007 = vunpack.c.h.b16 %v437
    %v2008 = vunpack.c.l.b16 %v438
    %v2009 = vunpack.c.h.b16 %v438
    %v2010 = vunpack.c.l.b16 %v439
    %v2011 = vunpack.c.h.b16 %v439
    %v2012 = vunpack.c.l.b16 %v440
    %v2013 = vunpack.c.h.b16 %v440
    %v2014 = vunpack.c.l.b16 %v441
    %v2015 = vunpack.c.h.b16 %v441
    %v2016 = vunpack.c.l.b16 %v442
    %v2017 = vunpack.c.h.b16 %v442
    %v2018 = vunpack.c.l.b16 %v443
    %v2019 = vunpack.c.h.b16 %v443
    %v2020 = vunpack.c.l.b16 %v444
    %v2021 = vunpack.c.h.b16 %v444
    %v2022 = vunpack.c.l.b16 %v445
    %v2023 = vunpack.c.h.b16 %v445
    %v2024 = vunpack.c.l.b16 %v446
    %v2025 = vunpack.c.h.b16 %v446
    %v2026 = vunpack.c.l.b16 %v447
    %v2027 = vunpack.c.h.b16 %v447
    %v2028 = vunpack.c.l.b16 %v448
    %v2029 = vunpack.c.h.b16 %v448
    %v2030 = vunpack.c.l.b16 %v449
    %v2031 = vunpack.c.h.b16 %v449
    %v2032 = vunpack.c.l.b16 %v450
    %v2033 = vunpack.c.h.b16 %v450
    %v2034 = vunpack.c.l.b16 %v451
    %v2035 = vunpack.c.h.b16 %v451
    %v2036 = vunpack.c.l.b16 %v452
    %v2037 = vunpack.c.h.b16 %v452
    %v2038 = vunpack.c.l.b16 %v453
    %v2039 = vunpack.c.h.b16 %v453
    %v2040 = vunpack.c.l.b16 %v454
    %v2041 = vunpack.c.h.b16 %v454
    %v2042 = vunpack.c.l.b16 %v455
    %v2043 = vunpack.c.h.b16 %v455
    %v2044 = vunpack.c.l.b16 %v456
    %v2045 = vunpack.c.h.b16 %v456
    %v2046 = vunpack.c.l.b16 %v457
    %v2047 = vunpack.c.h.b16 %v457
    %v2048 = vunpack.c.l.b16 %v458
    %v2049 = vunpack.c.h.b16 %v458
    %v2050 = vunpack.c.l.b16 %v459
    %v2051 = vunpack.c.h.b16 %v459
    %v2052 = vunpack.c.l.b16 %v460
    %v2053 = vunpack.c.h.b16 %v460
    %v2054 = vunpack.c.l.b16 %v461
    %v2055 = vunpack.c.h.b16 %v461
    %v2056 = vunpack.c.l.b16 %v462
    %v2057 = vunpack.c.h.b16 %v462
    %v2058 = vunpack.c.l.b16 %v463
    %v2059 = vunpack.c.h.b16 %v463
    %v2060 = vunpack.c.l.b16 %v464
    %v2061 = vunpack.c.h.b16 %v464
    %v2062 = vunpack.c.l.b16 %v465
    %v2063 = vunpack.c.h.b16 %v465
    %v2064 = vunpack.c.l.b16 %v466
    %v2065 = vunpack.c.h.b16 %v466
    %v2066 = vunpack.c.l.b16 %v467
    %v2067 = vunpack.c.h.b16 %v467
    %v2068 = vunpack.c.l.b16 %v468
    %v2069 = vunpack.c.h.b16 %v468
    %v2070 = vunpack.c.l.b16 %v469
    %v2071 = vunpack.c.h.b16 %v469
    %v2072 = vunpack.c.l.b16 %v470
    %v2073 = vunpack.c.h.b16 %v470
    %v2074 = vunpack.c.l.b16 %v471
    %v2075 = vunpack.c.h.b16 %v471
    %v2076 = vunpack.c.l.b16 %v472
    %v2077 = vunpack.c.h.b16 %v472
    %v2078 = vunpack.c.l.b16 %v473
    %v2079 = vunpack.c.h.b16 %v473
    %v2080 = vunpack.c.l.b16 %v474
    %v2081 = vunpack.c.h.b16 %v474
    %v2082 = vunpack.c.l.b16 %v475
    %v2083 = vunpack.c.h.b16 %v475
    %v2084 = vunpack.c.l.b16 %v476
    %v2085 = vunpack.c.h.b16 %v476
    %v2086 = vunpack.c.l.b16 %v477
    %v2087 = vunpack.c.h.b16 %v477
    %v2088 = vunpack.c.l.b16 %v478
    %v2089 = vunpack.c.h.b16 %v478
    %v2090 = vunpack.c.l.b16 %v479
    %v2091 = vunpack.c.h.b16 %v479
    %v2092 = vunpack.c.l.b16 %v480
    %v2093 = vunpack.c.h.b16 %v480
    %v2094 = vunpack.c.l.b16 %v481
    %v2095 = vunpack.c.h.b16 %v481
    %v2096 = vunpack.c.l.b16 %v482
    %v2097 = vunpack.c.h.b16 %v482
    %v2098 = vunpack.c.l.b16 %v483
    %v2099 = vunpack.c.h.b16 %v483
    %v2100 = vunpack.c.l.b16 %v484
    %v2101 = vunpack.c.h.b16 %v484
    %v2102 = vunpack.c.l.b16 %v485
    %v2103 = vunpack.c.h.b16 %v485
    %v2104 = vunpack.c.l.b16 %v486
    %v2105 = vunpack.c.h.b16 %v486
    %v2106 = vunpack.c.l.b16 %v487
    %v2107 = vunpack.c.h.b16 %v487
    %v2108 = vunpack.c.l.b16 %v488
    %v2109 = vunpack.c.h.b16 %v488
    %v2110 = vunpack.c.l.b16 %v489
    %v2111 = vunpack.c.h.b16 %v489
    %v2112 = vunpack.c.l.b16 %v490
    %v2113 = vunpack.c.h.b16 %v490
    %v2114 = vunpack.c.l.b16 %v491
    %v2115 = vunpack.c.h.b16 %v491
    %v2116 = vunpack.c.l.b16 %v492
    %v2117 = vunpack.c.h.b16 %v492
    %v2118 = vunpack.c.l.b16 %v493
    %v2119 = vunpack.c.h.b16 %v493
    %v2120 = vunpack.c.l.b16 %v494
    %v2121 = vunpack.c.h.b16 %v494
    %v2122 = vunpack.c.l.b16 %v495
    %v2123 = vunpack.c.h.b16 %v495
    %v2124 = vunpack.c.l.b16 %v496
    %v2125 = vunpack.c.h.b16 %v496
    %v2126 = vunpack.c.l.b16 %v497
    %v2127 = vunpack.c.h.b16 %v497
    %v2128 = vunpack.c.l.b16 %v498
    %v2129 = vunpack.c.h.b16 %v498
    %v2130 = vunpack.c.l.b16 %v499
    %v2131 = vunpack.c.h.b16 %v499
    %v2132 = vunpack.c.l.b16 %v500
    %v2133 = vunpack.c.h.b16 %v500
    %v2134 = vunpack.c.l.b16 %v501
    %v2135 = vunpack.c.h.b16 %v501
    %v2136 = vunpack.c.l.b16 %v502
    %v2137 = vunpack.c.h.b16 %v502
    %v2138 = vunpack.c.l.b16 %v503
    %v2139 = vunpack.c.h.b16 %v503
    %v2140 = vunpack.c.l.b16 %v504
    %v2141 = vunpack.c.h.b16 %v504
    %v2142 = vunpack.c.l.b16 %v505
    %v2143 = vunpack.c.h.b16 %v505
    %v2144 = vunpack.c.l.b16 %v506
    %v2145 = vunpack.c.h.b16 %v506
    %v2146 = vunpack.c.l.b16 %v507
    %v2147 = vunpack.c.h.b16 %v507
    %v2148 = vunpack.c.l.b16 %v508
    %v2149 = vunpack.c.h.b16 %v508
    %v2150 = vunpack.c.l.b16 %v509
    %v2151 = vunpack.c.h.b16 %v509
    %v2152 = vunpack.c.l.b16 %v510
    %v2153 = vunpack.c.h.b16 %v510
    %v2154 = vunpack.c.l.b16 %v511
    %v2155 = vunpack.c.h.b16 %v511
    %v2156 = vunpack.c.l.b16 %v512
    %v2157 = vunpack.c.h.b16 %v512
    %v2158 = vunpack.c.l.b16 %v513
    %v2159 = vunpack.c.h.b16 %v513
    %v2160 = vunpack.c.l.b16 %v514
    %v2161 = vunpack.c.h.b16 %v514
    %v2162 = vunpack.c.l.b16 %v515
    %v2163 = vunpack.c.h.b16 %v515
    %v2164 = vunpack.c.l.b16 %v516
    %v2165 = vunpack.c.h.b16 %v516
    %v2166 = vunpack.c.l.b16 %v517
    %v2167 = vunpack.c.h.b16 %v517
    %v2168 = vunpack.c.l.b16 %v518
    %v2169 = vunpack.c.h.b16 %v518
    %v2170 = vunpack.c.l.b16 %v519
    %v2171 = vunpack.c.h.b16 %v519
    %v2172 = vunpack.c.l.b16 %v520
    %v2173 = vunpack.c.h.b16 %v520
    %v2174 = vunpack.c.l.b16 %v521
    %v2175 = vunpack.c.h.b16 %v521
    %v2176 = vunpack.c.l.b16 %v522
    %v2177 = vunpack.c.h.b16 %v522
    %v2178 = vunpack.c.l.b16 %v523
    %v2179 = vunpack.c.h.b16 %v523
    %v2180 = vunpack.c.l.b16 %v524
    %v2181 = vunpack.c.h.b16 %v524
    %v2182 = vunpack.c.l.b16 %v525
    %v2183 = vunpack.c.h.b16 %v525
    %v2184 = vunpack.c.l.b16 %v526
    %v2185 = vunpack.c.h.b16 %v526
    %v2186 = vunpack.c.l.b16 %v527
    %v2187 = vunpack.c.h.b16 %v527
    %v2188 = vunpack.c.l.b16 %v528
    %v2189 = vunpack.c.h.b16 %v528
    %v2190 = vunpack.c.l.b16 %v529
    %v2191 = vunpack.c.h.b16 %v529
    %v2192 = vunpack.c.l.b16 %v530
    %v2193 = vunpack.c.h.b16 %v530
    %v2194 = vunpack.c.l.b16 %v531
    %v2195 = vunpack.c.h.b16 %v531
    %v2196 = vunpack.c.l.b16 %v532
    %v2197 = vunpack.c.h.b16 %v532
    %v2198 = vunpack.c.l.b16 %v533
    %v2199 = vunpack.c.h.b16 %v533
    %v2200 = vunpack.c.l.b16 %v534
    %v2201 = vunpack.c.h.b16 %v534
    %v2202 = vunpack.c.l.b16 %v535
    %v2203 = vunpack.c.h.b16 %v535
    %v2204 = vunpack.c.l.b16 %v536
    %v2205 = vunpack.c.h.b16 %v536
    %v2206 = vunpack.c.l.b16 %v537
    %v2207 = vunpack.c.h.b16 %v537
    %v2208 = vunpack.c.l.b16 %v538
    %v2209 = vunpack.c.h.b16 %v538
    %v2210 = vunpack.c.l.b16 %v539
    %v2211 = vunpack.c.h.b16 %v539
    %v2212 = vunpack.c.l.b16 %v540
    %v2213 = vunpack.c.h.b16 %v540
    %v2214 = vunpack.c.l.b16 %v541
    %v2215 = vunpack.c.h.b16 %v541
    %v2216 = vpack.c.b16 %v1196, %v1192
    %v2217 = vpack.c.b16 %v1197, %v1193
    %v2218 = vpack.c.b16 %v1198, %v1194
    %v2219 = vpack.c.b16 %v1199, %v1195
    %v2220 = vpack.c.b16 %v1204, %v1200
    %v2221 = vpack.c.b16 %v1205, %v1201
    %v2222 = vpack.c.b16 %v1206, %v1202
    %v2223 = vpack.c.b16 %v1207, %v1203
    %v2224 = vpack.c.b16 %v1212, %v1208
    %v2225 = vpack.c.b16 %v1213, %v1209
    %v2226 = vpack.c.b16 %v1214, %v1210
    %v2227 = vpack.c.b16 %v1215, %v1211
    %v2228 = vpack.c.b16 %v1220, %v1216
    %v2229 = vpack.c.b16 %v1221, %v1217
    %v2230 = vpack.c.b16 %v1222, %v1218
    %v2231 = vpack.c.b16 %v1223, %v1219
    %v2232 = vpack.c.b16 %v1228, %v1224
    %v2233 = vpack.c.b16 %v1229, %v1225
    %v2234 = vpack.c.b16 %v1230, %v1226
    %v2235 = vpack.c.b16 %v1231, %v1227
    %v2236 = vpack.c.b16 %v1236, %v1232
    %v2237 = vpack.c.b16 %v1237, %v1233
    %v2238 = vpack.c.b16 %v1238, %v1234
    %v2239 = vpack.c.b16 %v1239, %v1235
    %v2240 = vpack.c.b16 %v1244, %v1240
    %v2241 = vpack.c.b16 %v1245, %v1241
    %v2242 = vpack.c.b16 %v1246, %v1242
    %v2243 = vpack.c.b16 %v1247, %v1243
    %v2244 = vpack.c.b16 %v1252, %v1248
    %v2245 = vpack.c.b16 %v1253, %v1249
    %v2246 = vpack.c.b16 %v1254, %v1250
    %v2247 = vpack.c.b16 %v1255, %v1251
    %v2248 = vpack.c.b16 %v1260, %v1256
    %v2249 = vpack.c.b16 %v1261, %v1257
    %v2250 = vpack.c.b16 %v1262, %v1258
    %v2251 = vpack.c.b16 %v1263, %v1259
    %v2252 = vpack.c.b16 %v1268, %v1264
    %v2253 = vpack.c.b16 %v1269, %v1265
    %v2254 = vpack.c.b16 %v1270, %v1266
    %v2255 = vpack.c.b16 %v1271, %v1267
    %v2256 = vpack.c.b16 %v1276, %v1272
    %v2257 = vpack.c.b16 %v1277, %v1273
    %v2258 = vpack.c.b16 %v1278, %v1274
    %v2259 = vpack.c.b16 %v1279, %v1275
    %v2260 = vpack.c.b16 %v1284, %v1280
    %v2261 = vpack.c.b16 %v1285, %v1281
    %v2262 = vpack.c.b16 %v1286, %v1282
    %v2263 = vpack.c.b16 %v1287, %v1283
    %v2264 = vpack.c.b16 %v1292, %v1288
    %v2265 = vpack.c.b16 %v1293, %v1289
    %v2266 = vpack.c.b16 %v1294, %v1290
    %v2267 = vpack.c.b16 %v1295, %v1291
    %v2268 = vpack.c.b16 %v1300, %v1296
    %v2269 = vpack.c.b16 %v1301, %v1297
    %v2270 = vpack.c.b16 %v1302, %v1298
    %v2271 = vpack.c.b16 %v1303, %v1299
    %v2272 = vpack.c.b16 %v1308, %v1304
    %v2273 = vpack.c.b16 %v1309, %v1305
    %v2274 = vpack.c.b16 %v1310, %v1306
    %v2275 = vpack.c.b16 %v1311, %v1307
    %v2276 = vpack.c.b16 %v1316, %v1312
    %v2277 = vpack.c.b16 %v1317, %v1313
    %v2278 = vpack.c.b16 %v1318, %v1314
    %v2279 = vpack.c.b16 %v1319, %v1315
    %v2280 = vpack.c.b16 %v1324, %v1320
    %v2281 = vpack.c.b16 %v1325, %v1321
    %v2282 = vpack.c.b16 %v1326, %v1322
    %v2283 = vpack.c.b16 %v1327, %v1323
    %v2284 = vpack.c.b16 %v1332, %v1328
    %v2285 = vpack.c.b16 %v1333, %v1329
    %v2286 = vpack.c.b16 %v1334, %v1330
    %v2287 = vpack.c.b16 %v1335, %v1331
    %v2288 = vpack.c.b16 %v1340, %v1336
    %v2289 = vpack.c.b16 %v1341, %v1337
    %v2290 = vpack.c.b16 %v1342, %v1338
    %v2291 = vpack.c.b16 %v1343, %v1339
    %v2292 = vpack.c.b16 %v1348, %v1344
    %v2293 = vpack.c.b16 %v1349, %v1345
    %v2294 = vpack.c.b16 %v1350, %v1346
    %v2295 = vpack.c.b16 %v1351, %v1347
    %v2296 = vpack.c.b16 %v1356, %v1352
    %v2297 = vpack.c.b16 %v1357, %v1353
    %v2298 = vpack.c.b16 %v1358, %v1354
    %v2299 = vpack.c.b16 %v1359, %v1355
    %v2300 = vpack.c.b16 %v1364, %v1360
    %v2301 = vpack.c.b16 %v1365, %v1361
    %v2302 = vpack.c.b16 %v1366, %v1362
    %v2303 = vpack.c.b16 %v1367, %v1363
    %v2304 = vpack.c.b16 %v1372, %v1368
    %v2305 = vpack.c.b16 %v1373, %v1369
    %v2306 = vpack.c.b16 %v1374, %v1370
    %v2307 = vpack.c.b16 %v1375, %v1371
    %v2308 = vpack.c.b16 %v1380, %v1376
    %v2309 = vpack.c.b16 %v1381, %v1377
    %v2310 = vpack.c.b16 %v1382, %v1378
    %v2311 = vpack.c.b16 %v1383, %v1379
    %v2312 = vpack.c.b16 %v1388, %v1384
    %v2313 = vpack.c.b16 %v1389, %v1385
    %v2314 = vpack.c.b16 %v1390, %v1386
    %v2315 = vpack.c.b16 %v1391, %v1387
    %v2316 = vpack.c.b16 %v1396, %v1392
    %v2317 = vpack.c.b16 %v1397, %v1393
    %v2318 = vpack.c.b16 %v1398, %v1394
    %v2319 = vpack.c.b16 %v1399, %v1395
    %v2320 = vpack.c.b16 %v1404, %v1400
    %v2321 = vpack.c.b16 %v1405, %v1401
    %v2322 = vpack.c.b16 %v1406, %v1402
    %v2323 = vpack.c.b16 %v1407, %v1403
    %v2324 = vpack.c.b16 %v1412, %v1408
    %v2325 = vpack.c.b16 %v1413, %v1409
    %v2326 = vpack.c.b16 %v1414, %v1410
    %v2327 = vpack.c.b16 %v1415, %v1411
    %v2328 = vpack.c.b16 %v1420, %v1416
    %v2329 = vpack.c.b16 %v1421, %v1417
    %v2330 = vpack.c.b16 %v1422, %v1418
    %v2331 = vpack.c.b16 %v1423, %v1419
    %v2332 = vpack.c.b16 %v1428, %v1424
    %v2333 = vpack.c.b16 %v1429, %v1425
    %v2334 = vpack.c.b16 %v1430, %v1426
    %v2335 = vpack.c.b16 %v1431, %v1427
    %v2336 = vpack.c.b16 %v1436, %v1432
    %v2337 = vpack.c.b16 %v1437, %v1433
    %v2338 = vpack.c.b16 %v1438, %v1434
    %v2339 = vpack.c.b16 %v1439, %v1435
    %v2340 = vpack.c.b16 %v1444, %v1440
    %v2341 = vpack.c.b16 %v1445, %v1441
    %v2342 = vpack.c.b16 %v1446, %v1442
    %v2343 = vpack.c.b16 %v1447, %v1443
    %v2344 = vpack.c.b16 %v1452, %v1448
    %v2345 = vpack.c.b16 %v1453, %v1449
    %v2346 = vpack.c.b16 %v1454, %v1450
    %v2347 = vpack.c.b16 %v1455, %v1451
    %v2348 = vpack.c.b16 %v1460, %v1456
    %v2349 = vpack.c.b16 %v1461, %v1457
    %v2350 = vpack.c.b16 %v1462, %v1458
    %v2351 = vpack.c.b16 %v1463, %v1459
    %v2352 = vpack.c.b16 %v1468, %v1464
    %v2353 = vpack.c.b16 %v1469, %v1465
    %v2354 = vpack.c.b16 %v1470, %v1466
    %v2355 = vpack.c.b16 %v1471, %v1467
    %v2356 = vpack.c.b16 %v1476, %v1472
    %v2357 = vpack.c.b16 %v1477, %v1473
    %v2358 = vpack.c.b16 %v1478, %v1474
    %v2359 = vpack.c.b16 %v1479, %v1475
    %v2360 = vpack.c.b16 %v1484, %v1480
    %v2361 = vpack.c.b16 %v1485, %v1481
    %v2362 = vpack.c.b16 %v1486, %v1482
    %v2363 = vpack.c.b16 %v1487, %v1483
    %v2364 = vpack.c.b16 %v1492, %v1488
    %v2365 = vpack.c.b16 %v1493, %v1489
    %v2366 = vpack.c.b16 %v1494, %v1490
    %v2367 = vpack.c.b16 %v1495, %v1491
    %v2368 = vpack.c.b16 %v1500, %v1496
    %v2369 = vpack.c.b16 %v1501, %v1497
    %v2370 = vpack.c.b16 %v1502, %v1498
    %v2371 = vpack.c.b16 %v1503, %v1499
    %v2372 = vpack.c.b16 %v1508, %v1504
    %v2373 = vpack.c.b16 %v1509, %v1505
    %v2374 = vpack.c.b16 %v1510, %v1506
    %v2375 = vpack.c.b16 %v1511, %v1507
    %v2376 = vpack.c.b16 %v1516, %v1512
    %v2377 = vpack.c.b16 %v1517, %v1513
    %v2378 = vpack.c.b16 %v1518, %v1514
    %v2379 = vpack.c.b16 %v1519, %v1515
    %v2380 = vpack.c.b16 %v1524, %v1520
    %v2381 = vpack.c.b16 %v1525, %v1521
    %v2382 = vpack.c.b16 %v1526, %v1522
    %v2383 = vpack.c.b16 %v1527, %v1523
    %v2384 = vpack.c.b16 %v1532, %v1528
    %v2385 = vpack.c.b16 %v1533, %v1529
    %v2386 = vpack.c.b16 %v1534, %v1530
    %v2387 = vpack.c.b16 %v1535, %v1531
    %v2388 = vpack.c.b16 %v1540, %v1536
    %v2389 = vpack.c.b16 %v1541, %v1537
    %v2390 = vpack.c.b16 %v1542, %v1538
    %v2391 = vpack.c.b16 %v1543, %v1539
    %v2392 = vpack.c.b16 %v1548, %v1544
    %v2393 = vpack.c.b16 %v1549, %v1545
    %v2394 = vpack.c.b16 %v1550, %v1546
    %v2395 = vpack.c.b16 %v1551, %v1547
    %v2396 = vpack.c.b16 %v1556, %v1552
    %v2397 = vpack.c.b16 %v1557, %v1553
    %v2398 = vpack.c.b16 %v1558, %v1554
    %v2399 = vpack.c.b16 %v1559, %v1555
    %v2400 = vpack.c.b16 %v1564, %v1560
    %v2401 = vpack.c.b16 %v1565, %v1561
    %v2402 = vpack.c.b16 %v1566, %v1562
    %v2403 = vpack.c.b16 %v1567, %v1563
    %v2404 = vpack.c.b16 %v1572, %v1568
    %v2405 = vpack.c.b16 %v1573, %v1569
    %v2406 = vpack.c.b16 %v1574, %v1570
    %v2407 = vpack.c.b16 %v1575, %v1571
    %v2408 = vpack.c.b16 %v1580, %v1576
    %v2409 = vpack.c.b16 %v1581, %v1577
    %v2410 = vpack.c.b16 %v1582, %v1578
    %v2411 = vpack.c.b16 %v1583, %v1579
    %v2412 = vpack.c.b16 %v1588, %v1584
    %v2413 = vpack.c.b16 %v1589, %v1585
    %v2414 = vpack.c.b16 %v1590, %v1586
    %v2415 = vpack.c.b16 %v1591, %v1587
    %v2416 = vpack.c.b16 %v1596, %v1592
    %v2417 = vpack.c.b16 %v1597, %v1593
    %v2418 = vpack.c.b16 %v1598, %v1594
    %v2419 = vpack.c.b16 %v1599, %v1595
    %v2420 = vpack.c.b16 %v1604, %v1600
    %v2421 = vpack.c.b16 %v1605, %v1601
    %v2422 = vpack.c.b16 %v1606, %v1602
    %v2423 = vpack.c.b16 %v1607, %v1603
    %v2424 = vpack.c.b16 %v1612, %v1608
    %v2425 = vpack.c.b16 %v1613, %v1609
    %v2426 = vpack.c.b16 %v1614, %v1610
    %v2427 = vpack.c.b16 %v1615, %v1611
    %v2428 = vpack.c.b16 %v1620, %v1616
    %v2429 = vpack.c.b16 %v1621, %v1617
    %v2430 = vpack.c.b16 %v1622, %v1618
    %v2431 = vpack.c.b16 %v1623, %v1619
    %v2432 = vpack.c.b16 %v1628, %v1624
    %v2433 = vpack.c.b16 %v1629, %v1625
    %v2434 = vpack.c.b16 %v1630, %v1626
    %v2435 = vpack.c.b16 %v1631, %v1627
    %v2436 = vpack.c.b16 %v1636, %v1632
    %v2437 = vpack.c.b16 %v1637, %v1633
    %v2438 = vpack.c.b16 %v1638, %v1634
    %v2439 = vpack.c.b16 %v1639, %v1635
    %v2440 = vpack.c.b16 %v1644, %v1640
    %v2441 = vpack.c.b16 %v1645, %v1641
    %v2442 = vpack.c.b16 %v1646, %v1642
    %v2443 = vpack.c.b16 %v1647, %v1643
    %v2444 = vpack.c.b16 %v1652, %v1648
    %v2445 = vpack.c.b16 %v1653, %v1649
    %v2446 = vpack.c.b16 %v1654, %v1650
    %v2447 = vpack.c.b16 %v1655, %v1651
    %v2448 = vpack.c.b16 %v1660, %v1656
    %v2449 = vpack.c.b16 %v1661, %v1657
    %v2450 = vpack.c.b16 %v1662, %v1658
    %v2451 = vpack.c.b16 %v1663, %v1659
    %v2452 = vpack.c.b16 %v1668, %v1664
    %v2453 = vpack.c.b16 %v1669, %v1665
    %v2454 = vpack.c.b16 %v1670, %v1666
    %v2455 = vpack.c.b16 %v1671, %v1667
    %v2456 = vpack.c.b16 %v1676, %v1672
    %v2457 = vpack.c.b16 %v1677, %v1673
    %v2458 = vpack.c.b16 %v1678, %v1674
    %v2459 = vpack.c.b16 %v1679, %v1675
    %v2460 = vpack.c.b16 %v1684, %v1680
    %v2461 = vpack.c.b16 %v1685, %v1681
    %v2462 = vpack.c.b16 %v1686, %v1682
    %v2463 = vpack.c.b16 %v1687, %v1683
    %v2464 = vpack.c.b16 %v1692, %v1688
    %v2465 = vpack.c.b16 %v1693, %v1689
    %v2466 = vpack.c.b16 %v1694, %v1690
    %v2467 = vpack.c.b16 %v1695, %v1691
    %v2468 = vpack.c.b16 %v1700, %v1696
    %v2469 = vpack.c.b16 %v1701, %v1697
    %v2470 = vpack.c.b16 %v1702, %v1698
    %v2471 = vpack.c.b16 %v1703, %v1699
    %v2472 = vpack.c.b16 %v1708, %v1704
    %v2473 = vpack.c.b16 %v1709, %v1705
    %v2474 = vpack.c.b16 %v1710, %v1706
    %v2475 = vpack.c.b16 %v1711, %v1707
    %v2476 = vpack.c.b16 %v1716, %v1712
    %v2477 = vpack.c.b16 %v1717, %v1713
    %v2478 = vpack.c.b16 %v1718, %v1714
    %v2479 = vpack.c.b16 %v1719, %v1715
    %v2480 = vpack.c.b16 %v1724, %v1720
    %v2481 = vpack.c.b16 %v1725, %v1721
    %v2482 = vpack.c.b16 %v1726, %v1722
    %v2483 = vpack.c.b16 %v1727, %v1723
    %v2484 = vpack.c.b16 %v1732, %v1728
    %v2485 = vpack.c.b16 %v1733, %v1729
    %v2486 = vpack.c.b16 %v1734, %v1730
    %v2487 = vpack.c.b16 %v1735, %v1731
    %v2488 = vpack.c.b16 %v1740, %v1736
    %v2489 = vpack.c.b16 %v1741, %v1737
    %v2490 = vpack.c.b16 %v1742, %v1738
    %v2491 = vpack.c.b16 %v1743, %v1739
    %v2492 = vpack.c.b16 %v1748, %v1744
    %v2493 = vpack.c.b16 %v1749, %v1745
    %v2494 = vpack.c.b16 %v1750, %v1746
    %v2495 = vpack.c.b16 %v1751, %v1747
    %v2496 = vpack.c.b16 %v1756, %v1752
    %v2497 = vpack.c.b16 %v1757, %v1753
    %v2498 = vpack.c.b16 %v1758, %v1754
    %v2499 = vpack.c.b16 %v1759, %v1755
    %v2500 = vpack.c.b16 %v1764, %v1760
    %v2501 = vpack.c.b16 %v1765, %v1761
    %v2502 = vpack.c.b16 %v1766, %v1762
    %v2503 = vpack.c.b16 %v1767, %v1763
    %v2504 = vpack.c.b16 %v1772, %v1768
    %v2505 = vpack.c.b16 %v1773, %v1769
    %v2506 = vpack.c.b16 %v1774, %v1770
    %v2507 = vpack.c.b16 %v1775, %v1771
    %v2508 = vpack.c.b16 %v1780, %v1776
    %v2509 = vpack.c.b16 %v1781, %v1777
    %v2510 = vpack.c.b16 %v1782, %v1778
    %v2511 = vpack.c.b16 %v1783, %v1779
    %v2512 = vpack.c.b16 %v1788, %v1784
    %v2513 = vpack.c.b16 %v1789, %v1785
    %v2514 = vpack.c.b16 %v1790, %v1786
    %v2515 = vpack.c.b16 %v1791, %v1787
    %v2516 = vpack.c.b16 %v1796, %v1792
    %v2517 = vpack.c.b16 %v1797, %v1793
    %v2518 = vpack.c.b16 %v1798, %v1794
    %v2519 = vpack.c.b16 %v1799, %v1795
    %v2520 = vpack.c.b16 %v1804, %v1800
    %v2521 = vpack.c.b16 %v1805, %v1801
    %v2522 = vpack.c.b16 %v1806, %v1802
    %v2523 = vpack.c.b16 %v1807, %v1803
    %v2524 = vpack.c.b16 %v1812, %v1808
    %v2525 = vpack.c.b16 %v1813, %v1809
    %v2526 = vpack.c.b16 %v1814, %v1810
    %v2527 = vpack.c.b16 %v1815, %v1811
    %v2528 = vpack.c.b16 %v1820, %v1816
    %v2529 = vpack.c.b16 %v1821, %v1817
    %v2530 = vpack.c.b16 %v1822, %v1818
    %v2531 = vpack.c.b16 %v1823, %v1819
    %v2532 = vpack.c.b16 %v1828, %v1824
    %v2533 = vpack.c.b16 %v1829, %v1825
    %v2534 = vpack.c.b16 %v1830, %v1826
    %v2535 = vpack.c.b16 %v1831, %v1827
    %v2536 = vpack.c.b16 %v1836, %v1832
    %v2537 = vpack.c.b16 %v1837, %v1833
    %v2538 = vpack.c.b16 %v1838, %v1834
    %v2539 = vpack.c.b16 %v1839, %v1835
    %v2540 = vpack.c.b16 %v1844, %v1840
    %v2541 = vpack.c.b16 %v1845, %v1841
    %v2542 = vpack.c.b16 %v1846, %v1842
    %v2543 = vpack.c.b16 %v1847, %v1843
    %v2544 = vpack.c.b16 %v1852, %v1848
    %v2545 = vpack.c.b16 %v1853, %v1849
    %v2546 = vpack.c.b16 %v1854, %v1850
    %v2547 = vpack.c.b16 %v1855, %v1851
    %v2548 = vpack.c.b16 %v1860, %v1856
    %v2549 = vpack.c.b16 %v1861, %v1857
    %v2550 = vpack.c.b16 %v1862, %v1858
    %v2551 = vpack.c.b16 %v1863, %v1859
    %v2552 = vpack.c.b16 %v1868, %v1864
    %v2553 = vpack.c.b16 %v1869, %v1865
    %v2554 = vpack.c.b16 %v1870, %v1866
    %v2555 = vpack.c.b16 %v1871, %v1867
    %v2556 = vpack.c.b16 %v1876, %v1872
    %v2557 = vpack.c.b16 %v1877, %v1873
    %v2558 = vpack.c.b16 %v1878, %v1874
    %v2559 = vpack.c.b16 %v1879, %v1875
    %v2560 = vpack.c.b16 %v1884, %v1880
    %v2561 = vpack.c.b16 %v1885, %v1881
    %v2562 = vpack.c.b16 %v1886, %v1882
    %v2563 = vpack.c.b16 %v1887, %v1883
    %v2564 = vpack.c.b16 %v1892, %v1888
    %v2565 = vpack.c.b16 %v1893, %v1889
    %v2566 = vpack.c.b16 %v1894, %v1890
    %v2567 = vpack.c.b16 %v1895, %v1891
    %v2568 = vpack.c.b16 %v1900, %v1896
    %v2569 = vpack.c.b16 %v1901, %v1897
    %v2570 = vpack.c.b16 %v1902, %v1898
    %v2571 = vpack.c.b16 %v1903, %v1899
    %v2572 = vpack.c.b16 %v1908, %v1904
    %v2573 = vpack.c.b16 %v1909, %v1905
    %v2574 = vpack.c.b16 %v1910, %v1906
    %v2575 = vpack.c.b16 %v1911, %v1907
    %v2576 = vpack.c.b16 %v1916, %v1912
    %v2577 = vpack.c.b16 %v1917, %v1913
    %v2578 = vpack.c.b16 %v1918, %v1914
    %v2579 = vpack.c.b16 %v1919, %v1915
    %v2580 = vpack.c.b16 %v1924, %v1920
    %v2581 = vpack.c.b16 %v1925, %v1921
    %v2582 = vpack.c.b16 %v1926, %v1922
    %v2583 = vpack.c.b16 %v1927, %v1923
    %v2584 = vpack.c.b16 %v1932, %v1928
    %v2585 = vpack.c.b16 %v1933, %v1929
    %v2586 = vpack.c.b16 %v1934, %v1930
    %v2587 = vpack.c.b16 %v1935, %v1931
    %v2588 = vpack.c.b16 %v1940, %v1936
    %v2589 = vpack.c.b16 %v1941, %v1937
    %v2590 = vpack.c.b16 %v1942, %v1938
    %v2591 = vpack.c.b16 %v1943, %v1939
    %v2592 = vpack.c.b16 %v1948, %v1944
    %v2593 = vpack.c.b16 %v1949, %v1945
    %v2594 = vpack.c.b16 %v1950, %v1946
    %v2595 = vpack.c.b16 %v1951, %v1947
    %v2596 = vpack.c.b16 %v1956, %v1952
    %v2597 = vpack.c.b16 %v1957, %v1953
    %v2598 = vpack.c.b16 %v1958, %v1954
    %v2599 = vpack.c.b16 %v1959, %v1955
    %v2600 = vpack.c.b16 %v1964, %v1960
    %v2601 = vpack.c.b16 %v1965, %v1961
    %v2602 = vpack.c.b16 %v1966, %v1962
    %v2603 = vpack.c.b16 %v1967, %v1963
    %v2604 = vpack.c.b16 %v1972, %v1968
    %v2605 = vpack.c.b16 %v1973, %v1969
    %v2606 = vpack.c.b16 %v1974, %v1970
    %v2607 = vpack.c.b16 %v1975, %v1971
    %v2608 = vpack.c.b16 %v1980, %v1976
    %v2609 = vpack.c.b16 %v1981, %v1977
    %v2610 = vpack.c.b16 %v1982, %v1978
    %v2611 = vpack.c.b16 %v1983, %v1979
    %v2612 = vpack.c.b16 %v1988, %v1984
    %v2613 = vpack.c.b16 %v1989, %v1985
    %v2614 = vpack.c.b16 %v1990, %v1986
    %v2615 = vpack.c.b16 %v1991, %v1987
    %v2616 = vpack.c.b16 %v1996, %v1992
    %v2617 = vpack.c.b16 %v1997, %v1993
    %v2618 = vpack.c.b16 %v1998, %v1994
    %v2619 = vpack.c.b16 %v1999, %v1995
    %v2620 = vpack.c.b16 %v2004, %v2000
    %v2621 = vpack.c.b16 %v2005, %v2001
    %v2622 = vpack.c.b16 %v2006, %v2002
    %v2623 = vpack.c.b16 %v2007, %v2003
    %v2624 = vpack.c.b16 %v2012, %v2008
    %v2625 = vpack.c.b16 %v2013, %v2009
    %v2626 = vpack.c.b16 %v2014, %v2010
    %v2627 = vpack.c.b16 %v2015, %v2011
    %v2628 = vpack.c.b16 %v2020, %v2016
    %v2629 = vpack.c.b16 %v2021, %v2017
    %v2630 = vpack.c.b16 %v2022, %v2018
    %v2631 = vpack.c.b16 %v2023, %v2019
    %v2632 = vpack.c.b16 %v2028, %v2024
    %v2633 = vpack.c.b16 %v2029, %v2025
    %v2634 = vpack.c.b16 %v2030, %v2026
    %v2635 = vpack.c.b16 %v2031, %v2027
    %v2636 = vpack.c.b16 %v2036, %v2032
    %v2637 = vpack.c.b16 %v2037, %v2033
    %v2638 = vpack.c.b16 %v2038, %v2034
    %v2639 = vpack.c.b16 %v2039, %v2035
    %v2640 = vpack.c.b16 %v2044, %v2040
    %v2641 = vpack.c.b16 %v2045, %v2041
    %v2642 = vpack.c.b16 %v2046, %v2042
    %v2643 = vpack.c.b16 %v2047, %v2043
    %v2644 = vpack.c.b16 %v2052, %v2048
    %v2645 = vpack.c.b16 %v2053, %v2049
    %v2646 = vpack.c.b16 %v2054, %v2050
    %v2647 = vpack.c.b16 %v2055, %v2051
    %v2648 = vpack.c.b16 %v2060, %v2056
    %v2649 = vpack.c.b16 %v2061, %v2057
    %v2650 = vpack.c.b16 %v2062, %v2058
    %v2651 = vpack.c.b16 %v2063, %v2059
    %v2652 = vpack.c.b16 %v2068, %v2064
    %v2653 = vpack.c.b16 %v2069, %v2065
    %v2654 = vpack.c.b16 %v2070, %v2066
    %v2655 = vpack.c.b16 %v2071, %v2067
    %v2656 = vpack.c.b16 %v2076, %v2072
    %v2657 = vpack.c.b16 %v2077, %v2073
    %v2658 = vpack.c.b16 %v2078, %v2074
    %v2659 = vpack.c.b16 %v2079, %v2075
    %v2660 = vpack.c.b16 %v2084, %v2080
    %v2661 = vpack.c.b16 %v2085, %v2081
    %v2662 = vpack.c.b16 %v2086, %v2082
    %v2663 = vpack.c.b16 %v2087, %v2083
    %v2664 = vpack.c.b16 %v2092, %v2088
    %v2665 = vpack.c.b16 %v2093, %v2089
    %v2666 = vpack.c.b16 %v2094, %v2090
    %v2667 = vpack.c.b16 %v2095, %v2091
    %v2668 = vpack.c.b16 %v2100, %v2096
    %v2669 = vpack.c.b16 %v2101, %v2097
    %v2670 = vpack.c.b16 %v2102, %v2098
    %v2671 = vpack.c.b16 %v2103, %v2099
    %v2672 = vpack.c.b16 %v2108, %v2104
    %v2673 = vpack.c.b16 %v2109, %v2105
    %v2674 = vpack.c.b16 %v2110, %v2106
    %v2675 = vpack.c.b16 %v2111, %v2107
    %v2676 = vpack.c.b16 %v2116, %v2112
    %v2677 = vpack.c.b16 %v2117, %v2113
    %v2678 = vpack.c.b16 %v2118, %v2114
    %v2679 = vpack.c.b16 %v2119, %v2115
    %v2680 = vpack.c.b16 %v2124, %v2120
    %v2681 = vpack.c.b16 %v2125, %v2121
    %v2682 = vpack.c.b16 %v2126, %v2122
    %v2683 = vpack.c.b16 %v2127, %v2123
    %v2684 = vpack.c.b16 %v2132, %v2128
    %v2685 = vpack.c.b16 %v2133, %v2129
    %v2686 = vpack.c.b16 %v2134, %v2130
    %v2687 = vpack.c.b16 %v2135, %v2131
    %v2688 = vpack.c.b16 %v2140, %v2136
    %v2689 = vpack.c.b16 %v2141, %v2137
    %v2690 = vpack.c.b16 %v2142, %v2138
    %v2691 = vpack.c.b16 %v2143, %v2139
    %v2692 = vpack.c.b16 %v2148, %v2144
    %v2693 = vpack.c.b16 %v2149, %v2145
    %v2694 = vpack.c.b16 %v2150, %v2146
    %v2695 = vpack.c.b16 %v2151, %v2147
    %v2696 = vpack.c.b16 %v2156, %v2152
    %v2697 = vpack.c.b16 %v2157, %v2153
    %v2698 = vpack.c.b16 %v2158, %v2154
    %v2699 = vpack.c.b16 %v2159, %v2155
    %v2700 = vpack.c.b16 %v2164, %v2160
    %v2701 = vpack.c.b16 %v2165, %v2161
    %v2702 = vpack.c.b16 %v2166, %v2162
    %v2703 = vpack.c.b16 %v2167, %v2163
    %v2704 = vpack.c.b16 %v2172, %v2168
    %v2705 = vpack.c.b16 %v2173, %v2169
    %v2706 = vpack.c.b16 %v2174, %v2170
    %v2707 = vpack.c.b16 %v2175, %v2171
    %v2708 = vpack.c.b16 %v2180, %v2176
    %v2709 = vpack.c.b16 %v2181, %v2177
    %v2710 = vpack.c.b16 %v2182, %v2178
    %v2711 = vpack.c.b16 %v2183, %v2179
    %v2712 = vpack.c.b16 %v2188, %v2184
    %v2713 = vpack.c.b16 %v2189, %v2185
    %v2714 = vpack.c.b16 %v2190, %v2186
    %v2715 = vpack.c.b16 %v2191, %v2187
    %v2716 = vpack.c.b16 %v2196, %v2192
    %v2717 = vpack.c.b16 %v2197, %v2193
    %v2718 = vpack.c.b16 %v2198, %v2194
    %v2719 = vpack.c.b16 %v2199, %v2195
    %v2720 = vpack.c.b16 %v2204, %v2200
    %v2721 = vpack.c.b16 %v2205, %v2201
    %v2722 = vpack.c.b16 %v2206, %v2202
    %v2723 = vpack.c.b16 %v2207, %v2203
    %v2724 = vpack.c.b16 %v2212, %v2208
    %v2725 = vpack.c.b16 %v2213, %v2209
    %v2726 = vpack.c.b16 %v2214, %v2210
    %v2727 = vpack.c.b16 %v2215, %v2211
    %3240 = vmatprep.subr.bf16.mxu0 %v2217
    %3241 = vmatpush1.bf16.msra.mxu0 %v2216
    %3242 = vmatprep.subr.bf16.mxu0 %v2221
    %3243 = vmatpush1.bf16.msra.mxu0 %v2220
    %3244 = vmatprep.subr.bf16.mxu0 %v2225
    %3245 = vmatpush1.bf16.msra.mxu0 %v2224
    %3246 = vmatprep.subr.bf16.mxu0 %v2229
    %3247 = vmatpush1.bf16.msra.mxu0 %v2228
    %3248 = vmatprep.subr.bf16.mxu0 %v2233
    %3249 = vmatpush1.bf16.msra.mxu0 %v2232
    %3250 = vmatprep.subr.bf16.mxu0 %v2237
    %3251 = vmatpush1.bf16.msra.mxu0 %v2236
    %3252 = vmatprep.subr.bf16.mxu0 %v2241
    %3253 = vmatpush1.bf16.msra.mxu0 %v2240
    %3254 = vmatprep.subr.bf16.mxu0 %v2245
    %3255 = vmatpush1.bf16.msra.mxu0 %v2244
    %3256 = vmatprep.subr.bf16.mxu0 %v2249
    %3257 = vmatpush1.bf16.msra.mxu0 %v2248
    %3258 = vmatprep.subr.bf16.mxu0 %v2253
    %3259 = vmatpush1.bf16.msra.mxu0 %v2252
    %3260 = vmatprep.subr.bf16.mxu0 %v2257
    %3261 = vmatpush1.bf16.msra.mxu0 %v2256
    %3262 = vmatprep.subr.bf16.mxu0 %v2261
    %3263 = vmatpush1.bf16.msra.mxu0 %v2260
    %3264 = vmatprep.subr.bf16.mxu0 %v2265
    %3265 = vmatpush1.bf16.msra.mxu0 %v2264
    %3266 = vmatprep.subr.bf16.mxu0 %v2269
    %3267 = vmatpush1.bf16.msra.mxu0 %v2268
    %3268 = vmatprep.subr.bf16.mxu0 %v2273
    %3269 = vmatpush1.bf16.msra.mxu0 %v2272
    %3270 = vmatprep.subr.bf16.mxu0 %v2277
    %3271 = vmatpush1.bf16.msra.mxu0 %v2276
    %3272 = vmatprep.mubr.bf16.mxu0 %v603
    %3273 = vmatmul.mubr.bf16.gmra.mrb[0].mxu0 %v589
    %v3274 = vpop.f32.mrb[0].mxu0
    %v3275 = vadd.f32 %v547, %v3274
    %v3276 = vpop.f32.mrb[0].mxu0
    %v3277 = vadd.f32 %v551, %v3276
    %v3278 = vpop.f32.mrb[0].mxu0
    %v3279 = vpop.f32.mrb[0].mxu0
    %3280 = vdwg.mxu0
    %3281 = vmatprep.subr.bf16.mxu0 %v2281
    %3282 = vmatpush1.bf16.msra.mxu0 %v2280
    %3283 = vmatprep.subr.bf16.mxu0 %v2285
    %3284 = vmatpush1.bf16.msra.mxu0 %v2284
    %3285 = vmatprep.subr.bf16.mxu0 %v2289
    %3286 = vmatpush1.bf16.msra.mxu0 %v2288
    %3287 = vmatprep.subr.bf16.mxu0 %v2293
    %3288 = vmatpush1.bf16.msra.mxu0 %v2292
    %3289 = vmatprep.subr.bf16.mxu0 %v2297
    %3290 = vmatpush1.bf16.msra.mxu0 %v2296
    %3291 = vmatprep.subr.bf16.mxu0 %v2301
    %3292 = vmatpush1.bf16.msra.mxu0 %v2300
    %3293 = vmatprep.subr.bf16.mxu0 %v2305
    %3294 = vmatpush1.bf16.msra.mxu0 %v2304
    %3295 = vmatprep.subr.bf16.mxu0 %v2309
    %3296 = vmatpush1.bf16.msra.mxu0 %v2308
    %3297 = vmatprep.subr.bf16.mxu0 %v2313
    %3298 = vmatpush1.bf16.msra.mxu0 %v2312
    %3299 = vmatprep.subr.bf16.mxu0 %v2317
    %3300 = vmatpush1.bf16.msra.mxu0 %v2316
    %3301 = vmatprep.subr.bf16.mxu0 %v2321
    %3302 = vmatpush1.bf16.msra.mxu0 %v2320
    %3303 = vmatprep.subr.bf16.mxu0 %v2325
    %3304 = vmatpush1.bf16.msra.mxu0 %v2324
    %3305 = vmatprep.subr.bf16.mxu0 %v2329
    %3306 = vmatpush1.bf16.msra.mxu0 %v2328
    %3307 = vmatprep.subr.bf16.mxu0 %v2333
    %3308 = vmatpush1.bf16.msra.mxu0 %v2332
    %3309 = vmatprep.subr.bf16.mxu0 %v2337
    %3310 = vmatpush1.bf16.msra.mxu0 %v2336
    %3311 = vmatprep.subr.bf16.mxu0 %v2341
    %3312 = vmatpush1.bf16.msra.mxu0 %v2340
    %3313 = vmatprep.mubr.bf16.mxu0 %v613
    %3314 = vmatmul.mubr.bf16.gmra.mrb[0].mxu0 %v611
    %v3315 = vpop.f32.mrb[0].mxu0
    %v3316 = vadd.f32 %v3275, %v3315
    %v3317 = vpop.f32.mrb[0].mxu0
    %v3318 = vadd.f32 %v3277, %v3317
    %v3319 = vpop.f32.mrb[0].mxu0
    %v3320 = vpop.f32.mrb[0].mxu0
    %3321 = vdwg.mxu0
    %3322 = vmatprep.subr.bf16.mxu0 %v2345
    %3323 = vmatpush1.bf16.msra.mxu0 %v2344
    %3324 = vmatprep.subr.bf16.mxu0 %v2349
    %3325 = vmatpush1.bf16.msra.mxu0 %v2348
    %3326 = vmatprep.subr.bf16.mxu0 %v2353
    %3327 = vmatpush1.bf16.msra.mxu0 %v2352
    %3328 = vmatprep.subr.bf16.mxu0 %v2357
    %3329 = vmatpush1.bf16.msra.mxu0 %v2356
    %3330 = vmatprep.subr.bf16.mxu0 %v2361
    %3331 = vmatpush1.bf16.msra.mxu0 %v2360
    %3332 = vmatprep.subr.bf16.mxu0 %v2365
    %3333 = vmatpush1.bf16.msra.mxu0 %v2364
    %3334 = vmatprep.subr.bf16.mxu0 %v2369
    %3335 = vmatpush1.bf16.msra.mxu0 %v2368
    %3336 = vmatprep.subr.bf16.mxu0 %v2373
    %3337 = vmatpush1.bf16.msra.mxu0 %v2372
    %3338 = vmatprep.subr.bf16.mxu0 %v2377
    %3339 = vmatpush1.bf16.msra.mxu0 %v2376
    %3340 = vmatprep.subr.bf16.mxu0 %v2381
    %3341 = vmatpush1.bf16.msra.mxu0 %v2380
    %3342 = vmatprep.subr.bf16.mxu0 %v2385
    %3343 = vmatpush1.bf16.msra.mxu0 %v2384
    %3344 = vmatprep.subr.bf16.mxu0 %v2389
    %3345 = vmatpush1.bf16.msra.mxu0 %v2388
    %3346 = vmatprep.subr.bf16.mxu0 %v2393
    %3347 = vmatpush1.bf16.msra.mxu0 %v2392
    %3348 = vmatprep.subr.bf16.mxu0 %v2397
    %3349 = vmatpush1.bf16.msra.mxu0 %v2396
    %3350 = vmatprep.subr.bf16.mxu0 %v2401
    %3351 = vmatpush1.bf16.msra.mxu0 %v2400
    %3352 = vmatprep.subr.bf16.mxu0 %v2405
    %3353 = vmatpush1.bf16.msra.mxu0 %v2404
    %3354 = vmatprep.mubr.bf16.mxu0 %v610
    %3355 = vmatmul.mubr.bf16.gmra.mrb[0].mxu0 %v596
    %v3356 = vpop.f32.mrb[0].mxu0
    %v3357 = vadd.f32 %v3316, %v3356
    %v3358 = vpop.f32.mrb[0].mxu0
    %v3359 = vadd.f32 %v3318, %v3358
    %v3360 = vpop.f32.mrb[0].mxu0
    %v3361 = vpop.f32.mrb[0].mxu0
    %3362 = vdwg.mxu0
    %3363 = vmatprep.subr.bf16.mxu0 %v2409
    %3364 = vmatpush1.bf16.msra.mxu0 %v2408
    %3365 = vmatprep.subr.bf16.mxu0 %v2413
    %3366 = vmatpush1.bf16.msra.mxu0 %v2412
    %3367 = vmatprep.subr.bf16.mxu0 %v2417
    %3368 = vmatpush1.bf16.msra.mxu0 %v2416
    %3369 = vmatprep.subr.bf16.mxu0 %v2421
    %3370 = vmatpush1.bf16.msra.mxu0 %v2420
    %3371 = vmatprep.subr.bf16.mxu0 %v2425
    %3372 = vmatpush1.bf16.msra.mxu0 %v2424
    %3373 = vmatprep.subr.bf16.mxu0 %v2429
    %3374 = vmatpush1.bf16.msra.mxu0 %v2428
    %3375 = vmatprep.subr.bf16.mxu0 %v2433
    %3376 = vmatpush1.bf16.msra.mxu0 %v2432
    %3377 = vmatprep.subr.bf16.mxu0 %v2437
    %3378 = vmatpush1.bf16.msra.mxu0 %v2436
    %3379 = vmatprep.subr.bf16.mxu0 %v2441
    %3380 = vmatpush1.bf16.msra.mxu0 %v2440
    %3381 = vmatprep.subr.bf16.mxu0 %v2445
    %3382 = vmatpush1.bf16.msra.mxu0 %v2444
    %3383 = vmatprep.subr.bf16.mxu0 %v2449
    %3384 = vmatpush1.bf16.msra.mxu0 %v2448
    %3385 = vmatprep.subr.bf16.mxu0 %v2453
    %3386 = vmatpush1.bf16.msra.mxu0 %v2452
    %3387 = vmatprep.subr.bf16.mxu0 %v2457
    %3388 = vmatpush1.bf16.msra.mxu0 %v2456
    %3389 = vmatprep.subr.bf16.mxu0 %v2461
    %3390 = vmatpush1.bf16.msra.mxu0 %v2460
    %3391 = vmatprep.subr.bf16.mxu0 %v2465
    %3392 = vmatpush1.bf16.msra.mxu0 %v2464
    %3393 = vmatprep.subr.bf16.mxu0 %v2469
    %3394 = vmatpush1.bf16.msra.mxu0 %v2468
    %3395 = vmatprep.mubr.bf16.mxu0 %v614
    %3396 = vmatmul.mubr.bf16.gmra.mrb[0].mxu0 %v612
    %v3397 = vpop.f32.mrb[0].mxu0
    %v3398 = vadd.f32 %v3357, %v3397
    %v3399 = vpop.f32.mrb[0].mxu0
    %v3400 = vadd.f32 %v3359, %v3399
    %v3401 = vpop.f32.mrb[0].mxu0
    %v3402 = vpop.f32.mrb[0].mxu0
    %3403 = vdwg.mxu0
    %3404 = vmatprep.subr.bf16.mxu0 %v2473
    %3405 = vmatpush1.bf16.msra.mxu0 %v2472
    %3406 = vmatprep.subr.bf16.mxu0 %v2477
    %3407 = vmatpush1.bf16.msra.mxu0 %v2476
    %3408 = vmatprep.subr.bf16.mxu0 %v2481
    %3409 = vmatpush1.bf16.msra.mxu0 %v2480
    %3410 = vmatprep.subr.bf16.mxu0 %v2485
    %3411 = vmatpush1.bf16.msra.mxu0 %v2484
    %3412 = vmatprep.subr.bf16.mxu0 %v2489
    %3413 = vmatpush1.bf16.msra.mxu0 %v2488
    %3414 = vmatprep.subr.bf16.mxu0 %v2493
    %3415 = vmatpush1.bf16.msra.mxu0 %v2492
    %3416 = vmatprep.subr.bf16.mxu0 %v2497
    %3417 = vmatpush1.bf16.msra.mxu0 %v2496
    %3418 = vmatprep.subr.bf16.mxu0 %v2501
    %3419 = vmatpush1.bf16.msra.mxu0 %v2500
    %3420 = vmatprep.subr.bf16.mxu0 %v2505
    %3421 = vmatpush1.bf16.msra.mxu0 %v2504
    %3422 = vmatprep.subr.bf16.mxu0 %v2509
    %3423 = vmatpush1.bf16.msra.mxu0 %v2508
    %3424 = vmatprep.subr.bf16.mxu0 %v2513
    %3425 = vmatpush1.bf16.msra.mxu0 %v2512
    %3426 = vmatprep.subr.bf16.mxu0 %v2517
    %3427 = vmatpush1.bf16.msra.mxu0 %v2516
    %3428 = vmatprep.subr.bf16.mxu0 %v2521
    %3429 = vmatpush1.bf16.msra.mxu0 %v2520
    %3430 = vmatprep.subr.bf16.mxu0 %v2525
    %3431 = vmatpush1.bf16.msra.mxu0 %v2524
    %3432 = vmatprep.subr.bf16.mxu0 %v2529
    %3433 = vmatpush1.bf16.msra.mxu0 %v2528
    %3434 = vmatprep.subr.bf16.mxu0 %v2533
    %3435 = vmatpush1.bf16.msra.mxu0 %v2532
    %3436 = vmatprep.mubr.bf16.mxu0 %v652
    %3437 = vmatmul.mubr.bf16.gmra.mrb[0].mxu0 %v638
    %v3438 = vpop.f32.mrb[0].mxu0
    %v3439 = vadd.f32 %v3398, %v3438
    %v3440 = vpop.f32.mrb[0].mxu0
    %v3441 = vadd.f32 %v3400, %v3440
    %v3442 = vpop.f32.mrb[0].mxu0
    %v3443 = vpop.f32.mrb[0].mxu0
    %3444 = vdwg.mxu0
    %3445 = vmatprep.subr.bf16.mxu0 %v2537
    %3446 = vmatpush1.bf16.msra.mxu0 %v2536
    %3447 = vmatprep.subr.bf16.mxu0 %v2541
    %3448 = vmatpush1.bf16.msra.mxu0 %v2540
    %3449 = vmatprep.subr.bf16.mxu0 %v2545
    %3450 = vmatpush1.bf16.msra.mxu0 %v2544
    %3451 = vmatprep.subr.bf16.mxu0 %v2549
    %3452 = vmatpush1.bf16.msra.mxu0 %v2548
    %3453 = vmatprep.subr.bf16.mxu0 %v2553
    %3454 = vmatpush1.bf16.msra.mxu0 %v2552
    %3455 = vmatprep.subr.bf16.mxu0 %v2557
    %3456 = vmatpush1.bf16.msra.mxu0 %v2556
    %3457 = vmatprep.subr.bf16.mxu0 %v2561
    %3458 = vmatpush1.bf16.msra.mxu0 %v2560
    %3459 = vmatprep.subr.bf16.mxu0 %v2565
    %3460 = vmatpush1.bf16.msra.mxu0 %v2564
    %3461 = vmatprep.subr.bf16.mxu0 %v2569
    %3462 = vmatpush1.bf16.msra.mxu0 %v2568
    %3463 = vmatprep.subr.bf16.mxu0 %v2573
    %3464 = vmatpush1.bf16.msra.mxu0 %v2572
    %3465 = vmatprep.subr.bf16.mxu0 %v2577
    %3466 = vmatpush1.bf16.msra.mxu0 %v2576
    %3467 = vmatprep.subr.bf16.mxu0 %v2581
    %3468 = vmatpush1.bf16.msra.mxu0 %v2580
    %3469 = vmatprep.subr.bf16.mxu0 %v2585
    %3470 = vmatpush1.bf16.msra.mxu0 %v2584
    %3471 = vmatprep.subr.bf16.mxu0 %v2589
    %3472 = vmatpush1.bf16.msra.mxu0 %v2588
    %3473 = vmatprep.subr.bf16.mxu0 %v2593
    %3474 = vmatpush1.bf16.msra.mxu0 %v2592
    %3475 = vmatprep.subr.bf16.mxu0 %v2597
    %3476 = vmatpush1.bf16.msra.mxu0 %v2596
    %3477 = vmatprep.mubr.bf16.mxu0 %v662
    %3478 = vmatmul.mubr.bf16.gmra.mrb[0].mxu0 %v660
    %v3479 = vpop.f32.mrb[0].mxu0
    %v3480 = vadd.f32 %v3439, %v3479
    %v3481 = vpop.f32.mrb[0].mxu0
    %v3482 = vadd.f32 %v3441, %v3481
    %v3483 = vpop.f32.mrb[0].mxu0
    %v3484 = vpop.f32.mrb[0].mxu0
    %3485 = vdwg.mxu0
    %3486 = vmatprep.subr.bf16.mxu0 %v2601
    %3487 = vmatpush1.bf16.msra.mxu0 %v2600
    %3488 = vmatprep.subr.bf16.mxu0 %v2605
    %3489 = vmatpush1.bf16.msra.mxu0 %v2604
    %3490 = vmatprep.subr.bf16.mxu0 %v2609
    %3491 = vmatpush1.bf16.msra.mxu0 %v2608
    %3492 = vmatprep.subr.bf16.mxu0 %v2613
    %3493 = vmatpush1.bf16.msra.mxu0 %v2612
    %3494 = vmatprep.subr.bf16.mxu0 %v2617
    %3495 = vmatpush1.bf16.msra.mxu0 %v2616
    %3496 = vmatprep.subr.bf16.mxu0 %v2621
    %3497 = vmatpush1.bf16.msra.mxu0 %v2620
    %3498 = vmatprep.subr.bf16.mxu0 %v2625
    %3499 = vmatpush1.bf16.msra.mxu0 %v2624
    %3500 = vmatprep.subr.bf16.mxu0 %v2629
    %3501 = vmatpush1.bf16.msra.mxu0 %v2628
    %3502 = vmatprep.subr.bf16.mxu0 %v2633
    %3503 = vmatpush1.bf16.msra.mxu0 %v2632
    %3504 = vmatprep.subr.bf16.mxu0 %v2637
    %3505 = vmatpush1.bf16.msra.mxu0 %v2636
    %3506 = vmatprep.subr.bf16.mxu0 %v2641
    %3507 = vmatpush1.bf16.msra.mxu0 %v2640
    %3508 = vmatprep.subr.bf16.mxu0 %v2645
    %3509 = vmatpush1.bf16.msra.mxu0 %v2644
    %3510 = vmatprep.subr.bf16.mxu0 %v2649
    %3511 = vmatpush1.bf16.msra.mxu0 %v2648
    %3512 = vmatprep.subr.bf16.mxu0 %v2653
    %3513 = vmatpush1.bf16.msra.mxu0 %v2652
    %3514 = vmatprep.subr.bf16.mxu0 %v2657
    %3515 = vmatpush1.bf16.msra.mxu0 %v2656
    %3516 = vmatprep.subr.bf16.mxu0 %v2661
    %3517 = vmatpush1.bf16.msra.mxu0 %v2660
    %3518 = vmatprep.mubr.bf16.mxu0 %v659
    %3519 = vmatmul.mubr.bf16.gmra.mrb[0].mxu0 %v645
    %v3520 = vpop.f32.mrb[0].mxu0
    %v3521 = vadd.f32 %v3480, %v3520
    %v3522 = vpop.f32.mrb[0].mxu0
    %v3523 = vadd.f32 %v3482, %v3522
    %v3524 = vpop.f32.mrb[0].mxu0
    %v3525 = vpop.f32.mrb[0].mxu0
    %3526 = vdwg.mxu0
    %3527 = vmatprep.subr.bf16.mxu0 %v2665
    %3528 = vmatpush1.bf16.msra.mxu0 %v2664
    %3529 = vmatprep.subr.bf16.mxu0 %v2669
    %3530 = vmatpush1.bf16.msra.mxu0 %v2668
    %3531 = vmatprep.subr.bf16.mxu0 %v2673
    %3532 = vmatpush1.bf16.msra.mxu0 %v2672
    %3533 = vmatprep.subr.bf16.mxu0 %v2677
    %3534 = vmatpush1.bf16.msra.mxu0 %v2676
    %3535 = vmatprep.subr.bf16.mxu0 %v2681
    %3536 = vmatpush1.bf16.msra.mxu0 %v2680
    %3537 = vmatprep.subr.bf16.mxu0 %v2685
    %3538 = vmatpush1.bf16.msra.mxu0 %v2684
    %3539 = vmatprep.subr.bf16.mxu0 %v2689
    %3540 = vmatpush1.bf16.msra.mxu0 %v2688
    %3541 = vmatprep.subr.bf16.mxu0 %v2693
    %3542 = vmatpush1.bf16.msra.mxu0 %v2692
    %3543 = vmatprep.subr.bf16.mxu0 %v2697
    %3544 = vmatpush1.bf16.msra.mxu0 %v2696
    %3545 = vmatprep.subr.bf16.mxu0 %v2701
    %3546 = vmatpush1.bf16.msra.mxu0 %v2700
    %3547 = vmatprep.subr.bf16.mxu0 %v2705
    %3548 = vmatpush1.bf16.msra.mxu0 %v2704
    %3549 = vmatprep.subr.bf16.mxu0 %v2709
    %3550 = vmatpush1.bf16.msra.mxu0 %v2708
    %3551 = vmatprep.subr.bf16.mxu0 %v2713
    %3552 = vmatpush1.bf16.msra.mxu0 %v2712
    %3553 = vmatprep.subr.bf16.mxu0 %v2717
    %3554 = vmatpush1.bf16.msra.mxu0 %v2716
    %3555 = vmatprep.subr.bf16.mxu0 %v2721
    %3556 = vmatpush1.bf16.msra.mxu0 %v2720
    %3557 = vmatprep.subr.bf16.mxu0 %v2725
    %3558 = vmatpush1.bf16.msra.mxu0 %v2724
    %3559 = vmatprep.mubr.bf16.mxu0 %v663
    %3560 = vmatmul.mubr.bf16.gmra.mrb[0].mxu0 %v661
    %v3561 = vpop.f32.mrb[0].mxu0
    %v3562 = vadd.f32 %v3521, %v3561
    %v3563 = vpop.f32.mrb[0].mxu0
    %v3564 = vadd.f32 %v3523, %v3563
    %v3565 = vpop.f32.mrb[0].mxu0
    %v3566 = vpop.f32.mrb[0].mxu0
    %3567 = vdwg.mxu0
    %3568 = vmatprep.subr.bf16.mxu0 %v2219
    %3569 = vmatpush1.bf16.msra.mxu0 %v2218
    %3570 = vmatprep.subr.bf16.mxu0 %v2223
    %3571 = vmatpush1.bf16.msra.mxu0 %v2222
    %3572 = vmatprep.subr.bf16.mxu0 %v2227
    %3573 = vmatpush1.bf16.msra.mxu0 %v2226
    %3574 = vmatprep.subr.bf16.mxu0 %v2231
    %3575 = vmatpush1.bf16.msra.mxu0 %v2230
    %3576 = vmatprep.subr.bf16.mxu0 %v2235
    %3577 = vmatpush1.bf16.msra.mxu0 %v2234
    %3578 = vmatprep.subr.bf16.mxu0 %v2239
    %3579 = vmatpush1.bf16.msra.mxu0 %v2238
    %3580 = vmatprep.subr.bf16.mxu0 %v2243
    %3581 = vmatpush1.bf16.msra.mxu0 %v2242
    %3582 = vmatprep.subr.bf16.mxu0 %v2247
    %3583 = vmatpush1.bf16.msra.mxu0 %v2246
    %3584 = vmatprep.subr.bf16.mxu0 %v2251
    %3585 = vmatpush1.bf16.msra.mxu0 %v2250
    %3586 = vmatprep.subr.bf16.mxu0 %v2255
    %3587 = vmatpush1.bf16.msra.mxu0 %v2254
    %3588 = vmatprep.subr.bf16.mxu0 %v2259
    %3589 = vmatpush1.bf16.msra.mxu0 %v2258
    %3590 = vmatprep.subr.bf16.mxu0 %v2263
    %3591 = vmatpush1.bf16.msra.mxu0 %v2262
    %3592 = vmatprep.subr.bf16.mxu0 %v2267
    %3593 = vmatpush1.bf16.msra.mxu0 %v2266
    %3594 = vmatprep.subr.bf16.mxu0 %v2271
    %3595 = vmatpush1.bf16.msra.mxu0 %v2270
    %3596 = vmatprep.subr.bf16.mxu0 %v2275
    %3597 = vmatpush1.bf16.msra.mxu0 %v2274
    %3598 = vmatprep.subr.bf16.mxu0 %v2279
    %3599 = vmatpush1.bf16.msra.mxu0 %v2278
    %3600 = vmatprep.mubr.bf16.mxu0 %v603
    %3601 = vmatmul.mubr.bf16.gmra.mrb[0].mxu0 %v589
    %v3602 = vpop.f32.mrb[0].mxu0
    %v3603 = vadd.f32 %v555, %v3602
    %v3604 = vpop.f32.mrb[0].mxu0
    %v3605 = vadd.f32 %v559, %v3604
    %v3606 = vpop.f32.mrb[0].mxu0
    %v3607 = vpop.f32.mrb[0].mxu0
    %3608 = vdwg.mxu0
    %3609 = vmatprep.subr.bf16.mxu0 %v2283
    %3610 = vmatpush1.bf16.msra.mxu0 %v2282
    %3611 = vmatprep.subr.bf16.mxu0 %v2287
    %3612 = vmatpush1.bf16.msra.mxu0 %v2286
    %3613 = vmatprep.subr.bf16.mxu0 %v2291
    %3614 = vmatpush1.bf16.msra.mxu0 %v2290
    %3615 = vmatprep.subr.bf16.mxu0 %v2295
    %3616 = vmatpush1.bf16.msra.mxu0 %v2294
    %3617 = vmatprep.subr.bf16.mxu0 %v2299
    %3618 = vmatpush1.bf16.msra.mxu0 %v2298
    %3619 = vmatprep.subr.bf16.mxu0 %v2303
    %3620 = vmatpush1.bf16.msra.mxu0 %v2302
    %3621 = vmatprep.subr.bf16.mxu0 %v2307
    %3622 = vmatpush1.bf16.msra.mxu0 %v2306
    %3623 = vmatprep.subr.bf16.mxu0 %v2311
    %3624 = vmatpush1.bf16.msra.mxu0 %v2310
    %3625 = vmatprep.subr.bf16.mxu0 %v2315
    %3626 = vmatpush1.bf16.msra.mxu0 %v2314
    %3627 = vmatprep.subr.bf16.mxu0 %v2319
    %3628 = vmatpush1.bf16.msra.mxu0 %v2318
    %3629 = vmatprep.subr.bf16.mxu0 %v2323
    %3630 = vmatpush1.bf16.msra.mxu0 %v2322
    %3631 = vmatprep.subr.bf16.mxu0 %v2327
    %3632 = vmatpush1.bf16.msra.mxu0 %v2326
    %3633 = vmatprep.subr.bf16.mxu0 %v2331
    %3634 = vmatpush1.bf16.msra.mxu0 %v2330
    %3635 = vmatprep.subr.bf16.mxu0 %v2335
    %3636 = vmatpush1.bf16.msra.mxu0 %v2334
    %3637 = vmatprep.subr.bf16.mxu0 %v2339
    %3638 = vmatpush1.bf16.msra.mxu0 %v2338
    %3639 = vmatprep.subr.bf16.mxu0 %v2343
    %3640 = vmatpush1.bf16.msra.mxu0 %v2342
    %3641 = vmatprep.mubr.bf16.mxu0 %v613
    %3642 = vmatmul.mubr.bf16.gmra.mrb[0].mxu0 %v611
    %v3643 = vpop.f32.mrb[0].mxu0
    %v3644 = vadd.f32 %v3603, %v3643
    %v3645 = vpop.f32.mrb[0].mxu0
    %v3646 = vadd.f32 %v3605, %v3645
    %v3647 = vpop.f32.mrb[0].mxu0
    %v3648 = vpop.f32.mrb[0].mxu0
    %3649 = vdwg.mxu0
    %3650 = vmatprep.subr.bf16.mxu0 %v2347
    %3651 = vmatpush1.bf16.msra.mxu0 %v2346
    %3652 = vmatprep.subr.bf16.mxu0 %v2351
    %3653 = vmatpush1.bf16.msra.mxu0 %v2350
    %3654 = vmatprep.subr.bf16.mxu0 %v2355
    %3655 = vmatpush1.bf16.msra.mxu0 %v2354
    %3656 = vmatprep.subr.bf16.mxu0 %v2359
    %3657 = vmatpush1.bf16.msra.mxu0 %v2358
    %3658 = vmatprep.subr.bf16.mxu0 %v2363
    %3659 = vmatpush1.bf16.msra.mxu0 %v2362
    %3660 = vmatprep.subr.bf16.mxu0 %v2367
    %3661 = vmatpush1.bf16.msra.mxu0 %v2366
    %3662 = vmatprep.subr.bf16.mxu0 %v2371
    %3663 = vmatpush1.bf16.msra.mxu0 %v2370
    %3664 = vmatprep.subr.bf16.mxu0 %v2375
    %3665 = vmatpush1.bf16.msra.mxu0 %v2374
    %3666 = vmatprep.subr.bf16.mxu0 %v2379
    %3667 = vmatpush1.bf16.msra.mxu0 %v2378
    %3668 = vmatprep.subr.bf16.mxu0 %v2383
    %3669 = vmatpush1.bf16.msra.mxu0 %v2382
    %3670 = vmatprep.subr.bf16.mxu0 %v2387
    %3671 = vmatpush1.bf16.msra.mxu0 %v2386
    %3672 = vmatprep.subr.bf16.mxu0 %v2391
    %3673 = vmatpush1.bf16.msra.mxu0 %v2390
    %3674 = vmatprep.subr.bf16.mxu0 %v2395
    %3675 = vmatpush1.bf16.msra.mxu0 %v2394
    %3676 = vmatprep.subr.bf16.mxu0 %v2399
    %3677 = vmatpush1.bf16.msra.mxu0 %v2398
    %3678 = vmatprep.subr.bf16.mxu0 %v2403
    %3679 = vmatpush1.bf16.msra.mxu0 %v2402
    %3680 = vmatprep.subr.bf16.mxu0 %v2407
    %3681 = vmatpush1.bf16.msra.mxu0 %v2406
    %3682 = vmatprep.mubr.bf16.mxu0 %v610
    %3683 = vmatmul.mubr.bf16.gmra.mrb[0].mxu0 %v596
    %v3684 = vpop.f32.mrb[0].mxu0
    %v3685 = vadd.f32 %v3644, %v3684
    %v3686 = vpop.f32.mrb[0].mxu0
    %v3687 = vadd.f32 %v3646, %v3686
    %v3688 = vpop.f32.mrb[0].mxu0
    %v3689 = vpop.f32.mrb[0].mxu0
    %3690 = vdwg.mxu0
    %3691 = vmatprep.subr.bf16.mxu0 %v2411
    %3692 = vmatpush1.bf16.msra.mxu0 %v2410
    %3693 = vmatprep.subr.bf16.mxu0 %v2415
    %3694 = vmatpush1.bf16.msra.mxu0 %v2414
    %3695 = vmatprep.subr.bf16.mxu0 %v2419
    %3696 = vmatpush1.bf16.msra.mxu0 %v2418
    %3697 = vmatprep.subr.bf16.mxu0 %v2423
    %3698 = vmatpush1.bf16.msra.mxu0 %v2422
    %3699 = vmatprep.subr.bf16.mxu0 %v2427
    %3700 = vmatpush1.bf16.msra.mxu0 %v2426
    %3701 = vmatprep.subr.bf16.mxu0 %v2431
    %3702 = vmatpush1.bf16.msra.mxu0 %v2430
    %3703 = vmatprep.subr.bf16.mxu0 %v2435
    %3704 = vmatpush1.bf16.msra.mxu0 %v2434
    %3705 = vmatprep.subr.bf16.mxu0 %v2439
    %3706 = vmatpush1.bf16.msra.mxu0 %v2438
    %3707 = vmatprep.subr.bf16.mxu0 %v2443
    %3708 = vmatpush1.bf16.msra.mxu0 %v2442
    %3709 = vmatprep.subr.bf16.mxu0 %v2447
    %3710 = vmatpush1.bf16.msra.mxu0 %v2446
    %3711 = vmatprep.subr.bf16.mxu0 %v2451
    %3712 = vmatpush1.bf16.msra.mxu0 %v2450
    %3713 = vmatprep.subr.bf16.mxu0 %v2455
    %3714 = vmatpush1.bf16.msra.mxu0 %v2454
    %3715 = vmatprep.subr.bf16.mxu0 %v2459
    %3716 = vmatpush1.bf16.msra.mxu0 %v2458
    %3717 = vmatprep.subr.bf16.mxu0 %v2463
    %3718 = vmatpush1.bf16.msra.mxu0 %v2462
    %3719 = vmatprep.subr.bf16.mxu0 %v2467
    %3720 = vmatpush1.bf16.msra.mxu0 %v2466
    %3721 = vmatprep.subr.bf16.mxu0 %v2471
    %3722 = vmatpush1.bf16.msra.mxu0 %v2470
    %3723 = vmatprep.mubr.bf16.mxu0 %v614
    %3724 = vmatmul.mubr.bf16.gmra.mrb[0].mxu0 %v612
    %v3725 = vpop.f32.mrb[0].mxu0
    %v3726 = vadd.f32 %v3685, %v3725
    %v3727 = vpop.f32.mrb[0].mxu0
    %v3728 = vadd.f32 %v3687, %v3727
    %v3729 = vpop.f32.mrb[0].mxu0
    %v3730 = vpop.f32.mrb[0].mxu0
    %3731 = vdwg.mxu0
    %3732 = vmatprep.subr.bf16.mxu0 %v2475
    %3733 = vmatpush1.bf16.msra.mxu0 %v2474
    %3734 = vmatprep.subr.bf16.mxu0 %v2479
    %3735 = vmatpush1.bf16.msra.mxu0 %v2478
    %3736 = vmatprep.subr.bf16.mxu0 %v2483
    %3737 = vmatpush1.bf16.msra.mxu0 %v2482
    %3738 = vmatprep.subr.bf16.mxu0 %v2487
    %3739 = vmatpush1.bf16.msra.mxu0 %v2486
    %3740 = vmatprep.subr.bf16.mxu0 %v2491
    %3741 = vmatpush1.bf16.msra.mxu0 %v2490
    %3742 = vmatprep.subr.bf16.mxu0 %v2495
    %3743 = vmatpush1.bf16.msra.mxu0 %v2494
    %3744 = vmatprep.subr.bf16.mxu0 %v2499
    %3745 = vmatpush1.bf16.msra.mxu0 %v2498
    %3746 = vmatprep.subr.bf16.mxu0 %v2503
    %3747 = vmatpush1.bf16.msra.mxu0 %v2502
    %3748 = vmatprep.subr.bf16.mxu0 %v2507
    %3749 = vmatpush1.bf16.msra.mxu0 %v2506
    %3750 = vmatprep.subr.bf16.mxu0 %v2511
    %3751 = vmatpush1.bf16.msra.mxu0 %v2510
    %3752 = vmatprep.subr.bf16.mxu0 %v2515
    %3753 = vmatpush1.bf16.msra.mxu0 %v2514
    %3754 = vmatprep.subr.bf16.mxu0 %v2519
    %3755 = vmatpush1.bf16.msra.mxu0 %v2518
    %3756 = vmatprep.subr.bf16.mxu0 %v2523
    %3757 = vmatpush1.bf16.msra.mxu0 %v2522
    %3758 = vmatprep.subr.bf16.mxu0 %v2527
    %3759 = vmatpush1.bf16.msra.mxu0 %v2526
    %3760 = vmatprep.subr.bf16.mxu0 %v2531
    %3761 = vmatpush1.bf16.msra.mxu0 %v2530
    %3762 = vmatprep.subr.bf16.mxu0 %v2535
    %3763 = vmatpush1.bf16.msra.mxu0 %v2534
    %3764 = vmatprep.mubr.bf16.mxu0 %v652
    %3765 = vmatmul.mubr.bf16.gmra.mrb[0].mxu0 %v638
    %v3766 = vpop.f32.mrb[0].mxu0
    %v3767 = vadd.f32 %v3726, %v3766
    %v3768 = vpop.f32.mrb[0].mxu0
    %v3769 = vadd.f32 %v3728, %v3768
    %v3770 = vpop.f32.mrb[0].mxu0
    %v3771 = vpop.f32.mrb[0].mxu0
    %3772 = vdwg.mxu0
    %3773 = vmatprep.subr.bf16.mxu0 %v2539
    %3774 = vmatpush1.bf16.msra.mxu0 %v2538
    %3775 = vmatprep.subr.bf16.mxu0 %v2543
    %3776 = vmatpush1.bf16.msra.mxu0 %v2542
    %3777 = vmatprep.subr.bf16.mxu0 %v2547
    %3778 = vmatpush1.bf16.msra.mxu0 %v2546
    %3779 = vmatprep.subr.bf16.mxu0 %v2551
    %3780 = vmatpush1.bf16.msra.mxu0 %v2550
    %3781 = vmatprep.subr.bf16.mxu0 %v2555
    %3782 = vmatpush1.bf16.msra.mxu0 %v2554
    %3783 = vmatprep.subr.bf16.mxu0 %v2559
    %3784 = vmatpush1.bf16.msra.mxu0 %v2558
    %3785 = vmatprep.subr.bf16.mxu0 %v2563
    %3786 = vmatpush1.bf16.msra.mxu0 %v2562
    %3787 = vmatprep.subr.bf16.mxu0 %v2567
    %3788 = vmatpush1.bf16.msra.mxu0 %v2566
    %3789 = vmatprep.subr.bf16.mxu0 %v2571
    %3790 = vmatpush1.bf16.msra.mxu0 %v2570
    %3791 = vmatprep.subr.bf16.mxu0 %v2575
    %3792 = vmatpush1.bf16.msra.mxu0 %v2574
    %3793 = vmatprep.subr.bf16.mxu0 %v2579
    %3794 = vmatpush1.bf16.msra.mxu0 %v2578
    %3795 = vmatprep.subr.bf16.mxu0 %v2583
    %3796 = vmatpush1.bf16.msra.mxu0 %v2582
    %3797 = vmatprep.subr.bf16.mxu0 %v2587
    %3798 = vmatpush1.bf16.msra.mxu0 %v2586
    %3799 = vmatprep.subr.bf16.mxu0 %v2591
    %3800 = vmatpush1.bf16.msra.mxu0 %v2590
    %3801 = vmatprep.subr.bf16.mxu0 %v2595
    %3802 = vmatpush1.bf16.msra.mxu0 %v2594
    %3803 = vmatprep.subr.bf16.mxu0 %v2599
    %3804 = vmatpush1.bf16.msra.mxu0 %v2598
    %3805 = vmatprep.mubr.bf16.mxu0 %v662
    %3806 = vmatmul.mubr.bf16.gmra.mrb[0].mxu0 %v660
    %v3807 = vpop.f32.mrb[0].mxu0
    %v3808 = vadd.f32 %v3767, %v3807
    %v3809 = vpop.f32.mrb[0].mxu0
    %v3810 = vadd.f32 %v3769, %v3809
    %v3811 = vpop.f32.mrb[0].mxu0
    %v3812 = vpop.f32.mrb[0].mxu0
    %3813 = vdwg.mxu0
    %3814 = vmatprep.subr.bf16.mxu0 %v2603
    %3815 = vmatpush1.bf16.msra.mxu0 %v2602
    %3816 = vmatprep.subr.bf16.mxu0 %v2607
    %3817 = vmatpush1.bf16.msra.mxu0 %v2606
    %3818 = vmatprep.subr.bf16.mxu0 %v2611
    %3819 = vmatpush1.bf16.msra.mxu0 %v2610
    %3820 = vmatprep.subr.bf16.mxu0 %v2615
    %3821 = vmatpush1.bf16.msra.mxu0 %v2614
    %3822 = vmatprep.subr.bf16.mxu0 %v2619
    %3823 = vmatpush1.bf16.msra.mxu0 %v2618
    %3824 = vmatprep.subr.bf16.mxu0 %v2623
    %3825 = vmatpush1.bf16.msra.mxu0 %v2622
    %3826 = vmatprep.subr.bf16.mxu0 %v2627
    %3827 = vmatpush1.bf16.msra.mxu0 %v2626
    %3828 = vmatprep.subr.bf16.mxu0 %v2631
    %3829 = vmatpush1.bf16.msra.mxu0 %v2630
    %3830 = vmatprep.subr.bf16.mxu0 %v2635
    %3831 = vmatpush1.bf16.msra.mxu0 %v2634
    %3832 = vmatprep.subr.bf16.mxu0 %v2639
    %3833 = vmatpush1.bf16.msra.mxu0 %v2638
    %3834 = vmatprep.subr.bf16.mxu0 %v2643
    %3835 = vmatpush1.bf16.msra.mxu0 %v2642
    %3836 = vmatprep.subr.bf16.mxu0 %v2647
    %3837 = vmatpush1.bf16.msra.mxu0 %v2646
    %3838 = vmatprep.subr.bf16.mxu0 %v2651
    %3839 = vmatpush1.bf16.msra.mxu0 %v2650
    %3840 = vmatprep.subr.bf16.mxu0 %v2655
    %3841 = vmatpush1.bf16.msra.mxu0 %v2654
    %3842 = vmatprep.subr.bf16.mxu0 %v2659
    %3843 = vmatpush1.bf16.msra.mxu0 %v2658
    %3844 = vmatprep.subr.bf16.mxu0 %v2663
    %3845 = vmatpush1.bf16.msra.mxu0 %v2662
    %3846 = vmatprep.mubr.bf16.mxu0 %v659
    %3847 = vmatmul.mubr.bf16.gmra.mrb[0].mxu0 %v645
    %v3848 = vpop.f32.mrb[0].mxu0
    %v3849 = vadd.f32 %v3808, %v3848
    %v3850 = vpop.f32.mrb[0].mxu0
    %v3851 = vadd.f32 %v3810, %v3850
    %v3852 = vpop.f32.mrb[0].mxu0
    %v3853 = vpop.f32.mrb[0].mxu0
    %3854 = vdwg.mxu0
    %3855 = vmatprep.subr.bf16.mxu0 %v2667
    %3856 = vmatpush1.bf16.msra.mxu0 %v2666
    %3857 = vmatprep.subr.bf16.mxu0 %v2671
    %3858 = vmatpush1.bf16.msra.mxu0 %v2670
    %3859 = vmatprep.subr.bf16.mxu0 %v2675
    %3860 = vmatpush1.bf16.msra.mxu0 %v2674
    %3861 = vmatprep.subr.bf16.mxu0 %v2679
    %3862 = vmatpush1.bf16.msra.mxu0 %v2678
    %3863 = vmatprep.subr.bf16.mxu0 %v2683
    %3864 = vmatpush1.bf16.msra.mxu0 %v2682
    %3865 = vmatprep.subr.bf16.mxu0 %v2687
    %3866 = vmatpush1.bf16.msra.mxu0 %v2686
    %3867 = vmatprep.subr.bf16.mxu0 %v2691
    %3868 = vmatpush1.bf16.msra.mxu0 %v2690
    %3869 = vmatprep.subr.bf16.mxu0 %v2695
    %3870 = vmatpush1.bf16.msra.mxu0 %v2694
    %3871 = vmatprep.subr.bf16.mxu0 %v2699
    %3872 = vmatpush1.bf16.msra.mxu0 %v2698
    %3873 = vmatprep.subr.bf16.mxu0 %v2703
    %3874 = vmatpush1.bf16.msra.mxu0 %v2702
    %3875 = vmatprep.subr.bf16.mxu0 %v2707
    %3876 = vmatpush1.bf16.msra.mxu0 %v2706
    %3877 = vmatprep.subr.bf16.mxu0 %v2711
    %3878 = vmatpush1.bf16.msra.mxu0 %v2710
    %3879 = vmatprep.subr.bf16.mxu0 %v2715
    %3880 = vmatpush1.bf16.msra.mxu0 %v2714
    %3881 = vmatprep.subr.bf16.mxu0 %v2719
    %3882 = vmatpush1.bf16.msra.mxu0 %v2718
    %3883 = vmatprep.subr.bf16.mxu0 %v2723
    %3884 = vmatpush1.bf16.msra.mxu0 %v2722
    %3885 = vmatprep.subr.bf16.mxu0 %v2727
    %3886 = vmatpush1.bf16.msra.mxu0 %v2726
    %3887 = vmatprep.mubr.bf16.mxu0 %v663
    %3888 = vmatmul.mubr.bf16.gmra.mrb[0].mxu0 %v661
    %v3889 = vpop.f32.mrb[0].mxu0
    %v3890 = vadd.f32 %v3849, %v3889
    %v3891 = vpop.f32.mrb[0].mxu0
    %v3892 = vadd.f32 %v3851, %v3891
    %v3893 = vpop.f32.mrb[0].mxu0
    %v3894 = vpop.f32.mrb[0].mxu0
    %3895 = vdwg.mxu0
    %v3896 = vmax.f32 %v3562, 0.0
    %v3897 = vmax.f32 %v3564, 0.0
    %v3898 = vmax.f32 %v3890, 0.0
    %v3899 = vmax.f32 %v3892, 0.0
    %v3900 = vpack.c.bf16 %v3896, %v3896
    %v3901 = vpack.c.bf16 %v3897, %v3897
    %v3902 = vpack.c.bf16 %v3898, %v3898
    %v3903 = vpack.c.bf16 %v3899, %v3899
    %v3904 = vld [vmem:[%s3] sm:$0xf]
    %v3905 = vld [vmem:[%s3 + $0x4] sm:$0xf]
    %v3906 = vld [vmem:[%s3 + $0x8] sm:$0xf]
    %v3907 = vld [vmem:[%s3 + $0xc] sm:$0xf]
    %v3908 = vld [vmem:[%s3 + $0x10] sm:$0xf]
    %v3909 = vld [vmem:[%s3 + $0x14] sm:$0xf]
    %v3910 = vld [vmem:[%s3 + $0x18] sm:$0xf]
    %v3911 = vld [vmem:[%s3 + $0x1c] sm:$0xf]
    %v3912 = vld [vmem:[%s3 + $0x20] sm:$0xf]
    %v3913 = vld [vmem:[%s3 + $0x24] sm:$0xf]
    %v3914 = vld [vmem:[%s3 + $0x28] sm:$0xf]
    %v3915 = vld [vmem:[%s3 + $0x2c] sm:$0xf]
    %v3916 = vld [vmem:[%s3 + $0x30] sm:$0xf]
    %v3917 = vld [vmem:[%s3 + $0x34] sm:$0xf]
    %v3918 = vld [vmem:[%s3 + $0x38] sm:$0xf]
    %v3919 = vld [vmem:[%s3 + $0x3c] sm:$0xf]
    %v3920 = vld [vmem:[%s3 + $0x40] sm:$0xf]
    %v3921 = vld [vmem:[%s3 + $0x44] sm:$0xf]
    %v3922 = vld [vmem:[%s3 + $0x48] sm:$0xf]
    %v3923 = vld [vmem:[%s3 + $0x4c] sm:$0xf]
    %v3924 = vld [vmem:[%s3 + $0x50] sm:$0xf]
    %v3925 = vld [vmem:[%s3 + $0x54] sm:$0xf]
    %v3926 = vld [vmem:[%s3 + $0x58] sm:$0xf]
    %v3927 = vld [vmem:[%s3 + $0x5c] sm:$0xf]
    %v3928 = vld [vmem:[%s3 + $0x60] sm:$0xf]
    %v3929 = vld [vmem:[%s3 + $0x64] sm:$0xf]
    %v3930 = vld [vmem:[%s3 + $0x68] sm:$0xf]
    %v3931 = vld [vmem:[%s3 + $0x6c] sm:$0xf]
    %v3932 = vld [vmem:[%s3 + $0x70] sm:$0xf]
    %v3933 = vld [vmem:[%s3 + $0x74] sm:$0xf]
    %v3934 = vld [vmem:[%s3 + $0x78] sm:$0xf]
    %v3935 = vld [vmem:[%s3 + $0x7c] sm:$0xf]
    %v3936 = vld [vmem:[%s3 + $0x80] sm:$0xf]
    %v3937 = vld [vmem:[%s3 + $0x84] sm:$0xf]
    %v3938 = vld [vmem:[%s3 + $0x88] sm:$0xf]
    %v3939 = vld [vmem:[%s3 + $0x8c] sm:$0xf]
    %v3940 = vld [vmem:[%s3 + $0x90] sm:$0xf]
    %v3941 = vld [vmem:[%s3 + $0x94] sm:$0xf]
    %v3942 = vld [vmem:[%s3 + $0x98] sm:$0xf]
    %v3943 = vld [vmem:[%s3 + $0x9c] sm:$0xf]
    %v3944 = vld [vmem:[%s3 + $0xa0] sm:$0xf]
    %v3945 = vld [vmem:[%s3 + $0xa4] sm:$0xf]
    %v3946 = vld [vmem:[%s3 + $0xa8] sm:$0xf]
    %v3947 = vld [vmem:[%s3 + $0xac] sm:$0xf]
    %v3948 = vld [vmem:[%s3 + $0xb0] sm:$0xf]
    %v3949 = vld [vmem:[%s3 + $0xb4] sm:$0xf]
    %v3950 = vld [vmem:[%s3 + $0xb8] sm:$0xf]
    %v3951 = vld [vmem:[%s3 + $0xbc] sm:$0xf]
    %v3952 = vld [vmem:[%s3 + $0xc0] sm:$0xf]
    %v3953 = vld [vmem:[%s3 + $0xc4] sm:$0xf]
    %v3954 = vld [vmem:[%s3 + $0xc8] sm:$0xf]
    %v3955 = vld [vmem:[%s3 + $0xcc] sm:$0xf]
    %v3956 = vld [vmem:[%s3 + $0xd0] sm:$0xf]
    %v3957 = vld [vmem:[%s3 + $0xd4] sm:$0xf]
    %v3958 = vld [vmem:[%s3 + $0xd8] sm:$0xf]
    %v3959 = vld [vmem:[%s3 + $0xdc] sm:$0xf]
    %v3960 = vld [vmem:[%s3 + $0xe0] sm:$0xf]
    %v3961 = vld [vmem:[%s3 + $0xe4] sm:$0xf]
    %v3962 = vld [vmem:[%s3 + $0xe8] sm:$0xf]
    %v3963 = vld [vmem:[%s3 + $0xec] sm:$0xf]
    %v3964 = vld [vmem:[%s3 + $0xf0] sm:$0xf]
    %v3965 = vld [vmem:[%s3 + $0xf4] sm:$0xf]
    %v3966 = vld [vmem:[%s3 + $0xf8] sm:$0xf]
    %v3967 = vld [vmem:[%s3 + $0xfc] sm:$0xf]
    %v3968 = vld [vmem:[%s4] sm:$0x1]
    %v3970 = vlaneseq
    %v3971 = vshrl.u32 %v3970, 7
    %v3972 = vsub.s32 0, %v3971
    %v3973 = vrot.slane %v3968, %v3972
    %v4039 = vunpack.c.l.b16 %v3904
    %v4040 = vunpack.c.l.b16 %v3905
    %v4041 = vunpack.c.l.b16 %v3906
    %v4042 = vunpack.c.l.b16 %v3907
    %v4043 = vunpack.c.l.b16 %v3908
    %v4044 = vunpack.c.l.b16 %v3909
    %v4045 = vunpack.c.l.b16 %v3910
    %v4046 = vunpack.c.l.b16 %v3911
    %v4047 = vunpack.c.l.b16 %v3912
    %v4048 = vunpack.c.l.b16 %v3913
    %v4049 = vunpack.c.l.b16 %v3914
    %v4050 = vunpack.c.l.b16 %v3915
    %v4051 = vunpack.c.l.b16 %v3916
    %v4052 = vunpack.c.l.b16 %v3917
    %v4053 = vunpack.c.l.b16 %v3918
    %v4054 = vunpack.c.l.b16 %v3919
    %v4055 = vunpack.c.l.b16 %v3920
    %v4056 = vunpack.c.l.b16 %v3921
    %v4057 = vunpack.c.l.b16 %v3922
    %v4058 = vunpack.c.l.b16 %v3923
    %v4059 = vunpack.c.l.b16 %v3924
    %v4060 = vunpack.c.l.b16 %v3925
    %v4061 = vunpack.c.l.b16 %v3926
    %v4062 = vunpack.c.l.b16 %v3927
    %v4063 = vunpack.c.l.b16 %v3928
    %v4064 = vunpack.c.l.b16 %v3929
    %v4065 = vunpack.c.l.b16 %v3930
    %v4066 = vunpack.c.l.b16 %v3931
    %v4067 = vunpack.c.l.b16 %v3932
    %v4068 = vunpack.c.l.b16 %v3933
    %v4069 = vunpack.c.l.b16 %v3934
    %v4070 = vunpack.c.l.b16 %v3935
    %v4071 = vunpack.c.l.b16 %v3936
    %v4072 = vunpack.c.l.b16 %v3937
    %v4073 = vunpack.c.l.b16 %v3938
    %v4074 = vunpack.c.l.b16 %v3939
    %v4075 = vunpack.c.l.b16 %v3940
    %v4076 = vunpack.c.l.b16 %v3941
    %v4077 = vunpack.c.l.b16 %v3942
    %v4078 = vunpack.c.l.b16 %v3943
    %v4079 = vunpack.c.l.b16 %v3944
    %v4080 = vunpack.c.l.b16 %v3945
    %v4081 = vunpack.c.l.b16 %v3946
    %v4082 = vunpack.c.l.b16 %v3947
    %v4083 = vunpack.c.l.b16 %v3948
    %v4084 = vunpack.c.l.b16 %v3949
    %v4085 = vunpack.c.l.b16 %v3950
    %v4086 = vunpack.c.l.b16 %v3951
    %v4087 = vunpack.c.l.b16 %v3952
    %v4088 = vunpack.c.l.b16 %v3953
    %v4089 = vunpack.c.l.b16 %v3954
    %v4090 = vunpack.c.l.b16 %v3955
    %v4091 = vunpack.c.l.b16 %v3956
    %v4092 = vunpack.c.l.b16 %v3957
    %v4093 = vunpack.c.l.b16 %v3958
    %v4094 = vunpack.c.l.b16 %v3959
    %v4095 = vunpack.c.l.b16 %v3960
    %v4096 = vunpack.c.l.b16 %v3961
    %v4097 = vunpack.c.l.b16 %v3962
    %v4098 = vunpack.c.l.b16 %v3963
    %v4099 = vunpack.c.l.b16 %v3964
    %v4100 = vunpack.c.l.b16 %v3965
    %v4101 = vunpack.c.l.b16 %v3966
    %v4102 = vunpack.c.l.b16 %v3967
    %v4103 = vpack.c.b16 %v4040, %v4039
    %v4104 = vpack.c.b16 %v4042, %v4041
    %v4105 = vpack.c.b16 %v4044, %v4043
    %v4106 = vpack.c.b16 %v4046, %v4045
    %v4107 = vpack.c.b16 %v4048, %v4047
    %v4108 = vpack.c.b16 %v4050, %v4049
    %v4109 = vpack.c.b16 %v4052, %v4051
    %v4110 = vpack.c.b16 %v4054, %v4053
    %v4111 = vpack.c.b16 %v4056, %v4055
    %v4112 = vpack.c.b16 %v4058, %v4057
    %v4113 = vpack.c.b16 %v4060, %v4059
    %v4114 = vpack.c.b16 %v4062, %v4061
    %v4115 = vpack.c.b16 %v4064, %v4063
    %v4116 = vpack.c.b16 %v4066, %v4065
    %v4117 = vpack.c.b16 %v4068, %v4067
    %v4118 = vpack.c.b16 %v4070, %v4069
    %v4119 = vpack.c.b16 %v4072, %v4071
    %v4120 = vpack.c.b16 %v4074, %v4073
    %v4121 = vpack.c.b16 %v4076, %v4075
    %v4122 = vpack.c.b16 %v4078, %v4077
    %v4123 = vpack.c.b16 %v4080, %v4079
    %v4124 = vpack.c.b16 %v4082, %v4081
    %v4125 = vpack.c.b16 %v4084, %v4083
    %v4126 = vpack.c.b16 %v4086, %v4085
    %v4127 = vpack.c.b16 %v4088, %v4087
    %v4128 = vpack.c.b16 %v4090, %v4089
    %v4129 = vpack.c.b16 %v4092, %v4091
    %v4130 = vpack.c.b16 %v4094, %v4093
    %v4131 = vpack.c.b16 %v4096, %v4095
    %v4132 = vpack.c.b16 %v4098, %v4097
    %v4133 = vpack.c.b16 %v4100, %v4099
    %v4134 = vpack.c.b16 %v4102, %v4101
    %4167 = vmatprep.subr.bf16.mxu0 0
    %4168 = vmatpush1.bf16.msra.mxu0 %v4103
    %4169 = vmatprep.subr.bf16.mxu0 0
    %4170 = vmatpush1.bf16.msra.mxu0 %v4104
    %4171 = vmatprep.subr.bf16.mxu0 0
    %4172 = vmatpush1.bf16.msra.mxu0 %v4105
    %4173 = vmatprep.subr.bf16.mxu0 0
    %4174 = vmatpush1.bf16.msra.mxu0 %v4106
    %4175 = vmatprep.subr.bf16.mxu0 0
    %4176 = vmatpush1.bf16.msra.mxu0 %v4107
    %4177 = vmatprep.subr.bf16.mxu0 0
    %4178 = vmatpush1.bf16.msra.mxu0 %v4108
    %4179 = vmatprep.subr.bf16.mxu0 0
    %4180 = vmatpush1.bf16.msra.mxu0 %v4109
    %4181 = vmatprep.subr.bf16.mxu0 0
    %4182 = vmatpush1.bf16.msra.mxu0 %v4110
    %4183 = vmatprep.subr.bf16.mxu0 0
    %4184 = vmatpush1.bf16.msra.mxu0 %v4111
    %4185 = vmatprep.subr.bf16.mxu0 0
    %4186 = vmatpush1.bf16.msra.mxu0 %v4112
    %4187 = vmatprep.subr.bf16.mxu0 0
    %4188 = vmatpush1.bf16.msra.mxu0 %v4113
    %4189 = vmatprep.subr.bf16.mxu0 0
    %4190 = vmatpush1.bf16.msra.mxu0 %v4114
    %4191 = vmatprep.subr.bf16.mxu0 0
    %4192 = vmatpush1.bf16.msra.mxu0 %v4115
    %4193 = vmatprep.subr.bf16.mxu0 0
    %4194 = vmatpush1.bf16.msra.mxu0 %v4116
    %4195 = vmatprep.subr.bf16.mxu0 0
    %4196 = vmatpush1.bf16.msra.mxu0 %v4117
    %4197 = vmatprep.subr.bf16.mxu0 0
    %4198 = vmatpush1.bf16.msra.mxu0 %v4118
    %4199 = vmatprep.mubr.bf16.mxu0 %v3901
    %4200 = vmatmul.mubr.bf16.gmra.mrb[0].mxu0 %v3900
    %v4201 = vpop.f32.mrb[0].mxu0
    %v4202 = vadd.f32 %v3973, %v4201
    %v4203 = vpop.f32.mrb[0].mxu0
    %v4204 = vpop.f32.mrb[0].mxu0
    %v4205 = vpop.f32.mrb[0].mxu0
    %4206 = vdwg.mxu0
    %4207 = vmatprep.subr.bf16.mxu0 0
    %4208 = vmatpush1.bf16.msra.mxu0 %v4119
    %4209 = vmatprep.subr.bf16.mxu0 0
    %4210 = vmatpush1.bf16.msra.mxu0 %v4120
    %4211 = vmatprep.subr.bf16.mxu0 0
    %4212 = vmatpush1.bf16.msra.mxu0 %v4121
    %4213 = vmatprep.subr.bf16.mxu0 0
    %4214 = vmatpush1.bf16.msra.mxu0 %v4122
    %4215 = vmatprep.subr.bf16.mxu0 0
    %4216 = vmatpush1.bf16.msra.mxu0 %v4123
    %4217 = vmatprep.subr.bf16.mxu0 0
    %4218 = vmatpush1.bf16.msra.mxu0 %v4124
    %4219 = vmatprep.subr.bf16.mxu0 0
    %4220 = vmatpush1.bf16.msra.mxu0 %v4125
    %4221 = vmatprep.subr.bf16.mxu0 0
    %4222 = vmatpush1.bf16.msra.mxu0 %v4126
    %4223 = vmatprep.subr.bf16.mxu0 0
    %4224 = vmatpush1.bf16.msra.mxu0 %v4127
    %4225 = vmatprep.subr.bf16.mxu0 0
    %4226 = vmatpush1.bf16.msra.mxu0 %v4128
    %4227 = vmatprep.subr.bf16.mxu0 0
    %4228 = vmatpush1.bf16.msra.mxu0 %v4129
    %4229 = vmatprep.subr.bf16.mxu0 0
    %4230 = vmatpush1.bf16.msra.mxu0 %v4130
    %4231 = vmatprep.subr.bf16.mxu0 0
    %4232 = vmatpush1.bf16.msra.mxu0 %v4131
    %4233 = vmatprep.subr.bf16.mxu0 0
    %4234 = vmatpush1.bf16.msra.mxu0 %v4132
    %4235 = vmatprep.subr.bf16.mxu0 0
    %4236 = vmatpush1.bf16.msra.mxu0 %v4133
    %4237 = vmatprep.subr.bf16.mxu0 0
    %4238 = vmatpush1.bf16.msra.mxu0 %v4134
    %4239 = vmatprep.mubr.bf16.mxu0 %v3903
    %4240 = vmatmul.mubr.bf16.gmra.mrb[0].mxu0 %v3902
    %v4241 = vpop.f32.mrb[0].mxu0
    %v4242 = vadd.f32 %v4202, %v4241
    %v4243 = vpop.f32.mrb[0].mxu0
    %v4244 = vpop.f32.mrb[0].mxu0
    %v4245 = vpop.f32.mrb[0].mxu0
    %4246 = vdwg.mxu0
    %v4247 = vmax.f32 %v4242, 0.0
    %v4248 = vpack.c.bf16 %v4247, %v4247
    %v4249 = vld [vmem:[%s5] sm:$0xf]
    %v4250 = vld [vmem:[%s5 + $0x4] sm:$0xf]
    %v4251 = vld [vmem:[%s5 + $0x8] sm:$0xf]
    %v4252 = vld [vmem:[%s5 + $0xc] sm:$0xf]
    %v4253 = vld [vmem:[%s6] sm:$0x1]
    %v4255 = vlaneseq
    %v4256 = vshrl.u32 %v4255, 7
    %v4257 = vsub.s32 0, %v4256
    %v4258 = vrot.slane %v4253, %v4257
    %v4264 = vunpack.c.l.b16 %v4249
    %v4265 = vunpack.c.l.b16 %v4250
    %v4266 = vunpack.c.l.b16 %v4251
    %v4267 = vunpack.c.l.b16 %v4252
    %v4268 = vpack.c.b16 %v4265, %v4264
    %v4269 = vpack.c.b16 %v4267, %v4266
    %vm4272 = vcmask 261120
    %v4274 = vsel %vm4272, %v4248, 0
    %4276 = vmatprep.subr.bf16.mxu0 0
    %4277 = vmatpush1.bf16.msra.mxu0 %v4268
    %4278 = vmatprep.subr.bf16.mxu0 0
    %4279 = vmatpush1.bf16.msra.mxu0 %v4269
    %4280 = vmatprep.subr.bf16.mxu0 0
    %4281 = vmatpush1.bf16.msra.mxu0 0
    %4282 = vmatprep.subr.bf16.mxu0 0
    %4283 = vmatpush1.bf16.msra.mxu0 0
    %4284 = vmatprep.subr.bf16.mxu0 0
    %4285 = vmatpush1.bf16.msra.mxu0 0
    %4286 = vmatprep.subr.bf16.mxu0 0
    %4287 = vmatpush1.bf16.msra.mxu0 0
    %4288 = vmatprep.subr.bf16.mxu0 0
    %4289 = vmatpush1.bf16.msra.mxu0 0
    %4290 = vmatprep.subr.bf16.mxu0 0
    %4291 = vmatpush1.bf16.msra.mxu0 0
    %4292 = vmatprep.subr.bf16.mxu0 0
    %4293 = vmatpush1.bf16.msra.mxu0 0
    %4294 = vmatprep.subr.bf16.mxu0 0
    %4295 = vmatpush1.bf16.msra.mxu0 0
    %4296 = vmatprep.subr.bf16.mxu0 0
    %4297 = vmatpush1.bf16.msra.mxu0 0
    %4298 = vmatprep.subr.bf16.mxu0 0
    %4299 = vmatpush1.bf16.msra.mxu0 0
    %4300 = vmatprep.subr.bf16.mxu0 0
    %4301 = vmatpush1.bf16.msra.mxu0 0
    %4302 = vmatprep.subr.bf16.mxu0 0
    %4303 = vmatpush1.bf16.msra.mxu0 0
    %4304 = vmatprep.subr.bf16.mxu0 0
    %4305 = vmatpush1.bf16.msra.mxu0 0
    %4306 = vmatprep.subr.bf16.mxu0 0
    %4307 = vmatpush1.bf16.msra.mxu0 0
    %4308 = vmatprep.mubr.bf16.mxu0 0
    %4309 = vmatmul.mubr.bf16.gmra.mrb[0].mxu0 %v4274
    %v4310 = vpop.f32.mrb[0].mxu0
    %v4311 = vadd.f32 %v4258, %v4310
    %v4312 = vpop.f32.mrb[0].mxu0
    %v4313 = vpop.f32.mrb[0].mxu0
    %v4314 = vpop.f32.mrb[0].mxu0
    %4315 = vdwg.mxu0
    %vm4316 = vcmask 9216
    %4317 = vst.msk [vmem:[#allocation2] sm:$0x3] %vm4316, %v4311
    // Predicated region
    $region30: #{nn_forward.7} parent=1 // pred_check
      _
    $region31: #{nn_forward.7} parent=1 // pred_check_branch
      %4319 = sbr.rel (0) target = $region33
    $region32: #{nn_forward.7} parent=1 // pred_region
      %s4321 = ssub.s32 32, 32
      %4322 = vsyncadd [#allocation3], %s4321
      %s4324 = sshll.u32 [#allocation2], 4
      %s4325 = int_to_ptr.vmem [resolvable:$true] %s4324
      %4327 = dma.vmem_to_hbm [thread:$0]  %s4325, 32, %s7, [#allocation3]
    $region33: #{nn_forward.7} parent=1 // pred_fallthru
      _
    // Predicated region
    $region34: #{nn_forward.7} parent=1 // pred_check
      _
    $region35: #{nn_forward.7} parent=1 // pred_check_branch
      %4329 = sbr.rel (0) target = $region37
    $region36: #{nn_forward.7} parent=1 // pred_region
      %4330 = dma.done [#allocation3], 32
    $region37: #{nn_forward.7} parent=1 // pred_fallthru
      _
    %4331 = vsyncpa [#allocation3], 1

</llo_original>
